<compile_context>
chip_gen: v7x
topology: tpu7x:2x2x1
jax: 0.10.0
libtpu: 0.0.40
codegen_flags: <defaults>
</compile_context>

<pallas_src>
import math
import numpy as np
import jax
import jax.numpy as jnp
from jax.experimental import pallas as pl
from jax.experimental.pallas import tpu as pltpu

_LEAKY = 0.01
_BN_SCALE = float(1.0 / np.sqrt(1.0 + 1e-5))   # eval-mode BatchNorm1d scaling
_K1, _K2 = 6, 5                                # Conv1d kernel sizes in convQ / convK


# ----------------------------------------------------------------------------
# BlockSpec helpers: batch-sliced blocks vs. full-array (VMEM resident) blocks.
# ----------------------------------------------------------------------------
def _spec_batch(shape):
    nd = len(shape)
    return pl.BlockSpec((1,) + tuple(shape[1:]),
                        lambda i, _nd=nd: (i,) + (0,) * (_nd - 1))


def _spec_full(shape):
    nd = len(shape)
    return pl.BlockSpec(tuple(shape), lambda i, _nd=nd: (0,) * _nd)


# ----------------------------------------------------------------------------
# The single fused kernel
# ----------------------------------------------------------------------------
def _make_fused_kernel(*, input_n, output_n, kernel_size, dct_n, feat, num_stage):
    Lk = input_n - output_n
    ks = kernel_size
    vl = kernel_size + output_n
    vn = input_n - kernel_size - output_n + 1

    def conv_mlp_branch(x2, L, w1f, w2f, mw1, mb1, mw2, mb2):
        """x2: [2*L, feat] -- the 'mask' and 'mask_original' variants stacked on rows.
        Conv1d(k=6)+ReLU -> Conv1d(k=5)+ReLU -> Mlp_Trans. Returns [2*Lout2, d_model]."""
        lo1 = L - _K1 + 1
        lo2 = lo1 - _K2 + 1
        # im2col from static sliding-window slices; both variants share each matmul.
        p1 = jnp.concatenate(
            [jnp.concatenate([x2[dt:dt + lo1, :], x2[L + dt:L + dt + lo1, :]], axis=0)
             for dt in range(_K1)], axis=1)                              # [2*lo1, K1*Cin]
        h1 = jnp.maximum(jnp.dot(p1, w1f, preferred_element_type=jnp.float32), 0.0)
        p2 = jnp.concatenate(
            [jnp.concatenate([h1[dt:dt + lo2, :], h1[lo1 + dt:lo1 + dt + lo2, :]], axis=0)
             for dt in range(_K2)], axis=1)                              # [2*lo2, K2*C1]
        h2 = jnp.maximum(jnp.dot(p2, w2f, preferred_element_type=jnp.float32), 0.0)
        # Mlp_Trans (dropout = identity)
        m1 = jnp.dot(h2, mw1, preferred_element_type=jnp.float32) + mb1
        m1 = jnp.where(m1 >= 0, m1, _LEAKY * m1)
        m2 = jnp.dot(m1, mw2, preferred_element_type=jnp.float32) + mb2
        m2 = jnp.where(m2 >= 0, m2, _LEAKY * m2) + h2                    # + x_skip
        return m2

    def gc_layer_t(z, wt, at, bcol, tanh_act):
        """Transposed GraphConvolution: (A (z^T W) + b)^T = W^T z A^T + b_col."""
        s = jnp.dot(wt, z, preferred_element_type=jnp.float32)
        y = jnp.dot(s, at, preferred_element_type=jnp.float32) + bcol
        if tanh_act:
            return jnp.tanh(y * _BN_SCALE)        # eval-mode BatchNorm1d, then tanh
        return y

    def kernel(src_ref, kmask_ref, qmask_ref, dctm_ref, idct_ref,
               kw1_ref, kw2_ref, kmw1_ref, kmb1_ref, kmw2_ref, kmb2_ref,
               qw1_ref, qw2_ref, qmw1_ref, qmb1_ref, qmw2_ref, qmb2_ref,
               g1w_ref, g1a_ref, g1b_ref, gbw_ref, gba_ref, gbb_ref,
               g7w_ref, g7a_ref, g7b_ref, out_ref):
        src = src_ref[0]                                                 # [input_n, feat]

        # --- masked key / query (both mask variants via one concatenated mask matmul) ---
        xk = jnp.dot(kmask_ref[...], src[:Lk, :],
                     preferred_element_type=jnp.float32) * 1e-3          # [2*Lk, feat]
        xq = jnp.dot(qmask_ref[...], src[input_n - ks:, :],
                     preferred_element_type=jnp.float32) * 1e-3          # [2*ks, feat]

        # --- convK / convQ branches (weights shared across both variants) ---
        kf = conv_mlp_branch(xk, Lk, kw1_ref[...], kw2_ref[...], kmw1_ref[...],
                             kmb1_ref[...], kmw2_ref[...], kmb2_ref[...])  # [2*vn, d]
        qf = conv_mlp_branch(xq, ks, qw1_ref[...], qw2_ref[...], qmw1_ref[...],
                             qmb1_ref[...], qmw2_ref[...], qmb2_ref[...])  # [2, d]

        # --- fused dual-dot attention: q.k + q_o.k_o + 2e-15, no transposes ---
        score = jnp.sum(kf[:vn, :] * qf[0:1, :] + kf[vn:, :] * qf[1:2, :],
                        axis=1, keepdims=True) + 2e-15                   # [vn, 1]
        att = score / jnp.sum(score, axis=0, keepdims=True)              # [vn, 1]

        # attention-weighted DCT values: sum_v att_v * DCT(window_v) = DCT(sum_v att_v*win)
        wsum = att[0:1, :] * src[0:vl, :]
        for v in range(1, vn):
            wsum = wsum + att[v:v + 1, :] * src[v:v + vl, :]             # [vl, feat]
        dct_att_t = jnp.dot(dctm_ref[...], wsum,
                            preferred_element_type=jnp.float32)          # [dct_n, feat]

        # --- GCN input (transposed layout: [features, nodes]) ---
        last = src[input_n - 1:input_n, :]
        gcn_time = jnp.concatenate(
            [src[input_n - ks:, :], jnp.broadcast_to(last, (output_n, feat))], axis=0)
        dct_in_t = jnp.dot(dctm_ref[...], gcn_time,
                           preferred_element_type=jnp.float32)           # [dct_n, feat]
        z0 = jnp.concatenate([dct_in_t, dct_att_t], axis=0)              # [2*dct_n, feat]

        # --- GCN stack: all weights VMEM resident, activations never leave registers ---
        y = gc_layer_t(z0, g1w_ref[...], g1a_ref[...], g1b_ref[...], True)
        for s_i in range(num_stage):
            h = gc_layer_t(y, gbw_ref[2 * s_i], gba_ref[2 * s_i], gbb_ref[2 * s_i], True)
            h = gc_layer_t(h, gbw_ref[2 * s_i + 1], gba_ref[2 * s_i + 1],
                           gbb_ref[2 * s_i + 1], True)
            y = h + y
        y = gc_layer_t(y, g7w_ref[...], g7a_ref[...], g7b_ref[...], False)
        dct_out_t = y + z0                                               # [2*dct_n, feat]

        # --- iDCT epilogue fused into the same kernel ---
        out_ref[0] = jnp.dot(idct_ref[...], dct_out_t[:dct_n, :],
                             preferred_element_type=jnp.float32)         # [vl, feat]

    return kernel


# ----------------------------------------------------------------------------
# Host-side constant builders (same math as the PyTorch module / util)
# ----------------------------------------------------------------------------
def generate_square_subsequent_mask(sz):
    mask_original = np.eye(sz, dtype=np.float32)
    mask = np.triu(np.ones((sz, sz), dtype=np.float32), k=1)
    for i in range(sz):
        num = (1 + i) * i / 2
        for j in range(i):
            if i > 1:
                mask[j, i] = (j + 1) * mask[j, i] / num
    return mask, mask_original


def get_dct_matrix(N):
    dct_m = np.eye(N)
    for k in range(N):
        for i in range(N):
            w = np.sqrt(2.0 / N)
            if k == 0:
                w = np.sqrt(1.0 / N)
            dct_m[k, i] = w * np.cos(np.pi * (i + 0.5) * k / N)
    idct_m = np.linalg.inv(dct_m)
    return dct_m.astype(np.float32), idct_m.astype(np.float32)


# ----------------------------------------------------------------------------
# Forward wrapper: one pallas_call for the whole model
# ----------------------------------------------------------------------------
def att_model_forward(src, params, *, kernel_size=10, dct_n=4, output_n=8, input_n=20):
    """src: [bs, seq_len, feat]. Returns [bs, kernel_size+output_n, 1, feat] (itera=1)."""
    bs = src.shape[0]
    src_tmp = src[:, :input_n].astype(jnp.float32)
    feat = src_tmp.shape[2]
    num_stage = len(params['gcn']['blocks'])
    assert num_stage >= 1
    Lk = input_n - output_n
    vl = kernel_size + output_n

    # Constant masks / DCT bases (host numpy; concatenated so both variants share a matmul)
    kmask, kmask_o = generate_square_subsequent_mask(Lk)
    qmask, qmask_o = generate_square_subsequent_mask(kernel_size)
    kmask_cat = jnp.asarray(np.concatenate([kmask.T, kmask_o.T], axis=0))   # [2*Lk, Lk]
    qmask_cat = jnp.asarray(np.concatenate([qmask.T, qmask_o.T], axis=0))   # [2*ks, ks]
    dct_m, idct_m = get_dct_matrix(vl)
    dct_m4 = jnp.asarray(dct_m[:dct_n])                                     # [dct_n, vl]
    idct_sub = jnp.asarray(idct_m[:, :dct_n])                               # [vl, dct_n]

    def conv_pack(p):
        cout1, cin, k1 = p['conv1_w'].shape
        cout2, c1, k2 = p['conv2_w'].shape
        w1f = jnp.transpose(p['conv1_w'], (2, 1, 0)).reshape(k1 * cin, cout1)
        w2f = jnp.transpose(p['conv2_w'], (2, 1, 0)).reshape(k2 * c1, cout2)
        m = p['mlp']
        return [w1f, w2f, m['w1_t'], m['b1'].reshape(1, -1),
                m['w2_t'], m['b2'].reshape(1, -1)]

    def gc_pack_t(g):   # transposed form used by the in-kernel GCN
        return g['w'].T, g['att'].T, g['b'].reshape(-1, 1)

    g = params['gcn']
    g1w, g1a, g1b = gc_pack_t(g['gc1'])
    g7w, g7a, g7b = gc_pack_t(g['gc7'])
    bw, ba, bb = [], [], []
    for blk in g['blocks']:
        for gl in (blk['gc1'], blk['gc2']):
            w, a, b = gc_pack_t(gl)
            bw.append(w); ba.append(a); bb.append(b)
    gbw, gba, gbb = jnp.stack(bw), jnp.stack(ba), jnp.stack(bb)

    inputs = ([src_tmp, kmask_cat, qmask_cat, dct_m4, idct_sub]
              + conv_pack(params['convK']) + conv_pack(params['convQ'])
              + [g1w, g1a, g1b, gbw, gba, gbb, g7w, g7a, g7b])
    in_specs = [_spec_batch(src_tmp.shape)] + [_spec_full(x.shape) for x in inputs[1:]]

    kern = _make_fused_kernel(input_n=input_n, output_n=output_n,
                              kernel_size=kernel_size, dct_n=dct_n,
                              feat=feat, num_stage=num_stage)

    out = pl.pallas_call(
        kern,
        out_shape=jax.ShapeDtypeStruct((bs, vl, feat), jnp.float32),
        grid=(bs,),
        in_specs=in_specs,
        out_specs=_spec_batch((bs, vl, feat)),
        compiler_params=pltpu.CompilerParams(dimension_semantics=("parallel",)),
    )(*inputs)
    return out[:, :, None, :]                                            # [bs, vl, 1, feat]


# ----------------------------------------------------------------------------
# Deterministic parameter initialization (synthetic, not a checkpoint)
# ----------------------------------------------------------------------------
def init_params(key, feat, d_model, dct_n, num_stage):
    keys = iter(jax.random.split(key, 64))

    def nrm(shape, scale):
        return (scale * jax.random.normal(next(keys), shape)).astype(jnp.float32)

    def xavier_t(fan_in, fan_out):
        std = math.sqrt(2.0 / (fan_in + fan_out))
        return nrm((fan_in, fan_out), std)                 # stored already transposed

    def conv_mlp_branch():
        return {
            'conv1_w': nrm((d_model // 16, feat, _K1), 0.2),
            'conv2_w': nrm((d_model, d_model // 16, _K2), 0.2),
            'mlp': {
                'w1_t': xavier_t(d_model, d_model),
                'b1': jnp.full((d_model,), 0.1, jnp.float32),
                'w2_t': xavier_t(d_model, d_model),
                'b2': jnp.full((d_model,), 0.1, jnp.float32),
            },
        }

    node_n, hid, fin = feat, d_model, dct_n * 2

    def gc(fi, fo):
        stdv = 1.0 / math.sqrt(fo)
        return {'w': nrm((fi, fo), stdv),
                'att': nrm((node_n, node_n), stdv),
                'b': nrm((fo,), stdv)}

    gcn = {
        'gc1': gc(fin, hid),
        'blocks': [{'gc1': gc(hid, hid), 'gc2': gc(hid, hid)} for _ in range(num_stage)],
        'gc7': gc(hid, fin),
    }
    return {'convK': conv_mlp_branch(), 'convQ': conv_mlp_branch(), 'gcn': gcn}


# ----------------------------------------------------------------------------
if __name__ == "__main__":
    FEAT, D_MODEL, DCT_N, NUM_STAGE = 16, 32, 4, 2
    KERNEL_SIZE, INPUT_N, OUTPUT_N, BS = 10, 20, 8, 2   # kernel_size must be 10

    key = jax.random.PRNGKey(0)
    pkey, xkey = jax.random.split(key)
    params = init_params(pkey, FEAT, D_MODEL, DCT_N, NUM_STAGE)
    src = jax.random.normal(xkey, (BS, INPUT_N, FEAT), dtype=jnp.float32)

    out = att_model_forward(src, params, kernel_size=KERNEL_SIZE, dct_n=DCT_N,
                            output_n=OUTPUT_N, input_n=INPUT_N)
    out = jax.block_until_ready(out)

    assert out.shape == (BS, KERNEL_SIZE + OUTPUT_N, 1, FEAT), out.shape
    assert bool(jnp.all(jnp.isfinite(out)))
    print("KERNEL_OK")
</pallas_src>

<mosaic_0001>
module attributes {stable_mosaic.version = 11 : i64} {
  func.func @kernel(%arg0: i32, %arg1: memref<1x20x16xf32, #tpu.memory_space<vmem>>, %arg2: memref<24x12xf32, #tpu.memory_space<vmem>>, %arg3: memref<20x10xf32, #tpu.memory_space<vmem>>, %arg4: memref<4x18xf32, #tpu.memory_space<vmem>>, %arg5: memref<18x4xf32, #tpu.memory_space<vmem>>, %arg6: memref<96x2xf32, #tpu.memory_space<vmem>>, %arg7: memref<10x32xf32, #tpu.memory_space<vmem>>, %arg8: memref<32x32xf32, #tpu.memory_space<vmem>>, %arg9: memref<1x32xf32, #tpu.memory_space<vmem>>, %arg10: memref<32x32xf32, #tpu.memory_space<vmem>>, %arg11: memref<1x32xf32, #tpu.memory_space<vmem>>, %arg12: memref<96x2xf32, #tpu.memory_space<vmem>>, %arg13: memref<10x32xf32, #tpu.memory_space<vmem>>, %arg14: memref<32x32xf32, #tpu.memory_space<vmem>>, %arg15: memref<1x32xf32, #tpu.memory_space<vmem>>, %arg16: memref<32x32xf32, #tpu.memory_space<vmem>>, %arg17: memref<1x32xf32, #tpu.memory_space<vmem>>, %arg18: memref<32x8xf32, #tpu.memory_space<vmem>>, %arg19: memref<16x16xf32, #tpu.memory_space<vmem>>, %arg20: memref<32x1xf32, #tpu.memory_space<vmem>>, %arg21: memref<4x32x32xf32, #tpu.memory_space<vmem>>, %arg22: memref<4x16x16xf32, #tpu.memory_space<vmem>>, %arg23: memref<4x32x1xf32, #tpu.memory_space<vmem>>, %arg24: memref<8x32xf32, #tpu.memory_space<vmem>>, %arg25: memref<16x16xf32, #tpu.memory_space<vmem>>, %arg26: memref<8x1xf32, #tpu.memory_space<vmem>>, %arg27: memref<1x18x16xf32, #tpu.memory_space<vmem>>) attributes {dimension_semantics = [#tpu.dimension_semantics<parallel>], iteration_bounds = array<i64: 2>, scalar_prefetch = 0 : i64, scratch_operands = 0 : i64, tpu.core_type = #tpu.core_type<tc>, window_params = [{transform_indices = @transform_0, window_bounds = array<i64: 1, 20, 16>}, {pipeline_mode = #tpu.pipeline_mode<synchronous>, transform_indices = @transform_1, window_bounds = array<i64: 24, 12>}, {pipeline_mode = #tpu.pipeline_mode<synchronous>, transform_indices = @transform_2, window_bounds = array<i64: 20, 10>}, {pipeline_mode = #tpu.pipeline_mode<synchronous>, transform_indices = @transform_3, window_bounds = array<i64: 4, 18>}, {pipeline_mode = #tpu.pipeline_mode<synchronous>, transform_indices = @transform_4, window_bounds = array<i64: 18, 4>}, {pipeline_mode = #tpu.pipeline_mode<synchronous>, transform_indices = @transform_5, window_bounds = array<i64: 96, 2>}, {pipeline_mode = #tpu.pipeline_mode<synchronous>, transform_indices = @transform_6, window_bounds = array<i64: 10, 32>}, {pipeline_mode = #tpu.pipeline_mode<synchronous>, transform_indices = @transform_7, window_bounds = array<i64: 32, 32>}, {pipeline_mode = #tpu.pipeline_mode<synchronous>, transform_indices = @transform_8, window_bounds = array<i64: 1, 32>}, {pipeline_mode = #tpu.pipeline_mode<synchronous>, transform_indices = @transform_9, window_bounds = array<i64: 32, 32>}, {pipeline_mode = #tpu.pipeline_mode<synchronous>, transform_indices = @transform_10, window_bounds = array<i64: 1, 32>}, {pipeline_mode = #tpu.pipeline_mode<synchronous>, transform_indices = @transform_11, window_bounds = array<i64: 96, 2>}, {pipeline_mode = #tpu.pipeline_mode<synchronous>, transform_indices = @transform_12, window_bounds = array<i64: 10, 32>}, {pipeline_mode = #tpu.pipeline_mode<synchronous>, transform_indices = @transform_13, window_bounds = array<i64: 32, 32>}, {pipeline_mode = #tpu.pipeline_mode<synchronous>, transform_indices = @transform_14, window_bounds = array<i64: 1, 32>}, {pipeline_mode = #tpu.pipeline_mode<synchronous>, transform_indices = @transform_15, window_bounds = array<i64: 32, 32>}, {pipeline_mode = #tpu.pipeline_mode<synchronous>, transform_indices = @transform_16, window_bounds = array<i64: 1, 32>}, {pipeline_mode = #tpu.pipeline_mode<synchronous>, transform_indices = @transform_17, window_bounds = array<i64: 32, 8>}, {pipeline_mode = #tpu.pipeline_mode<synchronous>, transform_indices = @transform_18, window_bounds = array<i64: 16, 16>}, {pipeline_mode = #tpu.pipeline_mode<synchronous>, transform_indices = @transform_19, window_bounds = array<i64: 32, 1>}, {pipeline_mode = #tpu.pipeline_mode<synchronous>, transform_indices = @transform_20, window_bounds = array<i64: 4, 32, 32>}, {pipeline_mode = #tpu.pipeline_mode<synchronous>, transform_indices = @transform_21, window_bounds = array<i64: 4, 16, 16>}, {pipeline_mode = #tpu.pipeline_mode<synchronous>, transform_indices = @transform_22, window_bounds = array<i64: 4, 32, 1>}, {pipeline_mode = #tpu.pipeline_mode<synchronous>, transform_indices = @transform_23, window_bounds = array<i64: 8, 32>}, {pipeline_mode = #tpu.pipeline_mode<synchronous>, transform_indices = @transform_24, window_bounds = array<i64: 16, 16>}, {pipeline_mode = #tpu.pipeline_mode<synchronous>, transform_indices = @transform_25, window_bounds = array<i64: 8, 1>}, {transform_indices = @transform_26, window_bounds = array<i64: 1, 18, 16>}]} {
    %c0 = arith.constant 0 : index
    %c0_0 = arith.constant 0 : index
    %c0_1 = arith.constant 0 : index
    %0 = vector.load %arg1[%c0, %c0_0, %c0_1] : memref<1x20x16xf32, #tpu.memory_space<vmem>>, vector<1x20x16xf32>
    %1 = vector.shape_cast %0 : vector<1x20x16xf32> to vector<20x16xf32>
    %c0_2 = arith.constant 0 : index
    %c0_3 = arith.constant 0 : index
    %2 = vector.load %arg2[%c0_2, %c0_3] : memref<24x12xf32, #tpu.memory_space<vmem>>, vector<24x12xf32>
    %3 = vector.extract_strided_slice %1 {offsets = [0, 0], sizes = [12, 16], strides = [1, 1]} : vector<20x16xf32> to vector<12x16xf32>
    %cst = arith.constant dense<0.000000e+00> : vector<24x16xf32>
    %4 = tpu.matmul %2, %3, %cst {dimension_numbers = #tpu.dot_dimension_numbers<[1], [0], [0], [1], [0, 0, 1, 1], [], []>} : vector<24x12xf32>, vector<12x16xf32>, vector<24x16xf32> -> vector<24x16xf32>
    %cst_4 = arith.constant 1.000000e-03 : f32
    %5 = vector.broadcast %cst_4 : f32 to vector<24x16xf32>
    %6 = arith.mulf %4, %5 : vector<24x16xf32>
    %c0_5 = arith.constant 0 : index
    %c0_6 = arith.constant 0 : index
    %7 = vector.load %arg3[%c0_5, %c0_6] : memref<20x10xf32, #tpu.memory_space<vmem>>, vector<20x10xf32>
    %8 = vector.extract_strided_slice %1 {offsets = [10, 0], sizes = [10, 16], strides = [1, 1]} : vector<20x16xf32> to vector<10x16xf32>
    %cst_7 = arith.constant dense<0.000000e+00> : vector<20x16xf32>
    %9 = tpu.matmul %7, %8, %cst_7 {dimension_numbers = #tpu.dot_dimension_numbers<[1], [0], [0], [1], [0, 0, 1, 1], [], []>} : vector<20x10xf32>, vector<10x16xf32>, vector<20x16xf32> -> vector<20x16xf32>
    %cst_8 = arith.constant 1.000000e-03 : f32
    %10 = vector.broadcast %cst_8 : f32 to vector<20x16xf32>
    %11 = arith.mulf %9, %10 : vector<20x16xf32>
    %c0_9 = arith.constant 0 : index
    %c0_10 = arith.constant 0 : index
    %12 = vector.load %arg6[%c0_9, %c0_10] : memref<96x2xf32, #tpu.memory_space<vmem>>, vector<96x2xf32>
    %c0_11 = arith.constant 0 : index
    %c0_12 = arith.constant 0 : index
    %13 = vector.load %arg7[%c0_11, %c0_12] : memref<10x32xf32, #tpu.memory_space<vmem>>, vector<10x32xf32>
    %c0_13 = arith.constant 0 : index
    %c0_14 = arith.constant 0 : index
    %14 = vector.load %arg8[%c0_13, %c0_14] : memref<32x32xf32, #tpu.memory_space<vmem>>, vector<32x32xf32>
    %c0_15 = arith.constant 0 : index
    %c0_16 = arith.constant 0 : index
    %15 = vector.load %arg9[%c0_15, %c0_16] : memref<1x32xf32, #tpu.memory_space<vmem>>, vector<1x32xf32>
    %c0_17 = arith.constant 0 : index
    %c0_18 = arith.constant 0 : index
    %16 = vector.load %arg10[%c0_17, %c0_18] : memref<32x32xf32, #tpu.memory_space<vmem>>, vector<32x32xf32>
    %c0_19 = arith.constant 0 : index
    %c0_20 = arith.constant 0 : index
    %17 = vector.load %arg11[%c0_19, %c0_20] : memref<1x32xf32, #tpu.memory_space<vmem>>, vector<1x32xf32>
    %18 = vector.extract_strided_slice %6 {offsets = [0, 0], sizes = [7, 16], strides = [1, 1]} : vector<24x16xf32> to vector<7x16xf32>
    %19 = vector.extract_strided_slice %6 {offsets = [12, 0], sizes = [7, 16], strides = [1, 1]} : vector<24x16xf32> to vector<7x16xf32>
    %20 = tpu.concatenate %18, %19 in 0 : vector<7x16xf32>, vector<7x16xf32> -> vector<14x16xf32>
    %21 = vector.extract_strided_slice %6 {offsets = [1, 0], sizes = [7, 16], strides = [1, 1]} : vector<24x16xf32> to vector<7x16xf32>
    %22 = vector.extract_strided_slice %6 {offsets = [13, 0], sizes = [7, 16], strides = [1, 1]} : vector<24x16xf32> to vector<7x16xf32>
    %23 = tpu.concatenate %21, %22 in 0 : vector<7x16xf32>, vector<7x16xf32> -> vector<14x16xf32>
    %24 = vector.extract_strided_slice %6 {offsets = [2, 0], sizes = [7, 16], strides = [1, 1]} : vector<24x16xf32> to vector<7x16xf32>
    %25 = vector.extract_strided_slice %6 {offsets = [14, 0], sizes = [7, 16], strides = [1, 1]} : vector<24x16xf32> to vector<7x16xf32>
    %26 = tpu.concatenate %24, %25 in 0 : vector<7x16xf32>, vector<7x16xf32> -> vector<14x16xf32>
    %27 = vector.extract_strided_slice %6 {offsets = [3, 0], sizes = [7, 16], strides = [1, 1]} : vector<24x16xf32> to vector<7x16xf32>
    %28 = vector.extract_strided_slice %6 {offsets = [15, 0], sizes = [7, 16], strides = [1, 1]} : vector<24x16xf32> to vector<7x16xf32>
    %29 = tpu.concatenate %27, %28 in 0 : vector<7x16xf32>, vector<7x16xf32> -> vector<14x16xf32>
    %30 = vector.extract_strided_slice %6 {offsets = [4, 0], sizes = [7, 16], strides = [1, 1]} : vector<24x16xf32> to vector<7x16xf32>
    %31 = vector.extract_strided_slice %6 {offsets = [16, 0], sizes = [7, 16], strides = [1, 1]} : vector<24x16xf32> to vector<7x16xf32>
    %32 = tpu.concatenate %30, %31 in 0 : vector<7x16xf32>, vector<7x16xf32> -> vector<14x16xf32>
    %33 = vector.extract_strided_slice %6 {offsets = [5, 0], sizes = [7, 16], strides = [1, 1]} : vector<24x16xf32> to vector<7x16xf32>
    %34 = vector.extract_strided_slice %6 {offsets = [17, 0], sizes = [7, 16], strides = [1, 1]} : vector<24x16xf32> to vector<7x16xf32>
    %35 = tpu.concatenate %33, %34 in 0 : vector<7x16xf32>, vector<7x16xf32> -> vector<14x16xf32>
    %36 = tpu.concatenate %20, %23, %26, %29, %32, %35 in 1 : vector<14x16xf32>, vector<14x16xf32>, vector<14x16xf32>, vector<14x16xf32>, vector<14x16xf32>, vector<14x16xf32> -> vector<14x96xf32>
    %cst_21 = arith.constant dense<0.000000e+00> : vector<14x2xf32>
    %37 = tpu.matmul %36, %12, %cst_21 {dimension_numbers = #tpu.dot_dimension_numbers<[1], [0], [0], [1], [0, 0, 1, 1], [], []>} : vector<14x96xf32>, vector<96x2xf32>, vector<14x2xf32> -> vector<14x2xf32>
    %cst_22 = arith.constant 0.000000e+00 : f32
    %38 = vector.broadcast %cst_22 : f32 to vector<14x2xf32>
    %39 = arith.maximumf %37, %38 : vector<14x2xf32>
    %40 = vector.extract_strided_slice %39 {offsets = [0, 0], sizes = [3, 2], strides = [1, 1]} : vector<14x2xf32> to vector<3x2xf32>
    %41 = vector.extract_strided_slice %39 {offsets = [7, 0], sizes = [3, 2], strides = [1, 1]} : vector<14x2xf32> to vector<3x2xf32>
    %42 = tpu.concatenate %40, %41 in 0 : vector<3x2xf32>, vector<3x2xf32> -> vector<6x2xf32>
    %43 = vector.extract_strided_slice %39 {offsets = [1, 0], sizes = [3, 2], strides = [1, 1]} : vector<14x2xf32> to vector<3x2xf32>
    %44 = vector.extract_strided_slice %39 {offsets = [8, 0], sizes = [3, 2], strides = [1, 1]} : vector<14x2xf32> to vector<3x2xf32>
    %45 = tpu.concatenate %43, %44 in 0 : vector<3x2xf32>, vector<3x2xf32> -> vector<6x2xf32>
    %46 = vector.extract_strided_slice %39 {offsets = [2, 0], sizes = [3, 2], strides = [1, 1]} : vector<14x2xf32> to vector<3x2xf32>
    %47 = vector.extract_strided_slice %39 {offsets = [9, 0], sizes = [3, 2], strides = [1, 1]} : vector<14x2xf32> to vector<3x2xf32>
    %48 = tpu.concatenate %46, %47 in 0 : vector<3x2xf32>, vector<3x2xf32> -> vector<6x2xf32>
    %49 = vector.extract_strided_slice %39 {offsets = [3, 0], sizes = [3, 2], strides = [1, 1]} : vector<14x2xf32> to vector<3x2xf32>
    %50 = vector.extract_strided_slice %39 {offsets = [10, 0], sizes = [3, 2], strides = [1, 1]} : vector<14x2xf32> to vector<3x2xf32>
    %51 = tpu.concatenate %49, %50 in 0 : vector<3x2xf32>, vector<3x2xf32> -> vector<6x2xf32>
    %52 = vector.extract_strided_slice %39 {offsets = [4, 0], sizes = [3, 2], strides = [1, 1]} : vector<14x2xf32> to vector<3x2xf32>
    %53 = vector.extract_strided_slice %39 {offsets = [11, 0], sizes = [3, 2], strides = [1, 1]} : vector<14x2xf32> to vector<3x2xf32>
    %54 = tpu.concatenate %52, %53 in 0 : vector<3x2xf32>, vector<3x2xf32> -> vector<6x2xf32>
    %55 = tpu.concatenate %42, %45, %48, %51, %54 in 1 : vector<6x2xf32>, vector<6x2xf32>, vector<6x2xf32>, vector<6x2xf32>, vector<6x2xf32> -> vector<6x10xf32>
    %cst_23 = arith.constant dense<0.000000e+00> : vector<6x32xf32>
    %56 = tpu.matmul %55, %13, %cst_23 {dimension_numbers = #tpu.dot_dimension_numbers<[1], [0], [0], [1], [0, 0, 1, 1], [], []>} : vector<6x10xf32>, vector<10x32xf32>, vector<6x32xf32> -> vector<6x32xf32>
    %cst_24 = arith.constant 0.000000e+00 : f32
    %57 = vector.broadcast %cst_24 : f32 to vector<6x32xf32>
    %58 = arith.maximumf %56, %57 : vector<6x32xf32>
    %cst_25 = arith.constant dense<0.000000e+00> : vector<6x32xf32>
    %59 = tpu.matmul %58, %14, %cst_25 {dimension_numbers = #tpu.dot_dimension_numbers<[1], [0], [0], [1], [0, 0, 1, 1], [], []>} : vector<6x32xf32>, vector<32x32xf32>, vector<6x32xf32> -> vector<6x32xf32>
    %60 = vector.broadcast %15 : vector<1x32xf32> to vector<6x32xf32>
    %61 = arith.addf %59, %60 : vector<6x32xf32>
    %cst_26 = arith.constant 0.000000e+00 : f32
    %62 = vector.broadcast %cst_26 : f32 to vector<6x32xf32>
    %63 = arith.cmpf oge, %61, %62 : vector<6x32xf32>
    %cst_27 = arith.constant 0.00999999977 : f32
    %64 = vector.broadcast %cst_27 : f32 to vector<6x32xf32>
    %65 = arith.mulf %64, %61 : vector<6x32xf32>
    %66 = arith.select %63, %61, %65 : vector<6x32xi1>, vector<6x32xf32>
    %cst_28 = arith.constant dense<0.000000e+00> : vector<6x32xf32>
    %67 = tpu.matmul %66, %16, %cst_28 {dimension_numbers = #tpu.dot_dimension_numbers<[1], [0], [0], [1], [0, 0, 1, 1], [], []>} : vector<6x32xf32>, vector<32x32xf32>, vector<6x32xf32> -> vector<6x32xf32>
    %68 = vector.broadcast %17 : vector<1x32xf32> to vector<6x32xf32>
    %69 = arith.addf %67, %68 : vector<6x32xf32>
    %cst_29 = arith.constant 0.000000e+00 : f32
    %70 = vector.broadcast %cst_29 : f32 to vector<6x32xf32>
    %71 = arith.cmpf oge, %69, %70 : vector<6x32xf32>
    %cst_30 = arith.constant 0.00999999977 : f32
    %72 = vector.broadcast %cst_30 : f32 to vector<6x32xf32>
    %73 = arith.mulf %72, %69 : vector<6x32xf32>
    %74 = arith.select %71, %69, %73 : vector<6x32xi1>, vector<6x32xf32>
    %75 = arith.addf %74, %58 : vector<6x32xf32>
    %c0_31 = arith.constant 0 : index
    %c0_32 = arith.constant 0 : index
    %76 = vector.load %arg12[%c0_31, %c0_32] : memref<96x2xf32, #tpu.memory_space<vmem>>, vector<96x2xf32>
    %c0_33 = arith.constant 0 : index
    %c0_34 = arith.constant 0 : index
    %77 = vector.load %arg13[%c0_33, %c0_34] : memref<10x32xf32, #tpu.memory_space<vmem>>, vector<10x32xf32>
    %c0_35 = arith.constant 0 : index
    %c0_36 = arith.constant 0 : index
    %78 = vector.load %arg14[%c0_35, %c0_36] : memref<32x32xf32, #tpu.memory_space<vmem>>, vector<32x32xf32>
    %c0_37 = arith.constant 0 : index
    %c0_38 = arith.constant 0 : index
    %79 = vector.load %arg15[%c0_37, %c0_38] : memref<1x32xf32, #tpu.memory_space<vmem>>, vector<1x32xf32>
    %c0_39 = arith.constant 0 : index
    %c0_40 = arith.constant 0 : index
    %80 = vector.load %arg16[%c0_39, %c0_40] : memref<32x32xf32, #tpu.memory_space<vmem>>, vector<32x32xf32>
    %c0_41 = arith.constant 0 : index
    %c0_42 = arith.constant 0 : index
    %81 = vector.load %arg17[%c0_41, %c0_42] : memref<1x32xf32, #tpu.memory_space<vmem>>, vector<1x32xf32>
    %82 = vector.extract_strided_slice %11 {offsets = [0, 0], sizes = [5, 16], strides = [1, 1]} : vector<20x16xf32> to vector<5x16xf32>
    %83 = vector.extract_strided_slice %11 {offsets = [10, 0], sizes = [5, 16], strides = [1, 1]} : vector<20x16xf32> to vector<5x16xf32>
    %84 = tpu.concatenate %82, %83 in 0 : vector<5x16xf32>, vector<5x16xf32> -> vector<10x16xf32>
    %85 = vector.extract_strided_slice %11 {offsets = [1, 0], sizes = [5, 16], strides = [1, 1]} : vector<20x16xf32> to vector<5x16xf32>
    %86 = vector.extract_strided_slice %11 {offsets = [11, 0], sizes = [5, 16], strides = [1, 1]} : vector<20x16xf32> to vector<5x16xf32>
    %87 = tpu.concatenate %85, %86 in 0 : vector<5x16xf32>, vector<5x16xf32> -> vector<10x16xf32>
    %88 = vector.extract_strided_slice %11 {offsets = [2, 0], sizes = [5, 16], strides = [1, 1]} : vector<20x16xf32> to vector<5x16xf32>
    %89 = vector.extract_strided_slice %11 {offsets = [12, 0], sizes = [5, 16], strides = [1, 1]} : vector<20x16xf32> to vector<5x16xf32>
    %90 = tpu.concatenate %88, %89 in 0 : vector<5x16xf32>, vector<5x16xf32> -> vector<10x16xf32>
    %91 = vector.extract_strided_slice %11 {offsets = [3, 0], sizes = [5, 16], strides = [1, 1]} : vector<20x16xf32> to vector<5x16xf32>
    %92 = vector.extract_strided_slice %11 {offsets = [13, 0], sizes = [5, 16], strides = [1, 1]} : vector<20x16xf32> to vector<5x16xf32>
    %93 = tpu.concatenate %91, %92 in 0 : vector<5x16xf32>, vector<5x16xf32> -> vector<10x16xf32>
    %94 = vector.extract_strided_slice %11 {offsets = [4, 0], sizes = [5, 16], strides = [1, 1]} : vector<20x16xf32> to vector<5x16xf32>
    %95 = vector.extract_strided_slice %11 {offsets = [14, 0], sizes = [5, 16], strides = [1, 1]} : vector<20x16xf32> to vector<5x16xf32>
    %96 = tpu.concatenate %94, %95 in 0 : vector<5x16xf32>, vector<5x16xf32> -> vector<10x16xf32>
    %97 = vector.extract_strided_slice %11 {offsets = [5, 0], sizes = [5, 16], strides = [1, 1]} : vector<20x16xf32> to vector<5x16xf32>
    %98 = vector.extract_strided_slice %11 {offsets = [15, 0], sizes = [5, 16], strides = [1, 1]} : vector<20x16xf32> to vector<5x16xf32>
    %99 = tpu.concatenate %97, %98 in 0 : vector<5x16xf32>, vector<5x16xf32> -> vector<10x16xf32>
    %100 = tpu.concatenate %84, %87, %90, %93, %96, %99 in 1 : vector<10x16xf32>, vector<10x16xf32>, vector<10x16xf32>, vector<10x16xf32>, vector<10x16xf32>, vector<10x16xf32> -> vector<10x96xf32>
    %cst_43 = arith.constant dense<0.000000e+00> : vector<10x2xf32>
    %101 = tpu.matmul %100, %76, %cst_43 {dimension_numbers = #tpu.dot_dimension_numbers<[1], [0], [0], [1], [0, 0, 1, 1], [], []>} : vector<10x96xf32>, vector<96x2xf32>, vector<10x2xf32> -> vector<10x2xf32>
    %cst_44 = arith.constant 0.000000e+00 : f32
    %102 = vector.broadcast %cst_44 : f32 to vector<10x2xf32>
    %103 = arith.maximumf %101, %102 : vector<10x2xf32>
    %104 = vector.extract_strided_slice %103 {offsets = [0, 0], sizes = [1, 2], strides = [1, 1]} : vector<10x2xf32> to vector<1x2xf32>
    %105 = vector.extract_strided_slice %103 {offsets = [5, 0], sizes = [1, 2], strides = [1, 1]} : vector<10x2xf32> to vector<1x2xf32>
    %106 = tpu.concatenate %104, %105 in 0 : vector<1x2xf32>, vector<1x2xf32> -> vector<2x2xf32>
    %107 = vector.extract_strided_slice %103 {offsets = [1, 0], sizes = [1, 2], strides = [1, 1]} : vector<10x2xf32> to vector<1x2xf32>
    %108 = vector.extract_strided_slice %103 {offsets = [6, 0], sizes = [1, 2], strides = [1, 1]} : vector<10x2xf32> to vector<1x2xf32>
    %109 = tpu.concatenate %107, %108 in 0 : vector<1x2xf32>, vector<1x2xf32> -> vector<2x2xf32>
    %110 = vector.extract_strided_slice %103 {offsets = [2, 0], sizes = [1, 2], strides = [1, 1]} : vector<10x2xf32> to vector<1x2xf32>
    %111 = vector.extract_strided_slice %103 {offsets = [7, 0], sizes = [1, 2], strides = [1, 1]} : vector<10x2xf32> to vector<1x2xf32>
    %112 = tpu.concatenate %110, %111 in 0 : vector<1x2xf32>, vector<1x2xf32> -> vector<2x2xf32>
    %113 = vector.extract_strided_slice %103 {offsets = [3, 0], sizes = [1, 2], strides = [1, 1]} : vector<10x2xf32> to vector<1x2xf32>
    %114 = vector.extract_strided_slice %103 {offsets = [8, 0], sizes = [1, 2], strides = [1, 1]} : vector<10x2xf32> to vector<1x2xf32>
    %115 = tpu.concatenate %113, %114 in 0 : vector<1x2xf32>, vector<1x2xf32> -> vector<2x2xf32>
    %116 = vector.extract_strided_slice %103 {offsets = [4, 0], sizes = [1, 2], strides = [1, 1]} : vector<10x2xf32> to vector<1x2xf32>
    %117 = vector.extract_strided_slice %103 {offsets = [9, 0], sizes = [1, 2], strides = [1, 1]} : vector<10x2xf32> to vector<1x2xf32>
    %118 = tpu.concatenate %116, %117 in 0 : vector<1x2xf32>, vector<1x2xf32> -> vector<2x2xf32>
    %119 = tpu.concatenate %106, %109, %112, %115, %118 in 1 : vector<2x2xf32>, vector<2x2xf32>, vector<2x2xf32>, vector<2x2xf32>, vector<2x2xf32> -> vector<2x10xf32>
    %cst_45 = arith.constant dense<0.000000e+00> : vector<2x32xf32>
    %120 = tpu.matmul %119, %77, %cst_45 {dimension_numbers = #tpu.dot_dimension_numbers<[1], [0], [0], [1], [0, 0, 1, 1], [], []>} : vector<2x10xf32>, vector<10x32xf32>, vector<2x32xf32> -> vector<2x32xf32>
    %cst_46 = arith.constant 0.000000e+00 : f32
    %121 = vector.broadcast %cst_46 : f32 to vector<2x32xf32>
    %122 = arith.maximumf %120, %121 : vector<2x32xf32>
    %cst_47 = arith.constant dense<0.000000e+00> : vector<2x32xf32>
    %123 = tpu.matmul %122, %78, %cst_47 {dimension_numbers = #tpu.dot_dimension_numbers<[1], [0], [0], [1], [0, 0, 1, 1], [], []>} : vector<2x32xf32>, vector<32x32xf32>, vector<2x32xf32> -> vector<2x32xf32>
    %124 = vector.broadcast %79 : vector<1x32xf32> to vector<2x32xf32>
    %125 = arith.addf %123, %124 : vector<2x32xf32>
    %cst_48 = arith.constant 0.000000e+00 : f32
    %126 = vector.broadcast %cst_48 : f32 to vector<2x32xf32>
    %127 = arith.cmpf oge, %125, %126 : vector<2x32xf32>
    %cst_49 = arith.constant 0.00999999977 : f32
    %128 = vector.broadcast %cst_49 : f32 to vector<2x32xf32>
    %129 = arith.mulf %128, %125 : vector<2x32xf32>
    %130 = arith.select %127, %125, %129 : vector<2x32xi1>, vector<2x32xf32>
    %cst_50 = arith.constant dense<0.000000e+00> : vector<2x32xf32>
    %131 = tpu.matmul %130, %80, %cst_50 {dimension_numbers = #tpu.dot_dimension_numbers<[1], [0], [0], [1], [0, 0, 1, 1], [], []>} : vector<2x32xf32>, vector<32x32xf32>, vector<2x32xf32> -> vector<2x32xf32>
    %132 = vector.broadcast %81 : vector<1x32xf32> to vector<2x32xf32>
    %133 = arith.addf %131, %132 : vector<2x32xf32>
    %cst_51 = arith.constant 0.000000e+00 : f32
    %134 = vector.broadcast %cst_51 : f32 to vector<2x32xf32>
    %135 = arith.cmpf oge, %133, %134 : vector<2x32xf32>
    %cst_52 = arith.constant 0.00999999977 : f32
    %136 = vector.broadcast %cst_52 : f32 to vector<2x32xf32>
    %137 = arith.mulf %136, %133 : vector<2x32xf32>
    %138 = arith.select %135, %133, %137 : vector<2x32xi1>, vector<2x32xf32>
    %139 = arith.addf %138, %122 : vector<2x32xf32>
    %140 = vector.extract_strided_slice %75 {offsets = [0, 0], sizes = [3, 32], strides = [1, 1]} : vector<6x32xf32> to vector<3x32xf32>
    %141 = vector.extract_strided_slice %139 {offsets = [0, 0], sizes = [1, 32], strides = [1, 1]} : vector<2x32xf32> to vector<1x32xf32>
    %142 = vector.broadcast %141 : vector<1x32xf32> to vector<3x32xf32>
    %143 = arith.mulf %140, %142 : vector<3x32xf32>
    %144 = vector.extract_strided_slice %75 {offsets = [3, 0], sizes = [3, 32], strides = [1, 1]} : vector<6x32xf32> to vector<3x32xf32>
    %145 = vector.extract_strided_slice %139 {offsets = [1, 0], sizes = [1, 32], strides = [1, 1]} : vector<2x32xf32> to vector<1x32xf32>
    %146 = vector.broadcast %145 : vector<1x32xf32> to vector<3x32xf32>
    %147 = arith.mulf %144, %146 : vector<3x32xf32>
    %148 = arith.addf %143, %147 : vector<3x32xf32>
    %cst_53 = arith.constant dense<0.000000e+00> : vector<3xf32>
    %149 = vector.multi_reduction <add>, %148, %cst_53 [1] : vector<3x32xf32> to vector<3xf32>
    %150 = vector.shape_cast %149 : vector<3xf32> to vector<3x1xf32>
    %cst_54 = arith.constant 2.000000e-15 : f32
    %151 = vector.broadcast %cst_54 : f32 to vector<3x1xf32>
    %152 = arith.addf %150, %151 : vector<3x1xf32>
    %cst_55 = arith.constant dense<0.000000e+00> : vector<1xf32>
    %153 = vector.multi_reduction <add>, %152, %cst_55 [0] : vector<3x1xf32> to vector<1xf32>
    %154 = vector.shape_cast %153 : vector<1xf32> to vector<1x1xf32>
    %155 = vector.broadcast %154 : vector<1x1xf32> to vector<3x1xf32>
    %156 = arith.divf %152, %155 : vector<3x1xf32>
    %157 = vector.extract_strided_slice %156 {offsets = [0, 0], sizes = [1, 1], strides = [1, 1]} : vector<3x1xf32> to vector<1x1xf32>
    %158 = vector.extract_strided_slice %1 {offsets = [0, 0], sizes = [18, 16], strides = [1, 1]} : vector<20x16xf32> to vector<18x16xf32>
    %159 = vector.broadcast %157 : vector<1x1xf32> to vector<18x16xf32>
    %160 = arith.mulf %159, %158 : vector<18x16xf32>
    %161 = vector.extract_strided_slice %156 {offsets = [1, 0], sizes = [1, 1], strides = [1, 1]} : vector<3x1xf32> to vector<1x1xf32>
    %162 = vector.extract_strided_slice %1 {offsets = [1, 0], sizes = [18, 16], strides = [1, 1]} : vector<20x16xf32> to vector<18x16xf32>
    %163 = vector.broadcast %161 : vector<1x1xf32> to vector<18x16xf32>
    %164 = arith.mulf %163, %162 : vector<18x16xf32>
    %165 = arith.addf %160, %164 : vector<18x16xf32>
    %166 = vector.extract_strided_slice %156 {offsets = [2, 0], sizes = [1, 1], strides = [1, 1]} : vector<3x1xf32> to vector<1x1xf32>
    %167 = vector.extract_strided_slice %1 {offsets = [2, 0], sizes = [18, 16], strides = [1, 1]} : vector<20x16xf32> to vector<18x16xf32>
    %168 = vector.broadcast %166 : vector<1x1xf32> to vector<18x16xf32>
    %169 = arith.mulf %168, %167 : vector<18x16xf32>
    %170 = arith.addf %165, %169 : vector<18x16xf32>
    %c0_56 = arith.constant 0 : index
    %c0_57 = arith.constant 0 : index
    %171 = vector.load %arg4[%c0_56, %c0_57] : memref<4x18xf32, #tpu.memory_space<vmem>>, vector<4x18xf32>
    %cst_58 = arith.constant dense<0.000000e+00> : vector<4x16xf32>
    %172 = tpu.matmul %171, %170, %cst_58 {dimension_numbers = #tpu.dot_dimension_numbers<[1], [0], [0], [1], [0, 0, 1, 1], [], []>} : vector<4x18xf32>, vector<18x16xf32>, vector<4x16xf32> -> vector<4x16xf32>
    %173 = vector.extract_strided_slice %1 {offsets = [19, 0], sizes = [1, 16], strides = [1, 1]} : vector<20x16xf32> to vector<1x16xf32>
    %174 = vector.extract_strided_slice %1 {offsets = [10, 0], sizes = [10, 16], strides = [1, 1]} : vector<20x16xf32> to vector<10x16xf32>
    %175 = vector.shape_cast %173 : vector<1x16xf32> to vector<1x16xf32>
    %176 = vector.broadcast %175 : vector<1x16xf32> to vector<8x16xf32>
    %177 = tpu.concatenate %174, %176 in 0 : vector<10x16xf32>, vector<8x16xf32> -> vector<18x16xf32>
    %c0_59 = arith.constant 0 : index
    %c0_60 = arith.constant 0 : index
    %178 = vector.load %arg4[%c0_59, %c0_60] : memref<4x18xf32, #tpu.memory_space<vmem>>, vector<4x18xf32>
    %cst_61 = arith.constant dense<0.000000e+00> : vector<4x16xf32>
    %179 = tpu.matmul %178, %177, %cst_61 {dimension_numbers = #tpu.dot_dimension_numbers<[1], [0], [0], [1], [0, 0, 1, 1], [], []>} : vector<4x18xf32>, vector<18x16xf32>, vector<4x16xf32> -> vector<4x16xf32>
    %180 = tpu.concatenate %179, %172 in 0 : vector<4x16xf32>, vector<4x16xf32> -> vector<8x16xf32>
    %c0_62 = arith.constant 0 : index
    %c0_63 = arith.constant 0 : index
    %181 = vector.load %arg18[%c0_62, %c0_63] : memref<32x8xf32, #tpu.memory_space<vmem>>, vector<32x8xf32>
    %c0_64 = arith.constant 0 : index
    %c0_65 = arith.constant 0 : index
    %182 = vector.load %arg19[%c0_64, %c0_65] : memref<16x16xf32, #tpu.memory_space<vmem>>, vector<16x16xf32>
    %c0_66 = arith.constant 0 : index
    %c0_67 = arith.constant 0 : index
    %183 = vector.load %arg20[%c0_66, %c0_67] : memref<32x1xf32, #tpu.memory_space<vmem>>, vector<32x1xf32>
    %cst_68 = arith.constant dense<0.000000e+00> : vector<32x16xf32>
    %184 = tpu.matmul %181, %180, %cst_68 {dimension_numbers = #tpu.dot_dimension_numbers<[1], [0], [0], [1], [0, 0, 1, 1], [], []>} : vector<32x8xf32>, vector<8x16xf32>, vector<32x16xf32> -> vector<32x16xf32>
    %cst_69 = arith.constant dense<0.000000e+00> : vector<32x16xf32>
    %185 = tpu.matmul %184, %182, %cst_69 {dimension_numbers = #tpu.dot_dimension_numbers<[1], [0], [0], [1], [0, 0, 1, 1], [], []>} : vector<32x16xf32>, vector<16x16xf32>, vector<32x16xf32> -> vector<32x16xf32>
    %186 = vector.broadcast %183 : vector<32x1xf32> to vector<32x16xf32>
    %187 = arith.addf %185, %186 : vector<32x16xf32>
    %cst_70 = arith.constant 0.999994993 : f32
    %188 = vector.broadcast %cst_70 : f32 to vector<32x16xf32>
    %189 = arith.mulf %187, %188 : vector<32x16xf32>
    %190 = math.tanh %189 : vector<32x16xf32>
    %c0_71 = arith.constant 0 : index
    %c0_72 = arith.constant 0 : index
    %c0_73 = arith.constant 0 : index
    %191 = vector.load %arg21[%c0_71, %c0_72, %c0_73] : memref<4x32x32xf32, #tpu.memory_space<vmem>>, vector<1x32x32xf32>
    %192 = vector.shape_cast %191 : vector<1x32x32xf32> to vector<32x32xf32>
    %c0_74 = arith.constant 0 : index
    %c0_75 = arith.constant 0 : index
    %c0_76 = arith.constant 0 : index
    %193 = vector.load %arg22[%c0_74, %c0_75, %c0_76] : memref<4x16x16xf32, #tpu.memory_space<vmem>>, vector<1x16x16xf32>
    %194 = vector.shape_cast %193 : vector<1x16x16xf32> to vector<16x16xf32>
    %c0_77 = arith.constant 0 : index
    %c0_78 = arith.constant 0 : index
    %c0_79 = arith.constant 0 : index
    %195 = vector.load %arg23[%c0_77, %c0_78, %c0_79] : memref<4x32x1xf32, #tpu.memory_space<vmem>>, vector<1x32x1xf32>
    %196 = vector.shape_cast %195 : vector<1x32x1xf32> to vector<32x1xf32>
    %cst_80 = arith.constant dense<0.000000e+00> : vector<32x16xf32>
    %197 = tpu.matmul %192, %190, %cst_80 {dimension_numbers = #tpu.dot_dimension_numbers<[1], [0], [0], [1], [0, 0, 1, 1], [], []>} : vector<32x32xf32>, vector<32x16xf32>, vector<32x16xf32> -> vector<32x16xf32>
    %cst_81 = arith.constant dense<0.000000e+00> : vector<32x16xf32>
    %198 = tpu.matmul %197, %194, %cst_81 {dimension_numbers = #tpu.dot_dimension_numbers<[1], [0], [0], [1], [0, 0, 1, 1], [], []>} : vector<32x16xf32>, vector<16x16xf32>, vector<32x16xf32> -> vector<32x16xf32>
    %199 = vector.broadcast %196 : vector<32x1xf32> to vector<32x16xf32>
    %200 = arith.addf %198, %199 : vector<32x16xf32>
    %cst_82 = arith.constant 0.999994993 : f32
    %201 = vector.broadcast %cst_82 : f32 to vector<32x16xf32>
    %202 = arith.mulf %200, %201 : vector<32x16xf32>
    %203 = math.tanh %202 : vector<32x16xf32>
    %c1 = arith.constant 1 : index
    %c0_83 = arith.constant 0 : index
    %c0_84 = arith.constant 0 : index
    %204 = vector.load %arg21[%c1, %c0_83, %c0_84] : memref<4x32x32xf32, #tpu.memory_space<vmem>>, vector<1x32x32xf32>
    %205 = vector.shape_cast %204 : vector<1x32x32xf32> to vector<32x32xf32>
    %c1_85 = arith.constant 1 : index
    %c0_86 = arith.constant 0 : index
    %c0_87 = arith.constant 0 : index
    %206 = vector.load %arg22[%c1_85, %c0_86, %c0_87] : memref<4x16x16xf32, #tpu.memory_space<vmem>>, vector<1x16x16xf32>
    %207 = vector.shape_cast %206 : vector<1x16x16xf32> to vector<16x16xf32>
    %c1_88 = arith.constant 1 : index
    %c0_89 = arith.constant 0 : index
    %c0_90 = arith.constant 0 : index
    %208 = vector.load %arg23[%c1_88, %c0_89, %c0_90] : memref<4x32x1xf32, #tpu.memory_space<vmem>>, vector<1x32x1xf32>
    %209 = vector.shape_cast %208 : vector<1x32x1xf32> to vector<32x1xf32>
    %cst_91 = arith.constant dense<0.000000e+00> : vector<32x16xf32>
    %210 = tpu.matmul %205, %203, %cst_91 {dimension_numbers = #tpu.dot_dimension_numbers<[1], [0], [0], [1], [0, 0, 1, 1], [], []>} : vector<32x32xf32>, vector<32x16xf32>, vector<32x16xf32> -> vector<32x16xf32>
    %cst_92 = arith.constant dense<0.000000e+00> : vector<32x16xf32>
    %211 = tpu.matmul %210, %207, %cst_92 {dimension_numbers = #tpu.dot_dimension_numbers<[1], [0], [0], [1], [0, 0, 1, 1], [], []>} : vector<32x16xf32>, vector<16x16xf32>, vector<32x16xf32> -> vector<32x16xf32>
    %212 = vector.broadcast %209 : vector<32x1xf32> to vector<32x16xf32>
    %213 = arith.addf %211, %212 : vector<32x16xf32>
    %cst_93 = arith.constant 0.999994993 : f32
    %214 = vector.broadcast %cst_93 : f32 to vector<32x16xf32>
    %215 = arith.mulf %213, %214 : vector<32x16xf32>
    %216 = math.tanh %215 : vector<32x16xf32>
    %217 = arith.addf %216, %190 : vector<32x16xf32>
    %c2 = arith.constant 2 : index
    %c0_94 = arith.constant 0 : index
    %c0_95 = arith.constant 0 : index
    %218 = vector.load %arg21[%c2, %c0_94, %c0_95] : memref<4x32x32xf32, #tpu.memory_space<vmem>>, vector<1x32x32xf32>
    %219 = vector.shape_cast %218 : vector<1x32x32xf32> to vector<32x32xf32>
    %c2_96 = arith.constant 2 : index
    %c0_97 = arith.constant 0 : index
    %c0_98 = arith.constant 0 : index
    %220 = vector.load %arg22[%c2_96, %c0_97, %c0_98] : memref<4x16x16xf32, #tpu.memory_space<vmem>>, vector<1x16x16xf32>
    %221 = vector.shape_cast %220 : vector<1x16x16xf32> to vector<16x16xf32>
    %c2_99 = arith.constant 2 : index
    %c0_100 = arith.constant 0 : index
    %c0_101 = arith.constant 0 : index
    %222 = vector.load %arg23[%c2_99, %c0_100, %c0_101] : memref<4x32x1xf32, #tpu.memory_space<vmem>>, vector<1x32x1xf32>
    %223 = vector.shape_cast %222 : vector<1x32x1xf32> to vector<32x1xf32>
    %cst_102 = arith.constant dense<0.000000e+00> : vector<32x16xf32>
    %224 = tpu.matmul %219, %217, %cst_102 {dimension_numbers = #tpu.dot_dimension_numbers<[1], [0], [0], [1], [0, 0, 1, 1], [], []>} : vector<32x32xf32>, vector<32x16xf32>, vector<32x16xf32> -> vector<32x16xf32>
    %cst_103 = arith.constant dense<0.000000e+00> : vector<32x16xf32>
    %225 = tpu.matmul %224, %221, %cst_103 {dimension_numbers = #tpu.dot_dimension_numbers<[1], [0], [0], [1], [0, 0, 1, 1], [], []>} : vector<32x16xf32>, vector<16x16xf32>, vector<32x16xf32> -> vector<32x16xf32>
    %226 = vector.broadcast %223 : vector<32x1xf32> to vector<32x16xf32>
    %227 = arith.addf %225, %226 : vector<32x16xf32>
    %cst_104 = arith.constant 0.999994993 : f32
    %228 = vector.broadcast %cst_104 : f32 to vector<32x16xf32>
    %229 = arith.mulf %227, %228 : vector<32x16xf32>
    %230 = math.tanh %229 : vector<32x16xf32>
    %c3 = arith.constant 3 : index
    %c0_105 = arith.constant 0 : index
    %c0_106 = arith.constant 0 : index
    %231 = vector.load %arg21[%c3, %c0_105, %c0_106] : memref<4x32x32xf32, #tpu.memory_space<vmem>>, vector<1x32x32xf32>
    %232 = vector.shape_cast %231 : vector<1x32x32xf32> to vector<32x32xf32>
    %c3_107 = arith.constant 3 : index
    %c0_108 = arith.constant 0 : index
    %c0_109 = arith.constant 0 : index
    %233 = vector.load %arg22[%c3_107, %c0_108, %c0_109] : memref<4x16x16xf32, #tpu.memory_space<vmem>>, vector<1x16x16xf32>
    %234 = vector.shape_cast %233 : vector<1x16x16xf32> to vector<16x16xf32>
    %c3_110 = arith.constant 3 : index
    %c0_111 = arith.constant 0 : index
    %c0_112 = arith.constant 0 : index
    %235 = vector.load %arg23[%c3_110, %c0_111, %c0_112] : memref<4x32x1xf32, #tpu.memory_space<vmem>>, vector<1x32x1xf32>
    %236 = vector.shape_cast %235 : vector<1x32x1xf32> to vector<32x1xf32>
    %cst_113 = arith.constant dense<0.000000e+00> : vector<32x16xf32>
    %237 = tpu.matmul %232, %230, %cst_113 {dimension_numbers = #tpu.dot_dimension_numbers<[1], [0], [0], [1], [0, 0, 1, 1], [], []>} : vector<32x32xf32>, vector<32x16xf32>, vector<32x16xf32> -> vector<32x16xf32>
    %cst_114 = arith.constant dense<0.000000e+00> : vector<32x16xf32>
    %238 = tpu.matmul %237, %234, %cst_114 {dimension_numbers = #tpu.dot_dimension_numbers<[1], [0], [0], [1], [0, 0, 1, 1], [], []>} : vector<32x16xf32>, vector<16x16xf32>, vector<32x16xf32> -> vector<32x16xf32>
    %239 = vector.broadcast %236 : vector<32x1xf32> to vector<32x16xf32>
    %240 = arith.addf %238, %239 : vector<32x16xf32>
    %cst_115 = arith.constant 0.999994993 : f32
    %241 = vector.broadcast %cst_115 : f32 to vector<32x16xf32>
    %242 = arith.mulf %240, %241 : vector<32x16xf32>
    %243 = math.tanh %242 : vector<32x16xf32>
    %244 = arith.addf %243, %217 : vector<32x16xf32>
    %c0_116 = arith.constant 0 : index
    %c0_117 = arith.constant 0 : index
    %245 = vector.load %arg24[%c0_116, %c0_117] : memref<8x32xf32, #tpu.memory_space<vmem>>, vector<8x32xf32>
    %c0_118 = arith.constant 0 : index
    %c0_119 = arith.constant 0 : index
    %246 = vector.load %arg25[%c0_118, %c0_119] : memref<16x16xf32, #tpu.memory_space<vmem>>, vector<16x16xf32>
    %c0_120 = arith.constant 0 : index
    %c0_121 = arith.constant 0 : index
    %247 = vector.load %arg26[%c0_120, %c0_121] : memref<8x1xf32, #tpu.memory_space<vmem>>, vector<8x1xf32>
    %cst_122 = arith.constant dense<0.000000e+00> : vector<8x16xf32>
    %248 = tpu.matmul %245, %244, %cst_122 {dimension_numbers = #tpu.dot_dimension_numbers<[1], [0], [0], [1], [0, 0, 1, 1], [], []>} : vector<8x32xf32>, vector<32x16xf32>, vector<8x16xf32> -> vector<8x16xf32>
    %cst_123 = arith.constant dense<0.000000e+00> : vector<8x16xf32>
    %249 = tpu.matmul %248, %246, %cst_123 {dimension_numbers = #tpu.dot_dimension_numbers<[1], [0], [0], [1], [0, 0, 1, 1], [], []>} : vector<8x16xf32>, vector<16x16xf32>, vector<8x16xf32> -> vector<8x16xf32>
    %250 = vector.broadcast %247 : vector<8x1xf32> to vector<8x16xf32>
    %251 = arith.addf %249, %250 : vector<8x16xf32>
    %252 = arith.addf %251, %180 : vector<8x16xf32>
    %c0_124 = arith.constant 0 : index
    %c0_125 = arith.constant 0 : index
    %253 = vector.load %arg5[%c0_124, %c0_125] : memref<18x4xf32, #tpu.memory_space<vmem>>, vector<18x4xf32>
    %254 = vector.extract_strided_slice %252 {offsets = [0, 0], sizes = [4, 16], strides = [1, 1]} : vector<8x16xf32> to vector<4x16xf32>
    %cst_126 = arith.constant dense<0.000000e+00> : vector<18x16xf32>
    %255 = tpu.matmul %253, %254, %cst_126 {dimension_numbers = #tpu.dot_dimension_numbers<[1], [0], [0], [1], [0, 0, 1, 1], [], []>} : vector<18x4xf32>, vector<4x16xf32>, vector<18x16xf32> -> vector<18x16xf32>
    %c0_127 = arith.constant 0 : index
    %c0_128 = arith.constant 0 : index
    %c0_129 = arith.constant 0 : index
    %256 = vector.load %arg27[%c0_127, %c0_128, %c0_129] : memref<1x18x16xf32, #tpu.memory_space<vmem>>, vector<1x18x16xf32>
    %257 = vector.shape_cast %256 : vector<1x18x16xf32> to vector<18x16xf32>
    %258 = vector.shape_cast %255 : vector<18x16xf32> to vector<1x18x16xf32>
    tpu.vector_store %arg27[%c0_127, %c0_128, %c0_129], %258 {strides = array<i32>} : memref<1x18x16xf32, #tpu.memory_space<vmem>>, vector<1x18x16xf32>,
    return
  }
  func.func @transform_0(%arg0: i32) -> (i32, i32, i32) {
    %c0_i32 = arith.constant 0 : i32
    %c0_i32_0 = arith.constant 0 : i32
    %c0_i32_1 = arith.constant 0 : i32
    return %arg0, %c0_i32, %c0_i32_0 : i32, i32, i32
  }
  func.func @transform_1(%arg0: i32) -> (i32, i32) {
    %c0_i32 = arith.constant 0 : i32
    %c0_i32_0 = arith.constant 0 : i32
    %c0_i32_1 = arith.constant 0 : i32
    return %c0_i32, %c0_i32_0 : i32, i32
  }
  func.func @transform_2(%arg0: i32) -> (i32, i32) {
    %c0_i32 = arith.constant 0 : i32
    %c0_i32_0 = arith.constant 0 : i32
    %c0_i32_1 = arith.constant 0 : i32
    return %c0_i32, %c0_i32_0 : i32, i32
  }
  func.func @transform_3(%arg0: i32) -> (i32, i32) {
    %c0_i32 = arith.constant 0 : i32
    %c0_i32_0 = arith.constant 0 : i32
    %c0_i32_1 = arith.constant 0 : i32
    return %c0_i32, %c0_i32_0 : i32, i32
  }
  func.func @transform_4(%arg0: i32) -> (i32, i32) {
    %c0_i32 = arith.constant 0 : i32
    %c0_i32_0 = arith.constant 0 : i32
    %c0_i32_1 = arith.constant 0 : i32
    return %c0_i32, %c0_i32_0 : i32, i32
  }
  func.func @transform_5(%arg0: i32) -> (i32, i32) {
    %c0_i32 = arith.constant 0 : i32
    %c0_i32_0 = arith.constant 0 : i32
    %c0_i32_1 = arith.constant 0 : i32
    return %c0_i32, %c0_i32_0 : i32, i32
  }
  func.func @transform_6(%arg0: i32) -> (i32, i32) {
    %c0_i32 = arith.constant 0 : i32
    %c0_i32_0 = arith.constant 0 : i32
    %c0_i32_1 = arith.constant 0 : i32
    return %c0_i32, %c0_i32_0 : i32, i32
  }
  func.func @transform_7(%arg0: i32) -> (i32, i32) {
    %c0_i32 = arith.constant 0 : i32
    %c0_i32_0 = arith.constant 0 : i32
    %c0_i32_1 = arith.constant 0 : i32
    return %c0_i32, %c0_i32_0 : i32, i32
  }
  func.func @transform_8(%arg0: i32) -> (i32, i32) {
    %c0_i32 = arith.constant 0 : i32
    %c0_i32_0 = arith.constant 0 : i32
    %c0_i32_1 = arith.constant 0 : i32
    return %c0_i32, %c0_i32_0 : i32, i32
  }
  func.func @transform_9(%arg0: i32) -> (i32, i32) {
    %c0_i32 = arith.constant 0 : i32
    %c0_i32_0 = arith.constant 0 : i32
    %c0_i32_1 = arith.constant 0 : i32
    return %c0_i32, %c0_i32_0 : i32, i32
  }
  func.func @transform_10(%arg0: i32) -> (i32, i32) {
    %c0_i32 = arith.constant 0 : i32
    %c0_i32_0 = arith.constant 0 : i32
    %c0_i32_1 = arith.constant 0 : i32
    return %c0_i32, %c0_i32_0 : i32, i32
  }
  func.func @transform_11(%arg0: i32) -> (i32, i32) {
    %c0_i32 = arith.constant 0 : i32
    %c0_i32_0 = arith.constant 0 : i32
    %c0_i32_1 = arith.constant 0 : i32
    return %c0_i32, %c0_i32_0 : i32, i32
  }
  func.func @transform_12(%arg0: i32) -> (i32, i32) {
    %c0_i32 = arith.constant 0 : i32
    %c0_i32_0 = arith.constant 0 : i32
    %c0_i32_1 = arith.constant 0 : i32
    return %c0_i32, %c0_i32_0 : i32, i32
  }
  func.func @transform_13(%arg0: i32) -> (i32, i32) {
    %c0_i32 = arith.constant 0 : i32
    %c0_i32_0 = arith.constant 0 : i32
    %c0_i32_1 = arith.constant 0 : i32
    return %c0_i32, %c0_i32_0 : i32, i32
  }
  func.func @transform_14(%arg0: i32) -> (i32, i32) {
    %c0_i32 = arith.constant 0 : i32
    %c0_i32_0 = arith.constant 0 : i32
    %c0_i32_1 = arith.constant 0 : i32
    return %c0_i32, %c0_i32_0 : i32, i32
  }
  func.func @transform_15(%arg0: i32) -> (i32, i32) {
    %c0_i32 = arith.constant 0 : i32
    %c0_i32_0 = arith.constant 0 : i32
    %c0_i32_1 = arith.constant 0 : i32
    return %c0_i32, %c0_i32_0 : i32, i32
  }
  func.func @transform_16(%arg0: i32) -> (i32, i32) {
    %c0_i32 = arith.constant 0 : i32
    %c0_i32_0 = arith.constant 0 : i32
    %c0_i32_1 = arith.constant 0 : i32
    return %c0_i32, %c0_i32_0 : i32, i32
  }
  func.func @transform_17(%arg0: i32) -> (i32, i32) {
    %c0_i32 = arith.constant 0 : i32
    %c0_i32_0 = arith.constant 0 : i32
    %c0_i32_1 = arith.constant 0 : i32
    return %c0_i32, %c0_i32_0 : i32, i32
  }
  func.func @transform_18(%arg0: i32) -> (i32, i32) {
    %c0_i32 = arith.constant 0 : i32
    %c0_i32_0 = arith.constant 0 : i32
    %c0_i32_1 = arith.constant 0 : i32
    return %c0_i32, %c0_i32_0 : i32, i32
  }
  func.func @transform_19(%arg0: i32) -> (i32, i32) {
    %c0_i32 = arith.constant 0 : i32
    %c0_i32_0 = arith.constant 0 : i32
    %c0_i32_1 = arith.constant 0 : i32
    return %c0_i32, %c0_i32_0 : i32, i32
  }
  func.func @transform_20(%arg0: i32) -> (i32, i32, i32) {
    %c0_i32 = arith.constant 0 : i32
    %c0_i32_0 = arith.constant 0 : i32
    %c0_i32_1 = arith.constant 0 : i32
    %c0_i32_2 = arith.constant 0 : i32
    return %c0_i32, %c0_i32_0, %c0_i32_1 : i32, i32, i32
  }
  func.func @transform_21(%arg0: i32) -> (i32, i32, i32) {
    %c0_i32 = arith.constant 0 : i32
    %c0_i32_0 = arith.constant 0 : i32
    %c0_i32_1 = arith.constant 0 : i32
    %c0_i32_2 = arith.constant 0 : i32
    return %c0_i32, %c0_i32_0, %c0_i32_1 : i32, i32, i32
  }
  func.func @transform_22(%arg0: i32) -> (i32, i32, i32) {
    %c0_i32 = arith.constant 0 : i32
    %c0_i32_0 = arith.constant 0 : i32
    %c0_i32_1 = arith.constant 0 : i32
    %c0_i32_2 = arith.constant 0 : i32
    return %c0_i32, %c0_i32_0, %c0_i32_1 : i32, i32, i32
  }
  func.func @transform_23(%arg0: i32) -> (i32, i32) {
    %c0_i32 = arith.constant 0 : i32
    %c0_i32_0 = arith.constant 0 : i32
    %c0_i32_1 = arith.constant 0 : i32
    return %c0_i32, %c0_i32_0 : i32, i32
  }
  func.func @transform_24(%arg0: i32) -> (i32, i32) {
    %c0_i32 = arith.constant 0 : i32
    %c0_i32_0 = arith.constant 0 : i32
    %c0_i32_1 = arith.constant 0 : i32
    return %c0_i32, %c0_i32_0 : i32, i32
  }
  func.func @transform_25(%arg0: i32) -> (i32, i32) {
    %c0_i32 = arith.constant 0 : i32
    %c0_i32_0 = arith.constant 0 : i32
    %c0_i32_1 = arith.constant 0 : i32
    return %c0_i32, %c0_i32_0 : i32, i32
  }
  func.func @transform_26(%arg0: i32) -> (i32, i32, i32) {
    %c0_i32 = arith.constant 0 : i32
    %c0_i32_0 = arith.constant 0 : i32
    %c0_i32_1 = arith.constant 0 : i32
    return %arg0, %c0_i32, %c0_i32_0 : i32, i32, i32
  }
}

</mosaic_0001>

<llo_original>
// kernel: tpu_custom_call.1
$region0: #{tpu_custom_call.1}
  #allocation0 [shape = 'u32[]', space=smem, size = 0x4, offset = 0x4, fixed_abs, tag = 'smem constant byte address 0x4 - core index']
  #allocation1 [shape = 'u32[144,128]{1,0:T(1,128)}', space=vmem, size = 0x12000, scoped, tag = 'internal scratch']
  %s0 = inlined_call_operand.vmem [shape: f32[2,20,16], index: 0, kind: input, shape index: {}]
  %s1 = inlined_call_operand.vmem [shape: f32[24,12], index: 1, kind: input, shape index: {}]
  %s2 = inlined_call_operand.vmem [shape: f32[20,10], index: 2, kind: input, shape index: {}]
  %s3 = inlined_call_operand.vmem [shape: f32[4,18], index: 3, kind: input, shape index: {}]
  %s4 = inlined_call_operand.vmem [shape: f32[18,4], index: 4, kind: input, shape index: {}]
  %s5 = inlined_call_operand.vmem [shape: f32[96,2], index: 5, kind: input, shape index: {}]
  %s6 = inlined_call_operand.vmem [shape: f32[10,32], index: 6, kind: input, shape index: {}]
  %s7 = inlined_call_operand.vmem [shape: f32[32,32], index: 7, kind: input, shape index: {}]
  %s8 = inlined_call_operand.vmem [shape: f32[1,32], index: 8, kind: input, shape index: {}]
  %s9 = inlined_call_operand.vmem [shape: f32[32,32], index: 9, kind: input, shape index: {}]
  %s10 = inlined_call_operand.vmem [shape: f32[1,32], index: 10, kind: input, shape index: {}]
  %s11 = inlined_call_operand.vmem [shape: f32[96,2], index: 11, kind: input, shape index: {}]
  %s12 = inlined_call_operand.vmem [shape: f32[10,32], index: 12, kind: input, shape index: {}]
  %s13 = inlined_call_operand.vmem [shape: f32[32,32], index: 13, kind: input, shape index: {}]
  %s14 = inlined_call_operand.vmem [shape: f32[1,32], index: 14, kind: input, shape index: {}]
  %s15 = inlined_call_operand.vmem [shape: f32[32,32], index: 15, kind: input, shape index: {}]
  %s16 = inlined_call_operand.vmem [shape: f32[1,32], index: 16, kind: input, shape index: {}]
  %s17 = inlined_call_operand.vmem [shape: f32[32,8], index: 17, kind: input, shape index: {}]
  %s18 = inlined_call_operand.vmem [shape: f32[16,16], index: 18, kind: input, shape index: {}]
  %s19 = inlined_call_operand.vmem [shape: f32[32,1], index: 19, kind: input, shape index: {}]
  %s20 = inlined_call_operand.vmem [shape: f32[4,32,32], index: 20, kind: input, shape index: {}]
  %s21 = inlined_call_operand.vmem [shape: f32[4,16,16], index: 21, kind: input, shape index: {}]
  %s22 = inlined_call_operand.vmem [shape: f32[4,32,1], index: 22, kind: input, shape index: {}]
  %s23 = inlined_call_operand.vmem [shape: f32[8,32], index: 23, kind: input, shape index: {}]
  %s24 = inlined_call_operand.vmem [shape: f32[16,16], index: 24, kind: input, shape index: {}]
  %s25 = inlined_call_operand.vmem [shape: f32[8,1], index: 25, kind: input, shape index: {}]
  %s26 = inlined_call_operand.vmem [shape: f32[2,18,16], index: 26, kind: output, shape index: {}]
  %s27 = sld [smem:[#allocation0]]
  $region137: #{tpu_custom_call.1} parent=0
    _
  %s29 = ssub.s32 1, %s27
  %s30 = scalar_select 0, %s29, %s27
  loop: start=0, step=1, limit=4
  $region2: #{tpu_custom_call.1} parent=0 // loop_pre_header
    _
  $region3: #{tpu_custom_call.1} parent=0 // loop_header
    %s32 = sphi 0, %s36
    %p33 = scmp.ge.s32.totalorder %s32, 4
    %s42 = sphi 0, %s44
    %s45 = sphi 0, %s42
    %s46 = sphi 0, %s45
    %s62 = sphi 0, %s46
    %s66 = sphi 0, %s66
    %s68 = sphi 0, %s66
    %s69 = sphi 0, %s68
    %s83 = sphi 0, %s69
    %s87 = sphi 0, %s87
    %s89 = sphi 0, %s87
    %s90 = sphi 0, %s89
    %s104 = sphi 0, %s90
    %s108 = sphi 0, %s108
    %s110 = sphi 0, %s108
    %s111 = sphi 0, %s110
    %s125 = sphi 0, %s111
    %s129 = sphi 0, %s129
    %s131 = sphi 0, %s129
    %s132 = sphi 0, %s131
    %s146 = sphi 0, %s132
    %s150 = sphi 0, %s150
    %s152 = sphi 0, %s150
    %s153 = sphi 0, %s152
    %s167 = sphi 0, %s153
    %s171 = sphi 0, %s171
    %s173 = sphi 0, %s171
    %s174 = sphi 0, %s173
    %s188 = sphi 0, %s174
    %s192 = sphi 0, %s192
    %s194 = sphi 0, %s192
    %s195 = sphi 0, %s194
    %s209 = sphi 0, %s195
    %s213 = sphi 0, %s213
    %s215 = sphi 0, %s213
    %s216 = sphi 0, %s215
    %s230 = sphi 0, %s216
    %s234 = sphi 0, %s234
    %s236 = sphi 0, %s234
    %s237 = sphi 0, %s236
    %s251 = sphi 0, %s237
    %s255 = sphi 0, %s255
    %s257 = sphi 0, %s255
    %s258 = sphi 0, %s257
    %s272 = sphi 0, %s258
    %s276 = sphi 0, %s276
    %s278 = sphi 0, %s276
    %s279 = sphi 0, %s278
    %s293 = sphi 0, %s279
    %s297 = sphi 0, %s297
    %s299 = sphi 0, %s297
    %s300 = sphi 0, %s299
    %s314 = sphi 0, %s300
    %s318 = sphi 0, %s318
    %s320 = sphi 0, %s318
    %s321 = sphi 0, %s320
    %s335 = sphi 0, %s321
    %s339 = sphi 0, %s339
    %s341 = sphi 0, %s339
    %s342 = sphi 0, %s341
    %s356 = sphi 0, %s342
    %s360 = sphi 0, %s360
    %s362 = sphi 0, %s360
    %s363 = sphi 0, %s362
    %s377 = sphi 0, %s363
    %s381 = sphi 0, %s381
    %s383 = sphi 0, %s381
    %s384 = sphi 0, %s383
    %s398 = sphi 0, %s384
    %s402 = sphi 0, %s402
    %s404 = sphi 0, %s402
    %s405 = sphi 0, %s404
    %s419 = sphi 0, %s405
    %s423 = sphi 0, %s423
    %s425 = sphi 0, %s423
    %s426 = sphi 0, %s425
    %s440 = sphi 0, %s426
    %s444 = sphi 0, %s444
    %s446 = sphi 0, %s444
    %s447 = sphi 0, %s446
    %s461 = sphi 0, %s447
    %s465 = sphi 0, %s465
    %s467 = sphi 0, %s465
    %s468 = sphi 0, %s467
    %s482 = sphi 0, %s468
    %s486 = sphi 0, %s486
    %s488 = sphi 0, %s486
    %s489 = sphi 0, %s488
    %s503 = sphi 0, %s489
    %s507 = sphi 0, %s507
    %s509 = sphi 0, %s507
    %s510 = sphi 0, %s509
    %s524 = sphi 0, %s510
    %s528 = sphi 0, %s528
    %s530 = sphi 0, %s528
    %s531 = sphi 0, %s530
    %s545 = sphi 0, %s531
    %s549 = sphi 0, %s549
    %s551 = sphi 0, %s549
    %s552 = sphi 0, %s551
    %s566 = sphi 0, %s552
    %s570 = sphi 0, %s570
    %s572 = sphi 0, %s570
    %s573 = sphi 0, %s572
    %s587 = sphi 0, %s573
    %s593 = sphi 0, %s595
    %s596 = sphi 0, %s593
    %s597 = sphi 0, %s596
    %s613 = sphi 0, %s597
  $region4: #{tpu_custom_call.1} parent=0 // loop_header_branch
    %35 = sbr.rel (%p33) target = $region8
  $region5: #{tpu_custom_call.1} parent=0 // loop_body
    %s37 = ssub.s32 %s32, 1
    %s38 = ssub.s32 %s32, 2
    %s39 = sadd.s32 %s32, 1
    %s40 = ssub.s32 %s32, %s39
    %p41 = scmp.eq.s32.totalorder %s40, 0
    %s43 = sadd.s32 %s42, 1
    %s44 = scalar_select %p41, %s42, %s43
    %p47 = pneg %p41
    %p48 = scmp.eq.s32.totalorder %s32, 1
    %p49 = por %p47, %p48
    %p50 = scmp.ne.s32.totalorder %s42, %s45
    %p51 = scmp.eq.s32.totalorder %s32, 0
    %p52 = por %p50, %p51
    %p53 = scmp.ne.s32.totalorder %s42, %s45
    %p54 = scmp.eq.s32.totalorder %s37, 1
    %p55 = por %p53, %p54
    %p56 = scmp.ne.s32.totalorder %s45, %s46
    %p57 = scmp.eq.s32.totalorder %s37, 0
    %p58 = por %p56, %p57
    %p59 = scmp.ne.s32.totalorder %s45, %s46
    %p60 = scmp.eq.s32.totalorder %s38, 1
    %p61 = por %p59, %p60
    %p63 = scmp.ne.s32.totalorder %s46, %s62
    %p64 = scmp.eq.s32.totalorder %s38, 0
    %p65 = por %p63, %p64
    %s67 = sadd.s32 %s66, 1
    %p70 = scmp.eq.s32.totalorder %s32, 1
    %p71 = scmp.ne.s32.totalorder %s66, %s68
    %p72 = scmp.eq.s32.totalorder %s32, 0
    %p73 = por %p71, %p72
    %p74 = scmp.ne.s32.totalorder %s66, %s68
    %p75 = scmp.eq.s32.totalorder %s37, 1
    %p76 = por %p74, %p75
    %p77 = scmp.ne.s32.totalorder %s68, %s69
    %p78 = scmp.eq.s32.totalorder %s37, 0
    %p79 = por %p77, %p78
    %p80 = scmp.ne.s32.totalorder %s68, %s69
    %p81 = scmp.eq.s32.totalorder %s38, 1
    %p82 = por %p80, %p81
    %p84 = scmp.ne.s32.totalorder %s69, %s83
    %p85 = scmp.eq.s32.totalorder %s38, 0
    %p86 = por %p84, %p85
    %s88 = sadd.s32 %s87, 1
    %p91 = scmp.eq.s32.totalorder %s32, 1
    %p92 = scmp.ne.s32.totalorder %s87, %s89
    %p93 = scmp.eq.s32.totalorder %s32, 0
    %p94 = por %p92, %p93
    %p95 = scmp.ne.s32.totalorder %s87, %s89
    %p96 = scmp.eq.s32.totalorder %s37, 1
    %p97 = por %p95, %p96
    %p98 = scmp.ne.s32.totalorder %s89, %s90
    %p99 = scmp.eq.s32.totalorder %s37, 0
    %p100 = por %p98, %p99
    %p101 = scmp.ne.s32.totalorder %s89, %s90
    %p102 = scmp.eq.s32.totalorder %s38, 1
    %p103 = por %p101, %p102
    %p105 = scmp.ne.s32.totalorder %s90, %s104
    %p106 = scmp.eq.s32.totalorder %s38, 0
    %p107 = por %p105, %p106
    %s109 = sadd.s32 %s108, 1
    %p112 = scmp.eq.s32.totalorder %s32, 1
    %p113 = scmp.ne.s32.totalorder %s108, %s110
    %p114 = scmp.eq.s32.totalorder %s32, 0
    %p115 = por %p113, %p114
    %p116 = scmp.ne.s32.totalorder %s108, %s110
    %p117 = scmp.eq.s32.totalorder %s37, 1
    %p118 = por %p116, %p117
    %p119 = scmp.ne.s32.totalorder %s110, %s111
    %p120 = scmp.eq.s32.totalorder %s37, 0
    %p121 = por %p119, %p120
    %p122 = scmp.ne.s32.totalorder %s110, %s111
    %p123 = scmp.eq.s32.totalorder %s38, 1
    %p124 = por %p122, %p123
    %p126 = scmp.ne.s32.totalorder %s111, %s125
    %p127 = scmp.eq.s32.totalorder %s38, 0
    %p128 = por %p126, %p127
    %s130 = sadd.s32 %s129, 1
    %p133 = scmp.eq.s32.totalorder %s32, 1
    %p134 = scmp.ne.s32.totalorder %s129, %s131
    %p135 = scmp.eq.s32.totalorder %s32, 0
    %p136 = por %p134, %p135
    %p137 = scmp.ne.s32.totalorder %s129, %s131
    %p138 = scmp.eq.s32.totalorder %s37, 1
    %p139 = por %p137, %p138
    %p140 = scmp.ne.s32.totalorder %s131, %s132
    %p141 = scmp.eq.s32.totalorder %s37, 0
    %p142 = por %p140, %p141
    %p143 = scmp.ne.s32.totalorder %s131, %s132
    %p144 = scmp.eq.s32.totalorder %s38, 1
    %p145 = por %p143, %p144
    %p147 = scmp.ne.s32.totalorder %s132, %s146
    %p148 = scmp.eq.s32.totalorder %s38, 0
    %p149 = por %p147, %p148
    %s151 = sadd.s32 %s150, 1
    %p154 = scmp.eq.s32.totalorder %s32, 1
    %p155 = scmp.ne.s32.totalorder %s150, %s152
    %p156 = scmp.eq.s32.totalorder %s32, 0
    %p157 = por %p155, %p156
    %p158 = scmp.ne.s32.totalorder %s150, %s152
    %p159 = scmp.eq.s32.totalorder %s37, 1
    %p160 = por %p158, %p159
    %p161 = scmp.ne.s32.totalorder %s152, %s153
    %p162 = scmp.eq.s32.totalorder %s37, 0
    %p163 = por %p161, %p162
    %p164 = scmp.ne.s32.totalorder %s152, %s153
    %p165 = scmp.eq.s32.totalorder %s38, 1
    %p166 = por %p164, %p165
    %p168 = scmp.ne.s32.totalorder %s153, %s167
    %p169 = scmp.eq.s32.totalorder %s38, 0
    %p170 = por %p168, %p169
    %s172 = sadd.s32 %s171, 1
    %p175 = scmp.eq.s32.totalorder %s32, 1
    %p176 = scmp.ne.s32.totalorder %s171, %s173
    %p177 = scmp.eq.s32.totalorder %s32, 0
    %p178 = por %p176, %p177
    %p179 = scmp.ne.s32.totalorder %s171, %s173
    %p180 = scmp.eq.s32.totalorder %s37, 1
    %p181 = por %p179, %p180
    %p182 = scmp.ne.s32.totalorder %s173, %s174
    %p183 = scmp.eq.s32.totalorder %s37, 0
    %p184 = por %p182, %p183
    %p185 = scmp.ne.s32.totalorder %s173, %s174
    %p186 = scmp.eq.s32.totalorder %s38, 1
    %p187 = por %p185, %p186
    %p189 = scmp.ne.s32.totalorder %s174, %s188
    %p190 = scmp.eq.s32.totalorder %s38, 0
    %p191 = por %p189, %p190
    %s193 = sadd.s32 %s192, 1
    %p196 = scmp.eq.s32.totalorder %s32, 1
    %p197 = scmp.ne.s32.totalorder %s192, %s194
    %p198 = scmp.eq.s32.totalorder %s32, 0
    %p199 = por %p197, %p198
    %p200 = scmp.ne.s32.totalorder %s192, %s194
    %p201 = scmp.eq.s32.totalorder %s37, 1
    %p202 = por %p200, %p201
    %p203 = scmp.ne.s32.totalorder %s194, %s195
    %p204 = scmp.eq.s32.totalorder %s37, 0
    %p205 = por %p203, %p204
    %p206 = scmp.ne.s32.totalorder %s194, %s195
    %p207 = scmp.eq.s32.totalorder %s38, 1
    %p208 = por %p206, %p207
    %p210 = scmp.ne.s32.totalorder %s195, %s209
    %p211 = scmp.eq.s32.totalorder %s38, 0
    %p212 = por %p210, %p211
    %s214 = sadd.s32 %s213, 1
    %p217 = scmp.eq.s32.totalorder %s32, 1
    %p218 = scmp.ne.s32.totalorder %s213, %s215
    %p219 = scmp.eq.s32.totalorder %s32, 0
    %p220 = por %p218, %p219
    %p221 = scmp.ne.s32.totalorder %s213, %s215
    %p222 = scmp.eq.s32.totalorder %s37, 1
    %p223 = por %p221, %p222
    %p224 = scmp.ne.s32.totalorder %s215, %s216
    %p225 = scmp.eq.s32.totalorder %s37, 0
    %p226 = por %p224, %p225
    %p227 = scmp.ne.s32.totalorder %s215, %s216
    %p228 = scmp.eq.s32.totalorder %s38, 1
    %p229 = por %p227, %p228
    %p231 = scmp.ne.s32.totalorder %s216, %s230
    %p232 = scmp.eq.s32.totalorder %s38, 0
    %p233 = por %p231, %p232
    %s235 = sadd.s32 %s234, 1
    %p238 = scmp.eq.s32.totalorder %s32, 1
    %p239 = scmp.ne.s32.totalorder %s234, %s236
    %p240 = scmp.eq.s32.totalorder %s32, 0
    %p241 = por %p239, %p240
    %p242 = scmp.ne.s32.totalorder %s234, %s236
    %p243 = scmp.eq.s32.totalorder %s37, 1
    %p244 = por %p242, %p243
    %p245 = scmp.ne.s32.totalorder %s236, %s237
    %p246 = scmp.eq.s32.totalorder %s37, 0
    %p247 = por %p245, %p246
    %p248 = scmp.ne.s32.totalorder %s236, %s237
    %p249 = scmp.eq.s32.totalorder %s38, 1
    %p250 = por %p248, %p249
    %p252 = scmp.ne.s32.totalorder %s237, %s251
    %p253 = scmp.eq.s32.totalorder %s38, 0
    %p254 = por %p252, %p253
    %s256 = sadd.s32 %s255, 1
    %p259 = scmp.eq.s32.totalorder %s32, 1
    %p260 = scmp.ne.s32.totalorder %s255, %s257
    %p261 = scmp.eq.s32.totalorder %s32, 0
    %p262 = por %p260, %p261
    %p263 = scmp.ne.s32.totalorder %s255, %s257
    %p264 = scmp.eq.s32.totalorder %s37, 1
    %p265 = por %p263, %p264
    %p266 = scmp.ne.s32.totalorder %s257, %s258
    %p267 = scmp.eq.s32.totalorder %s37, 0
    %p268 = por %p266, %p267
    %p269 = scmp.ne.s32.totalorder %s257, %s258
    %p270 = scmp.eq.s32.totalorder %s38, 1
    %p271 = por %p269, %p270
    %p273 = scmp.ne.s32.totalorder %s258, %s272
    %p274 = scmp.eq.s32.totalorder %s38, 0
    %p275 = por %p273, %p274
    %s277 = sadd.s32 %s276, 1
    %p280 = scmp.eq.s32.totalorder %s32, 1
    %p281 = scmp.ne.s32.totalorder %s276, %s278
    %p282 = scmp.eq.s32.totalorder %s32, 0
    %p283 = por %p281, %p282
    %p284 = scmp.ne.s32.totalorder %s276, %s278
    %p285 = scmp.eq.s32.totalorder %s37, 1
    %p286 = por %p284, %p285
    %p287 = scmp.ne.s32.totalorder %s278, %s279
    %p288 = scmp.eq.s32.totalorder %s37, 0
    %p289 = por %p287, %p288
    %p290 = scmp.ne.s32.totalorder %s278, %s279
    %p291 = scmp.eq.s32.totalorder %s38, 1
    %p292 = por %p290, %p291
    %p294 = scmp.ne.s32.totalorder %s279, %s293
    %p295 = scmp.eq.s32.totalorder %s38, 0
    %p296 = por %p294, %p295
    %s298 = sadd.s32 %s297, 1
    %p301 = scmp.eq.s32.totalorder %s32, 1
    %p302 = scmp.ne.s32.totalorder %s297, %s299
    %p303 = scmp.eq.s32.totalorder %s32, 0
    %p304 = por %p302, %p303
    %p305 = scmp.ne.s32.totalorder %s297, %s299
    %p306 = scmp.eq.s32.totalorder %s37, 1
    %p307 = por %p305, %p306
    %p308 = scmp.ne.s32.totalorder %s299, %s300
    %p309 = scmp.eq.s32.totalorder %s37, 0
    %p310 = por %p308, %p309
    %p311 = scmp.ne.s32.totalorder %s299, %s300
    %p312 = scmp.eq.s32.totalorder %s38, 1
    %p313 = por %p311, %p312
    %p315 = scmp.ne.s32.totalorder %s300, %s314
    %p316 = scmp.eq.s32.totalorder %s38, 0
    %p317 = por %p315, %p316
    %s319 = sadd.s32 %s318, 1
    %p322 = scmp.eq.s32.totalorder %s32, 1
    %p323 = scmp.ne.s32.totalorder %s318, %s320
    %p324 = scmp.eq.s32.totalorder %s32, 0
    %p325 = por %p323, %p324
    %p326 = scmp.ne.s32.totalorder %s318, %s320
    %p327 = scmp.eq.s32.totalorder %s37, 1
    %p328 = por %p326, %p327
    %p329 = scmp.ne.s32.totalorder %s320, %s321
    %p330 = scmp.eq.s32.totalorder %s37, 0
    %p331 = por %p329, %p330
    %p332 = scmp.ne.s32.totalorder %s320, %s321
    %p333 = scmp.eq.s32.totalorder %s38, 1
    %p334 = por %p332, %p333
    %p336 = scmp.ne.s32.totalorder %s321, %s335
    %p337 = scmp.eq.s32.totalorder %s38, 0
    %p338 = por %p336, %p337
    %s340 = sadd.s32 %s339, 1
    %p343 = scmp.eq.s32.totalorder %s32, 1
    %p344 = scmp.ne.s32.totalorder %s339, %s341
    %p345 = scmp.eq.s32.totalorder %s32, 0
    %p346 = por %p344, %p345
    %p347 = scmp.ne.s32.totalorder %s339, %s341
    %p348 = scmp.eq.s32.totalorder %s37, 1
    %p349 = por %p347, %p348
    %p350 = scmp.ne.s32.totalorder %s341, %s342
    %p351 = scmp.eq.s32.totalorder %s37, 0
    %p352 = por %p350, %p351
    %p353 = scmp.ne.s32.totalorder %s341, %s342
    %p354 = scmp.eq.s32.totalorder %s38, 1
    %p355 = por %p353, %p354
    %p357 = scmp.ne.s32.totalorder %s342, %s356
    %p358 = scmp.eq.s32.totalorder %s38, 0
    %p359 = por %p357, %p358
    %s361 = sadd.s32 %s360, 1
    %p364 = scmp.eq.s32.totalorder %s32, 1
    %p365 = scmp.ne.s32.totalorder %s360, %s362
    %p366 = scmp.eq.s32.totalorder %s32, 0
    %p367 = por %p365, %p366
    %p368 = scmp.ne.s32.totalorder %s360, %s362
    %p369 = scmp.eq.s32.totalorder %s37, 1
    %p370 = por %p368, %p369
    %p371 = scmp.ne.s32.totalorder %s362, %s363
    %p372 = scmp.eq.s32.totalorder %s37, 0
    %p373 = por %p371, %p372
    %p374 = scmp.ne.s32.totalorder %s362, %s363
    %p375 = scmp.eq.s32.totalorder %s38, 1
    %p376 = por %p374, %p375
    %p378 = scmp.ne.s32.totalorder %s363, %s377
    %p379 = scmp.eq.s32.totalorder %s38, 0
    %p380 = por %p378, %p379
    %s382 = sadd.s32 %s381, 1
    %p385 = scmp.eq.s32.totalorder %s32, 1
    %p386 = scmp.ne.s32.totalorder %s381, %s383
    %p387 = scmp.eq.s32.totalorder %s32, 0
    %p388 = por %p386, %p387
    %p389 = scmp.ne.s32.totalorder %s381, %s383
    %p390 = scmp.eq.s32.totalorder %s37, 1
    %p391 = por %p389, %p390
    %p392 = scmp.ne.s32.totalorder %s383, %s384
    %p393 = scmp.eq.s32.totalorder %s37, 0
    %p394 = por %p392, %p393
    %p395 = scmp.ne.s32.totalorder %s383, %s384
    %p396 = scmp.eq.s32.totalorder %s38, 1
    %p397 = por %p395, %p396
    %p399 = scmp.ne.s32.totalorder %s384, %s398
    %p400 = scmp.eq.s32.totalorder %s38, 0
    %p401 = por %p399, %p400
    %s403 = sadd.s32 %s402, 1
    %p406 = scmp.eq.s32.totalorder %s32, 1
    %p407 = scmp.ne.s32.totalorder %s402, %s404
    %p408 = scmp.eq.s32.totalorder %s32, 0
    %p409 = por %p407, %p408
    %p410 = scmp.ne.s32.totalorder %s402, %s404
    %p411 = scmp.eq.s32.totalorder %s37, 1
    %p412 = por %p410, %p411
    %p413 = scmp.ne.s32.totalorder %s404, %s405
    %p414 = scmp.eq.s32.totalorder %s37, 0
    %p415 = por %p413, %p414
    %p416 = scmp.ne.s32.totalorder %s404, %s405
    %p417 = scmp.eq.s32.totalorder %s38, 1
    %p418 = por %p416, %p417
    %p420 = scmp.ne.s32.totalorder %s405, %s419
    %p421 = scmp.eq.s32.totalorder %s38, 0
    %p422 = por %p420, %p421
    %s424 = sadd.s32 %s423, 1
    %p427 = scmp.eq.s32.totalorder %s32, 1
    %p428 = scmp.ne.s32.totalorder %s423, %s425
    %p429 = scmp.eq.s32.totalorder %s32, 0
    %p430 = por %p428, %p429
    %p431 = scmp.ne.s32.totalorder %s423, %s425
    %p432 = scmp.eq.s32.totalorder %s37, 1
    %p433 = por %p431, %p432
    %p434 = scmp.ne.s32.totalorder %s425, %s426
    %p435 = scmp.eq.s32.totalorder %s37, 0
    %p436 = por %p434, %p435
    %p437 = scmp.ne.s32.totalorder %s425, %s426
    %p438 = scmp.eq.s32.totalorder %s38, 1
    %p439 = por %p437, %p438
    %p441 = scmp.ne.s32.totalorder %s426, %s440
    %p442 = scmp.eq.s32.totalorder %s38, 0
    %p443 = por %p441, %p442
    %s445 = sadd.s32 %s444, 1
    %p448 = scmp.eq.s32.totalorder %s32, 1
    %p449 = scmp.ne.s32.totalorder %s444, %s446
    %p450 = scmp.eq.s32.totalorder %s32, 0
    %p451 = por %p449, %p450
    %p452 = scmp.ne.s32.totalorder %s444, %s446
    %p453 = scmp.eq.s32.totalorder %s37, 1
    %p454 = por %p452, %p453
    %p455 = scmp.ne.s32.totalorder %s446, %s447
    %p456 = scmp.eq.s32.totalorder %s37, 0
    %p457 = por %p455, %p456
    %p458 = scmp.ne.s32.totalorder %s446, %s447
    %p459 = scmp.eq.s32.totalorder %s38, 1
    %p460 = por %p458, %p459
    %p462 = scmp.ne.s32.totalorder %s447, %s461
    %p463 = scmp.eq.s32.totalorder %s38, 0
    %p464 = por %p462, %p463
    %s466 = sadd.s32 %s465, 1
    %p469 = scmp.eq.s32.totalorder %s32, 1
    %p470 = scmp.ne.s32.totalorder %s465, %s467
    %p471 = scmp.eq.s32.totalorder %s32, 0
    %p472 = por %p470, %p471
    %p473 = scmp.ne.s32.totalorder %s465, %s467
    %p474 = scmp.eq.s32.totalorder %s37, 1
    %p475 = por %p473, %p474
    %p476 = scmp.ne.s32.totalorder %s467, %s468
    %p477 = scmp.eq.s32.totalorder %s37, 0
    %p478 = por %p476, %p477
    %p479 = scmp.ne.s32.totalorder %s467, %s468
    %p480 = scmp.eq.s32.totalorder %s38, 1
    %p481 = por %p479, %p480
    %p483 = scmp.ne.s32.totalorder %s468, %s482
    %p484 = scmp.eq.s32.totalorder %s38, 0
    %p485 = por %p483, %p484
    %s487 = sadd.s32 %s486, 1
    %p490 = scmp.eq.s32.totalorder %s32, 1
    %p491 = scmp.ne.s32.totalorder %s486, %s488
    %p492 = scmp.eq.s32.totalorder %s32, 0
    %p493 = por %p491, %p492
    %p494 = scmp.ne.s32.totalorder %s486, %s488
    %p495 = scmp.eq.s32.totalorder %s37, 1
    %p496 = por %p494, %p495
    %p497 = scmp.ne.s32.totalorder %s488, %s489
    %p498 = scmp.eq.s32.totalorder %s37, 0
    %p499 = por %p497, %p498
    %p500 = scmp.ne.s32.totalorder %s488, %s489
    %p501 = scmp.eq.s32.totalorder %s38, 1
    %p502 = por %p500, %p501
    %p504 = scmp.ne.s32.totalorder %s489, %s503
    %p505 = scmp.eq.s32.totalorder %s38, 0
    %p506 = por %p504, %p505
    %s508 = sadd.s32 %s507, 1
    %p511 = scmp.eq.s32.totalorder %s32, 1
    %p512 = scmp.ne.s32.totalorder %s507, %s509
    %p513 = scmp.eq.s32.totalorder %s32, 0
    %p514 = por %p512, %p513
    %p515 = scmp.ne.s32.totalorder %s507, %s509
    %p516 = scmp.eq.s32.totalorder %s37, 1
    %p517 = por %p515, %p516
    %p518 = scmp.ne.s32.totalorder %s509, %s510
    %p519 = scmp.eq.s32.totalorder %s37, 0
    %p520 = por %p518, %p519
    %p521 = scmp.ne.s32.totalorder %s509, %s510
    %p522 = scmp.eq.s32.totalorder %s38, 1
    %p523 = por %p521, %p522
    %p525 = scmp.ne.s32.totalorder %s510, %s524
    %p526 = scmp.eq.s32.totalorder %s38, 0
    %p527 = por %p525, %p526
    %s529 = sadd.s32 %s528, 1
    %p532 = scmp.eq.s32.totalorder %s32, 1
    %p533 = scmp.ne.s32.totalorder %s528, %s530
    %p534 = scmp.eq.s32.totalorder %s32, 0
    %p535 = por %p533, %p534
    %p536 = scmp.ne.s32.totalorder %s528, %s530
    %p537 = scmp.eq.s32.totalorder %s37, 1
    %p538 = por %p536, %p537
    %p539 = scmp.ne.s32.totalorder %s530, %s531
    %p540 = scmp.eq.s32.totalorder %s37, 0
    %p541 = por %p539, %p540
    %p542 = scmp.ne.s32.totalorder %s530, %s531
    %p543 = scmp.eq.s32.totalorder %s38, 1
    %p544 = por %p542, %p543
    %p546 = scmp.ne.s32.totalorder %s531, %s545
    %p547 = scmp.eq.s32.totalorder %s38, 0
    %p548 = por %p546, %p547
    %s550 = sadd.s32 %s549, 1
    %p553 = scmp.eq.s32.totalorder %s32, 1
    %p554 = scmp.ne.s32.totalorder %s549, %s551
    %p555 = scmp.eq.s32.totalorder %s32, 0
    %p556 = por %p554, %p555
    %p557 = scmp.ne.s32.totalorder %s549, %s551
    %p558 = scmp.eq.s32.totalorder %s37, 1
    %p559 = por %p557, %p558
    %p560 = scmp.ne.s32.totalorder %s551, %s552
    %p561 = scmp.eq.s32.totalorder %s37, 0
    %p562 = por %p560, %p561
    %p563 = scmp.ne.s32.totalorder %s551, %s552
    %p564 = scmp.eq.s32.totalorder %s38, 1
    %p565 = por %p563, %p564
    %p567 = scmp.ne.s32.totalorder %s552, %s566
    %p568 = scmp.eq.s32.totalorder %s38, 0
    %p569 = por %p567, %p568
    %s571 = sadd.s32 %s570, 1
    %p574 = scmp.eq.s32.totalorder %s32, 1
    %p575 = scmp.ne.s32.totalorder %s570, %s572
    %p576 = scmp.eq.s32.totalorder %s32, 0
    %p577 = por %p575, %p576
    %p578 = scmp.ne.s32.totalorder %s570, %s572
    %p579 = scmp.eq.s32.totalorder %s37, 1
    %p580 = por %p578, %p579
    %p581 = scmp.ne.s32.totalorder %s572, %s573
    %p582 = scmp.eq.s32.totalorder %s37, 0
    %p583 = por %p581, %p582
    %p584 = scmp.ne.s32.totalorder %s572, %s573
    %p585 = scmp.eq.s32.totalorder %s38, 1
    %p586 = por %p584, %p585
    %p588 = scmp.ne.s32.totalorder %s573, %s587
    %p589 = scmp.eq.s32.totalorder %s38, 0
    %p590 = por %p588, %p589
    %s591 = ssub.s32 %s32, %s39
    %p592 = scmp.eq.s32.totalorder %s591, 0
    %s594 = sadd.s32 %s593, 1
    %s595 = scalar_select %p592, %s593, %s594
    %p598 = pneg %p592
    %p599 = scmp.eq.s32.totalorder %s32, 1
    %p600 = por %p598, %p599
    %p601 = scmp.ne.s32.totalorder %s593, %s596
    %p602 = scmp.eq.s32.totalorder %s32, 0
    %p603 = por %p601, %p602
    %p604 = scmp.ne.s32.totalorder %s593, %s596
    %p605 = scmp.eq.s32.totalorder %s37, 1
    %p606 = por %p604, %p605
    %p607 = scmp.ne.s32.totalorder %s596, %s597
    %p608 = scmp.eq.s32.totalorder %s37, 0
    %p609 = por %p607, %p608
    %p610 = scmp.ne.s32.totalorder %s596, %s597
    %p611 = scmp.eq.s32.totalorder %s38, 1
    %p612 = por %p610, %p611
    %p614 = scmp.ne.s32.totalorder %s597, %s613
    %p615 = scmp.eq.s32.totalorder %s38, 0
    %p616 = por %p614, %p615
    %p617 = scmp.le.s32.totalorder 1, %s32
    %p618 = scmp.lt.s32.totalorder %s32, 3
    %p619 = pnand %p617, %p618
    %p620 = pneg %p619
    // Predicated region
    $region9: #{tpu_custom_call.1} parent=5 // pred_check
      _
    $region10: #{tpu_custom_call.1} parent=5 // pred_check_branch
      %622 = sbr.rel (%p619) target = $region12
    $region11: #{tpu_custom_call.1} parent=5 // pred_region
      %s623 = ssub.s32 %s32, 1
      // Predicated region
      $region13: #{tpu_custom_call.1} parent=11 // pred_check
        %p624 = pneg %p79
      $region14: #{tpu_custom_call.1} parent=11 // pred_check_branch
        %626 = sbr.rel (%p624) target = $region16
      $region15: #{tpu_custom_call.1} parent=11 // pred_region
        _
      $region16: #{tpu_custom_call.1} parent=11 // pred_fallthru
        _
      // Predicated region
      $region17: #{tpu_custom_call.1} parent=11 // pred_check
        %p627 = pneg %p100
      $region18: #{tpu_custom_call.1} parent=11 // pred_check_branch
        %629 = sbr.rel (%p627) target = $region20
      $region19: #{tpu_custom_call.1} parent=11 // pred_region
        _
      $region20: #{tpu_custom_call.1} parent=11 // pred_fallthru
        _
      // Predicated region
      $region21: #{tpu_custom_call.1} parent=11 // pred_check
        %p630 = pneg %p121
      $region22: #{tpu_custom_call.1} parent=11 // pred_check_branch
        %632 = sbr.rel (%p630) target = $region24
      $region23: #{tpu_custom_call.1} parent=11 // pred_region
        _
      $region24: #{tpu_custom_call.1} parent=11 // pred_fallthru
        _
      // Predicated region
      $region25: #{tpu_custom_call.1} parent=11 // pred_check
        %p633 = pneg %p142
      $region26: #{tpu_custom_call.1} parent=11 // pred_check_branch
        %635 = sbr.rel (%p633) target = $region28
      $region27: #{tpu_custom_call.1} parent=11 // pred_region
        _
      $region28: #{tpu_custom_call.1} parent=11 // pred_fallthru
        _
      // Predicated region
      $region29: #{tpu_custom_call.1} parent=11 // pred_check
        %p636 = pneg %p163
      $region30: #{tpu_custom_call.1} parent=11 // pred_check_branch
        %638 = sbr.rel (%p636) target = $region32
      $region31: #{tpu_custom_call.1} parent=11 // pred_region
        _
      $region32: #{tpu_custom_call.1} parent=11 // pred_fallthru
        _
      // Predicated region
      $region33: #{tpu_custom_call.1} parent=11 // pred_check
        %p639 = pneg %p184
      $region34: #{tpu_custom_call.1} parent=11 // pred_check_branch
        %641 = sbr.rel (%p639) target = $region36
      $region35: #{tpu_custom_call.1} parent=11 // pred_region
        _
      $region36: #{tpu_custom_call.1} parent=11 // pred_fallthru
        _
      // Predicated region
      $region37: #{tpu_custom_call.1} parent=11 // pred_check
        %p642 = pneg %p205
      $region38: #{tpu_custom_call.1} parent=11 // pred_check_branch
        %644 = sbr.rel (%p642) target = $region40
      $region39: #{tpu_custom_call.1} parent=11 // pred_region
        _
      $region40: #{tpu_custom_call.1} parent=11 // pred_fallthru
        _
      // Predicated region
      $region41: #{tpu_custom_call.1} parent=11 // pred_check
        %p645 = pneg %p226
      $region42: #{tpu_custom_call.1} parent=11 // pred_check_branch
        %647 = sbr.rel (%p645) target = $region44
      $region43: #{tpu_custom_call.1} parent=11 // pred_region
        _
      $region44: #{tpu_custom_call.1} parent=11 // pred_fallthru
        _
      // Predicated region
      $region45: #{tpu_custom_call.1} parent=11 // pred_check
        %p648 = pneg %p247
      $region46: #{tpu_custom_call.1} parent=11 // pred_check_branch
        %650 = sbr.rel (%p648) target = $region48
      $region47: #{tpu_custom_call.1} parent=11 // pred_region
        _
      $region48: #{tpu_custom_call.1} parent=11 // pred_fallthru
        _
      // Predicated region
      $region49: #{tpu_custom_call.1} parent=11 // pred_check
        %p651 = pneg %p268
      $region50: #{tpu_custom_call.1} parent=11 // pred_check_branch
        %653 = sbr.rel (%p651) target = $region52
      $region51: #{tpu_custom_call.1} parent=11 // pred_region
        _
      $region52: #{tpu_custom_call.1} parent=11 // pred_fallthru
        _
      // Predicated region
      $region53: #{tpu_custom_call.1} parent=11 // pred_check
        %p654 = pneg %p289
      $region54: #{tpu_custom_call.1} parent=11 // pred_check_branch
        %656 = sbr.rel (%p654) target = $region56
      $region55: #{tpu_custom_call.1} parent=11 // pred_region
        _
      $region56: #{tpu_custom_call.1} parent=11 // pred_fallthru
        _
      // Predicated region
      $region57: #{tpu_custom_call.1} parent=11 // pred_check
        %p657 = pneg %p310
      $region58: #{tpu_custom_call.1} parent=11 // pred_check_branch
        %659 = sbr.rel (%p657) target = $region60
      $region59: #{tpu_custom_call.1} parent=11 // pred_region
        _
      $region60: #{tpu_custom_call.1} parent=11 // pred_fallthru
        _
      // Predicated region
      $region61: #{tpu_custom_call.1} parent=11 // pred_check
        %p660 = pneg %p331
      $region62: #{tpu_custom_call.1} parent=11 // pred_check_branch
        %662 = sbr.rel (%p660) target = $region64
      $region63: #{tpu_custom_call.1} parent=11 // pred_region
        _
      $region64: #{tpu_custom_call.1} parent=11 // pred_fallthru
        _
      // Predicated region
      $region65: #{tpu_custom_call.1} parent=11 // pred_check
        %p663 = pneg %p352
      $region66: #{tpu_custom_call.1} parent=11 // pred_check_branch
        %665 = sbr.rel (%p663) target = $region68
      $region67: #{tpu_custom_call.1} parent=11 // pred_region
        _
      $region68: #{tpu_custom_call.1} parent=11 // pred_fallthru
        _
      // Predicated region
      $region69: #{tpu_custom_call.1} parent=11 // pred_check
        %p666 = pneg %p373
      $region70: #{tpu_custom_call.1} parent=11 // pred_check_branch
        %668 = sbr.rel (%p666) target = $region72
      $region71: #{tpu_custom_call.1} parent=11 // pred_region
        _
      $region72: #{tpu_custom_call.1} parent=11 // pred_fallthru
        _
      // Predicated region
      $region73: #{tpu_custom_call.1} parent=11 // pred_check
        %p669 = pneg %p394
      $region74: #{tpu_custom_call.1} parent=11 // pred_check_branch
        %671 = sbr.rel (%p669) target = $region76
      $region75: #{tpu_custom_call.1} parent=11 // pred_region
        _
      $region76: #{tpu_custom_call.1} parent=11 // pred_fallthru
        _
      // Predicated region
      $region77: #{tpu_custom_call.1} parent=11 // pred_check
        %p672 = pneg %p415
      $region78: #{tpu_custom_call.1} parent=11 // pred_check_branch
        %674 = sbr.rel (%p672) target = $region80
      $region79: #{tpu_custom_call.1} parent=11 // pred_region
        _
      $region80: #{tpu_custom_call.1} parent=11 // pred_fallthru
        _
      // Predicated region
      $region81: #{tpu_custom_call.1} parent=11 // pred_check
        %p675 = pneg %p436
      $region82: #{tpu_custom_call.1} parent=11 // pred_check_branch
        %677 = sbr.rel (%p675) target = $region84
      $region83: #{tpu_custom_call.1} parent=11 // pred_region
        _
      $region84: #{tpu_custom_call.1} parent=11 // pred_fallthru
        _
      // Predicated region
      $region85: #{tpu_custom_call.1} parent=11 // pred_check
        %p678 = pneg %p457
      $region86: #{tpu_custom_call.1} parent=11 // pred_check_branch
        %680 = sbr.rel (%p678) target = $region88
      $region87: #{tpu_custom_call.1} parent=11 // pred_region
        _
      $region88: #{tpu_custom_call.1} parent=11 // pred_fallthru
        _
      // Predicated region
      $region89: #{tpu_custom_call.1} parent=11 // pred_check
        %p681 = pneg %p478
      $region90: #{tpu_custom_call.1} parent=11 // pred_check_branch
        %683 = sbr.rel (%p681) target = $region92
      $region91: #{tpu_custom_call.1} parent=11 // pred_region
        _
      $region92: #{tpu_custom_call.1} parent=11 // pred_fallthru
        _
      // Predicated region
      $region93: #{tpu_custom_call.1} parent=11 // pred_check
        %p684 = pneg %p499
      $region94: #{tpu_custom_call.1} parent=11 // pred_check_branch
        %686 = sbr.rel (%p684) target = $region96
      $region95: #{tpu_custom_call.1} parent=11 // pred_region
        _
      $region96: #{tpu_custom_call.1} parent=11 // pred_fallthru
        _
      // Predicated region
      $region97: #{tpu_custom_call.1} parent=11 // pred_check
        %p687 = pneg %p520
      $region98: #{tpu_custom_call.1} parent=11 // pred_check_branch
        %689 = sbr.rel (%p687) target = $region100
      $region99: #{tpu_custom_call.1} parent=11 // pred_region
        _
      $region100: #{tpu_custom_call.1} parent=11 // pred_fallthru
        _
      // Predicated region
      $region101: #{tpu_custom_call.1} parent=11 // pred_check
        %p690 = pneg %p541
      $region102: #{tpu_custom_call.1} parent=11 // pred_check_branch
        %692 = sbr.rel (%p690) target = $region104
      $region103: #{tpu_custom_call.1} parent=11 // pred_region
        _
      $region104: #{tpu_custom_call.1} parent=11 // pred_fallthru
        _
      // Predicated region
      $region105: #{tpu_custom_call.1} parent=11 // pred_check
        %p693 = pneg %p562
      $region106: #{tpu_custom_call.1} parent=11 // pred_check_branch
        %695 = sbr.rel (%p693) target = $region108
      $region107: #{tpu_custom_call.1} parent=11 // pred_region
        _
      $region108: #{tpu_custom_call.1} parent=11 // pred_fallthru
        _
      // Predicated region
      $region109: #{tpu_custom_call.1} parent=11 // pred_check
        %p696 = pneg %p583
      $region110: #{tpu_custom_call.1} parent=11 // pred_check_branch
        %698 = sbr.rel (%p696) target = $region112
      $region111: #{tpu_custom_call.1} parent=11 // pred_region
        _
      $region112: #{tpu_custom_call.1} parent=11 // pred_fallthru
        _
    $region12: #{tpu_custom_call.1} parent=5 // pred_fallthru
      _
    %p699 = scmp.lt.s32.totalorder %s32, 2
    // Predicated region
    $region113: #{tpu_custom_call.1} parent=5 // pred_check
      %p700 = pneg %p699
    $region114: #{tpu_custom_call.1} parent=5 // pred_check_branch
      %702 = sbr.rel (%p700) target = $region116
    $region115: #{tpu_custom_call.1} parent=5 // pred_region
      // Predicated region
      $region117: #{tpu_custom_call.1} parent=115 // pred_check
        %p703 = pneg %p52
      $region118: #{tpu_custom_call.1} parent=115 // pred_check_branch
        %705 = sbr.rel (%p703) target = $region120
      $region119: #{tpu_custom_call.1} parent=115 // pred_region
        %p706 = scmp.lt.s32.totalorder %s32, 1
        %s707 = scalar_select %p706, %s32, 1
        %s708 = smul.addr %s707, 3
        %s709 = smul.addr %s708, 8
        %s710 = scalar_lea.vmem %s0, %s709
      $region120: #{tpu_custom_call.1} parent=115 // pred_fallthru
        _
    $region116: #{tpu_custom_call.1} parent=5 // pred_fallthru
      _
    %p711 = scmp.le.s32.totalorder 1, %s32
    %p712 = scmp.lt.s32.totalorder %s32, 3
    %p713 = pnand %p711, %p712
    %p714 = pneg %p713
    // Predicated region
    $region121: #{tpu_custom_call.1} parent=5 // pred_check
      _
    $region122: #{tpu_custom_call.1} parent=5 // pred_check_branch
      %716 = sbr.rel (%p713) target = $region124
    $region123: #{tpu_custom_call.1} parent=5 // pred_region
      %s717 = ssub.s32 %s32, 1
      %p718 = scmp.lt.s32.totalorder %s37, 1
      %s719 = scalar_select %p718, %s37, 1
      %s720 = smul.addr %s719, 3
      %s721 = smul.addr %s720, 8
      %s722 = scalar_lea.vmem %s0, %s721
      %p723 = pneg %p58
      %p724 = pneg %p55
      %p725 = pneg %p79
      %p726 = pneg %p76
      %p727 = pneg %p100
      %p728 = pneg %p97
      %p729 = pneg %p121
      %p730 = pneg %p118
      %p731 = pneg %p142
      %p732 = pneg %p139
      %p733 = pneg %p163
      %p734 = pneg %p160
      %p735 = pneg %p184
      %p736 = pneg %p181
      %p737 = pneg %p205
      %p738 = pneg %p202
      %p739 = pneg %p226
      %p740 = pneg %p223
      %p741 = pneg %p247
      %p742 = pneg %p244
      %p743 = pneg %p268
      %p744 = pneg %p265
      %p745 = pneg %p289
      %p746 = pneg %p286
      %p747 = pneg %p310
      %p748 = pneg %p307
      %p749 = pneg %p331
      %p750 = pneg %p328
      %p751 = pneg %p352
      %p752 = pneg %p349
      %p753 = pneg %p373
      %p754 = pneg %p370
      %p755 = pneg %p394
      %p756 = pneg %p391
      %p757 = pneg %p415
      %p758 = pneg %p412
      %p759 = pneg %p436
      %p760 = pneg %p433
      %p761 = pneg %p457
      %p762 = pneg %p454
      %p763 = pneg %p478
      %p764 = pneg %p475
      %p765 = pneg %p499
      %p766 = pneg %p496
      %p767 = pneg %p520
      %p768 = pneg %p517
      %p769 = pneg %p541
      %p770 = pneg %p538
      %p771 = pneg %p562
      %p772 = pneg %p559
      %p773 = pneg %p583
      %p774 = pneg %p580
      %p775 = pneg %p609
      %p776 = pneg %p606
      %p777 = scmp.lt.s32.totalorder %s37, 1
      %s778 = scalar_select %p777, %s37, 1
      %s779 = smul.addr %s778, 3
      %s780 = smul.addr %s779, 8
      %s781 = scalar_lea.vmem %s26, %s780
      %p782 = scmp.lt.s32.totalorder %s37, 1
      %s783 = scalar_select %p782, %s37, 1
      %s784 = smul.addr %s783, 3
      %s785 = smul.addr %s784, 8
      %s786 = scalar_lea.vmem %s0, %s785
      %p787 = scmp.lt.s32.totalorder %s37, 1
      %s788 = scalar_select %p787, %s37, 1
      %s789 = smul.addr %s788, 3
      %s790 = smul.addr %s789, 8
      %s791 = scalar_lea.vmem %s26, %s790
      %v792 = vld [vmem:[%s786] sm:$0xff]
      %v793 = vld [vmem:[%s786 + $0x8] sm:$0xff]
      %v794 = vld [vmem:[%s786 + $0x10] sm:$0xf]
      %v795 = vld [vmem:[%s1] sm:$0xff]
      %v796 = vld [vmem:[%s1 + $0x8] sm:$0xff]
      %v797 = vld [vmem:[%s1 + $0x10] sm:$0xff]
      %vm798 = vcmask 97280
      %v800 = vsel %vm798, %v795, 0
      %v803 = vsel %vm798, %v796, 0
      %v806 = vsel %vm798, %v797, 0
      %vm808 = vcmask 1043456
      %v810 = vsel %vm808, %v793, 0
      %812 = vmatprep.subr.mxu0 0.0
      %813 = vmatpush1.msra.mxu0 %v792
      %814 = vmatprep.subr.mxu0 0.0
      %815 = vmatpush1.msra.mxu0 %v810
      %816 = vmatprep.subr.mxu0 0.0
      %817 = vmatpush1.msra.mxu0 0.0
      %818 = vmatprep.subr.mxu0 0.0
      %819 = vmatpush1.msra.mxu0 0.0
      %820 = vmatprep.subr.mxu0 0.0
      %821 = vmatpush1.msra.mxu0 0.0
      %822 = vmatprep.subr.mxu0 0.0
      %823 = vmatpush1.msra.mxu0 0.0
      %824 = vmatprep.subr.mxu0 0.0
      %825 = vmatpush1.msra.mxu0 0.0
      %826 = vmatprep.subr.mxu0 0.0
      %827 = vmatpush1.msra.mxu0 0.0
      %828 = vmatprep.subr.mxu0 0.0
      %829 = vmatpush1.msra.mxu0 0.0
      %830 = vmatprep.subr.mxu0 0.0
      %831 = vmatpush1.msra.mxu0 0.0
      %832 = vmatprep.subr.mxu0 0.0
      %833 = vmatpush1.msra.mxu0 0.0
      %834 = vmatprep.subr.mxu0 0.0
      %835 = vmatpush1.msra.mxu0 0.0
      %836 = vmatprep.subr.mxu0 0.0
      %837 = vmatpush1.msra.mxu0 0.0
      %838 = vmatprep.subr.mxu0 0.0
      %839 = vmatpush1.msra.mxu0 0.0
      %840 = vmatprep.subr.mxu0 0.0
      %841 = vmatpush1.msra.mxu0 0.0
      %842 = vmatprep.subr.mxu0 0.0
      %843 = vmatpush1.msra.mxu0 0.0
      %844 = vmatprep.subr.mxu0 0.0
      %845 = vmatpush1.msra.mxu0 0.0
      %846 = vmatprep.subr.mxu0 0.0
      %847 = vmatpush1.msra.mxu0 0.0
      %848 = vmatprep.subr.mxu0 0.0
      %849 = vmatpush1.msra.mxu0 0.0
      %850 = vmatprep.subr.mxu0 0.0
      %851 = vmatpush1.msra.mxu0 0.0
      %852 = vmatprep.subr.mxu0 0.0
      %853 = vmatpush1.msra.mxu0 0.0
      %854 = vmatprep.subr.mxu0 0.0
      %855 = vmatpush1.msra.mxu0 0.0
      %856 = vmatprep.subr.mxu0 0.0
      %857 = vmatpush1.msra.mxu0 0.0
      %858 = vmatprep.subr.mxu0 0.0
      %859 = vmatpush1.msra.mxu0 0.0
      %860 = vmatprep.subr.mxu0 0.0
      %861 = vmatpush1.msra.mxu0 0.0
      %862 = vmatprep.subr.mxu0 0.0
      %863 = vmatpush1.msra.mxu0 0.0
      %864 = vmatprep.subr.mxu0 0.0
      %865 = vmatpush1.msra.mxu0 0.0
      %866 = vmatprep.subr.mxu0 0.0
      %867 = vmatpush1.msra.mxu0 0.0
      %868 = vmatprep.subr.mxu0 0.0
      %869 = vmatpush1.msra.mxu0 0.0
      %870 = vmatprep.subr.mxu0 0.0
      %871 = vmatpush1.msra.mxu0 0.0
      %872 = vmatprep.subr.mxu0 0.0
      %873 = vmatpush1.msra.mxu0 0.0
      %874 = vmatprep.subr.mxu0 0.0
      %875 = vmatpush1.msra.mxu0 0.0
      %876 = vmatprep.mubr.f32.mxu0 0.0
      %877 = vmatmul.mubr.f32.gmra.mrb[0].mxu0 %v800
      %v878 = vpop.f32.mrb[0].mxu0
      %v879 = vadd.f32 0.0, %v878
      %v880 = vpop.f32.mrb[0].mxu0
      %881 = vmatprep.mubr.f32.mxu0 0.0
      %882 = vmatmul.mubr.f32.gmra.mrb[0].mxu0 %v803
      %v883 = vpop.f32.mrb[0].mxu0
      %v884 = vadd.f32 0.0, %v883
      %v885 = vpop.f32.mrb[0].mxu0
      %886 = vmatprep.mubr.f32.mxu0 0.0
      %887 = vmatmul.mubr.f32.gmra.mrb[0].mxu0 %v806
      %v888 = vpop.f32.mrb[0].mxu0
      %v889 = vadd.f32 0.0, %v888
      %v890 = vpop.f32.mrb[0].mxu0
      %891 = vdwg.mxu0
      %v892 = vmul.f32 %v879, 0.001
      %v893 = vmul.f32 %v884, 0.001
      %v894 = vmul.f32 %v889, 0.001
      %v895 = vld [vmem:[%s2] sm:$0xff]
      %v896 = vld [vmem:[%s2 + $0x8] sm:$0xff]
      %v897 = vld [vmem:[%s2 + $0x10] sm:$0xf]
      %vm899 = vcmask 1045504
      %v900 = vrot.slane %v793, 2
      %v901 = vrot.slane %v794, 2
      %v902 = vsel %vm899, %v900, %v901
      %vm904 = vcmask 80896
      %v906 = vsel %vm904, %v895, 0
      %v909 = vsel %vm904, %v896, 0
      %v912 = vsel %vm904, %v897, 0
      %vm914 = vcmask 1041408
      %v915 = vsel %vm914, %v901, 0
      %917 = vmatprep.subr.mxu0 0.0
      %918 = vmatpush1.msra.mxu0 %v902
      %919 = vmatprep.subr.mxu0 0.0
      %920 = vmatpush1.msra.mxu0 %v915
      %921 = vmatprep.subr.mxu0 0.0
      %922 = vmatpush1.msra.mxu0 0.0
      %923 = vmatprep.subr.mxu0 0.0
      %924 = vmatpush1.msra.mxu0 0.0
      %925 = vmatprep.subr.mxu0 0.0
      %926 = vmatpush1.msra.mxu0 0.0
      %927 = vmatprep.subr.mxu0 0.0
      %928 = vmatpush1.msra.mxu0 0.0
      %929 = vmatprep.subr.mxu0 0.0
      %930 = vmatpush1.msra.mxu0 0.0
      %931 = vmatprep.subr.mxu0 0.0
      %932 = vmatpush1.msra.mxu0 0.0
      %933 = vmatprep.subr.mxu0 0.0
      %934 = vmatpush1.msra.mxu0 0.0
      %935 = vmatprep.subr.mxu0 0.0
      %936 = vmatpush1.msra.mxu0 0.0
      %937 = vmatprep.subr.mxu0 0.0
      %938 = vmatpush1.msra.mxu0 0.0
      %939 = vmatprep.subr.mxu0 0.0
      %940 = vmatpush1.msra.mxu0 0.0
      %941 = vmatprep.subr.mxu0 0.0
      %942 = vmatpush1.msra.mxu0 0.0
      %943 = vmatprep.subr.mxu0 0.0
      %944 = vmatpush1.msra.mxu0 0.0
      %945 = vmatprep.subr.mxu0 0.0
      %946 = vmatpush1.msra.mxu0 0.0
      %947 = vmatprep.subr.mxu0 0.0
      %948 = vmatpush1.msra.mxu0 0.0
      %949 = vmatprep.subr.mxu0 0.0
      %950 = vmatpush1.msra.mxu0 0.0
      %951 = vmatprep.subr.mxu0 0.0
      %952 = vmatpush1.msra.mxu0 0.0
      %953 = vmatprep.subr.mxu0 0.0
      %954 = vmatpush1.msra.mxu0 0.0
      %955 = vmatprep.subr.mxu0 0.0
      %956 = vmatpush1.msra.mxu0 0.0
      %957 = vmatprep.subr.mxu0 0.0
      %958 = vmatpush1.msra.mxu0 0.0
      %959 = vmatprep.subr.mxu0 0.0
      %960 = vmatpush1.msra.mxu0 0.0
      %961 = vmatprep.subr.mxu0 0.0
      %962 = vmatpush1.msra.mxu0 0.0
      %963 = vmatprep.subr.mxu0 0.0
      %964 = vmatpush1.msra.mxu0 0.0
      %965 = vmatprep.subr.mxu0 0.0
      %966 = vmatpush1.msra.mxu0 0.0
      %967 = vmatprep.subr.mxu0 0.0
      %968 = vmatpush1.msra.mxu0 0.0
      %969 = vmatprep.subr.mxu0 0.0
      %970 = vmatpush1.msra.mxu0 0.0
      %971 = vmatprep.subr.mxu0 0.0
      %972 = vmatpush1.msra.mxu0 0.0
      %973 = vmatprep.subr.mxu0 0.0
      %974 = vmatpush1.msra.mxu0 0.0
      %975 = vmatprep.subr.mxu0 0.0
      %976 = vmatpush1.msra.mxu0 0.0
      %977 = vmatprep.subr.mxu0 0.0
      %978 = vmatpush1.msra.mxu0 0.0
      %979 = vmatprep.subr.mxu0 0.0
      %980 = vmatpush1.msra.mxu0 0.0
      %981 = vmatprep.mubr.f32.mxu0 0.0
      %982 = vmatmul.mubr.f32.gmra.mrb[0].mxu0 %v906
      %v983 = vpop.f32.mrb[0].mxu0
      %v984 = vadd.f32 0.0, %v983
      %v985 = vpop.f32.mrb[0].mxu0
      %986 = vmatprep.mubr.f32.mxu0 0.0
      %987 = vmatmul.mubr.f32.gmra.mrb[0].mxu0 %v909
      %v988 = vpop.f32.mrb[0].mxu0
      %v989 = vadd.f32 0.0, %v988
      %v990 = vpop.f32.mrb[0].mxu0
      %991 = vmatprep.mubr.f32.mxu0 0.0
      %992 = vmatmul.mubr.f32.gmra.mrb[0].mxu0 %v912
      %v993 = vpop.f32.mrb[0].mxu0
      %v994 = vadd.f32 0.0, %v993
      %v995 = vpop.f32.mrb[0].mxu0
      %996 = vdwg.mxu0
      %v997 = vmul.f32 %v984, 0.001
      %v998 = vmul.f32 %v989, 0.001
      %v999 = vmul.f32 %v994, 0.001
      %v1000 = vld [vmem:[%s5] sm:$0xff]
      %v1001 = vld [vmem:[%s5 + $0x8] sm:$0xff]
      %v1002 = vld [vmem:[%s5 + $0x10] sm:$0xff]
      %v1003 = vld [vmem:[%s5 + $0x18] sm:$0xff]
      %v1004 = vld [vmem:[%s5 + $0x20] sm:$0xff]
      %v1005 = vld [vmem:[%s5 + $0x28] sm:$0xff]
      %v1006 = vld [vmem:[%s5 + $0x30] sm:$0xff]
      %v1007 = vld [vmem:[%s5 + $0x38] sm:$0xff]
      %v1008 = vld [vmem:[%s5 + $0x40] sm:$0xff]
      %v1009 = vld [vmem:[%s5 + $0x48] sm:$0xff]
      %v1010 = vld [vmem:[%s5 + $0x50] sm:$0xff]
      %v1011 = vld [vmem:[%s5 + $0x58] sm:$0xff]
      %v1012 = vld [vmem:[%s6] sm:$0xff]
      %v1013 = vld [vmem:[%s6 + $0x8] sm:$0x3]
      %v1014 = vld [vmem:[%s7] sm:$0xff]
      %v1015 = vld [vmem:[%s7 + $0x8] sm:$0xff]
      %v1016 = vld [vmem:[%s7 + $0x10] sm:$0xff]
      %v1017 = vld [vmem:[%s7 + $0x18] sm:$0xff]
      %v1018 = vld [vmem:[%s8] sm:$0x1]
      %v1019 = vld [vmem:[%s9] sm:$0xff]
      %v1020 = vld [vmem:[%s9 + $0x8] sm:$0xff]
      %v1021 = vld [vmem:[%s9 + $0x10] sm:$0xff]
      %v1022 = vld [vmem:[%s9 + $0x18] sm:$0xff]
      %v1023 = vld [vmem:[%s10] sm:$0x1]
      %vm1026 = vcmask 1042432
      %v1027 = vrot.slane %v893, 5
      %v1028 = vrot.slane %v894, 5
      %v1029 = vsel %vm1026, %v1027, %v1028
      %vm1032 = vcmask 1046528
      %v1033 = vsel %vm1032, %v892, %v1027
      %v1035 = vrot.slane %v892, 1
      %v1037 = vrot.slane %v893, 6
      %v1038 = vrot.slane %v894, 6
      %v1039 = vsel %vm914, %v1037, %v1038
      %v1041 = vsel %vm1032, %v1035, %v1037
      %v1042 = vrot.slane %v892, 2
      %v1043 = vrot.slane %v893, 2
      %v1044 = vsel %vm899, %v1042, %v1043
      %vm1046 = vcmask 1040384
      %v1047 = vrot.slane %v893, 7
      %v1048 = vrot.slane %v894, 7
      %v1049 = vsel %vm1046, %v1047, %v1048
      %v1051 = vsel %vm1032, %v1044, %v1047
      %vm1052 = vcmask 1044480
      %v1053 = vrot.slane %v892, 3
      %v1054 = vrot.slane %v893, 3
      %v1055 = vsel %vm1052, %v1053, %v1054
      %v1057 = vsel %vm1032, %v1055, %v893
      %v1058 = vrot.slane %v892, 4
      %v1059 = vrot.slane %v893, 4
      %v1060 = vsel %vm808, %v1058, %v1059
      %v1062 = vrot.slane %v894, 1
      %v1064 = vsel %vm1032, %v1060, %v1062
      %v1065 = vrot.slane %v892, 5
      %v1066 = vsel %vm1026, %v1065, %v1027
      %v1068 = vrot.slane %v894, 2
      %v1070 = vsel %vm1032, %v1066, %v1068
      %1072 = vrot.lane.b32.xlu0 %v1041, 16
      %v1073 = vpop.permute.xlu0 %1072
      %1074 = vrot.lane.b32.xlu0 %v1039, 16
      %v1075 = vpop.permute.xlu0 %1074
      %1079 = vrot.lane.b32.xlu0 %v1051, 32
      %v1080 = vpop.permute.xlu0 %1079
      %1081 = vrot.lane.b32.xlu0 %v1049, 32
      %v1082 = vpop.permute.xlu0 %1081
      %1086 = vrot.lane.b32.xlu0 %v1057, 48
      %v1087 = vpop.permute.xlu0 %1086
      %1088 = vrot.lane.b32.xlu0 %v894, 48
      %v1089 = vpop.permute.xlu0 %1088
      %1093 = vrot.lane.b32.xlu0 %v1064, 64
      %v1094 = vpop.permute.xlu0 %1093
      %1095 = vrot.lane.b32.xlu0 %v1062, 64
      %v1096 = vpop.permute.xlu0 %1095
      %1100 = vrot.lane.b32.xlu0 %v1070, 80
      %v1101 = vpop.permute.xlu0 %1100
      %1102 = vrot.lane.b32.xlu0 %v1068, 80
      %v1103 = vpop.permute.xlu0 %1102
      %vm1106 = vcmask 130048
      %v1107 = vsel %vm1106, %v1033, %v1073
      %v1108 = vsel %vm1106, %v1029, %v1075
      %vm1109 = vcmask 261120
      %v1110 = vsel %vm1109, %v1107, %v1080
      %v1111 = vsel %vm1109, %v1108, %v1082
      %vm1112 = vcmask 392192
      %v1113 = vsel %vm1112, %v1110, %v1087
      %v1114 = vsel %vm1112, %v1111, %v1089
      %vm1115 = vcmask 523264
      %v1116 = vsel %vm1115, %v1113, %v1094
      %v1117 = vsel %vm1115, %v1114, %v1096
      %vm1118 = vcmask 654336
      %v1119 = vsel %vm1118, %v1116, %v1101
      %v1120 = vsel %vm1118, %v1117, %v1103
      %vm1121 = vcmask 785408
      %v1123 = vsel %vm1121, %v1119, 0
      %v1126 = vsel %vm1121, %v1120, 0
      %1128 = vmatprep.subr.mxu0 0.0
      %1129 = vmatpush1.msra.mxu0 %v1000
      %1130 = vmatprep.subr.mxu0 0.0
      %1131 = vmatpush1.msra.mxu0 %v1001
      %1132 = vmatprep.subr.mxu0 0.0
      %1133 = vmatpush1.msra.mxu0 %v1002
      %1134 = vmatprep.subr.mxu0 0.0
      %1135 = vmatpush1.msra.mxu0 %v1003
      %1136 = vmatprep.subr.mxu0 0.0
      %1137 = vmatpush1.msra.mxu0 %v1004
      %1138 = vmatprep.subr.mxu0 0.0
      %1139 = vmatpush1.msra.mxu0 %v1005
      %1140 = vmatprep.subr.mxu0 0.0
      %1141 = vmatpush1.msra.mxu0 %v1006
      %1142 = vmatprep.subr.mxu0 0.0
      %1143 = vmatpush1.msra.mxu0 %v1007
      %1144 = vmatprep.subr.mxu0 0.0
      %1145 = vmatpush1.msra.mxu0 %v1008
      %1146 = vmatprep.subr.mxu0 0.0
      %1147 = vmatpush1.msra.mxu0 %v1009
      %1148 = vmatprep.subr.mxu0 0.0
      %1149 = vmatpush1.msra.mxu0 %v1010
      %1150 = vmatprep.subr.mxu0 0.0
      %1151 = vmatpush1.msra.mxu0 %v1011
      %1152 = vmatprep.subr.mxu0 0.0
      %1153 = vmatpush1.msra.mxu0 0.0
      %1154 = vmatprep.subr.mxu0 0.0
      %1155 = vmatpush1.msra.mxu0 0.0
      %1156 = vmatprep.subr.mxu0 0.0
      %1157 = vmatpush1.msra.mxu0 0.0
      %1158 = vmatprep.subr.mxu0 0.0
      %1159 = vmatpush1.msra.mxu0 0.0
      %1160 = vmatprep.subr.mxu0 0.0
      %1161 = vmatpush1.msra.mxu0 0.0
      %1162 = vmatprep.subr.mxu0 0.0
      %1163 = vmatpush1.msra.mxu0 0.0
      %1164 = vmatprep.subr.mxu0 0.0
      %1165 = vmatpush1.msra.mxu0 0.0
      %1166 = vmatprep.subr.mxu0 0.0
      %1167 = vmatpush1.msra.mxu0 0.0
      %1168 = vmatprep.subr.mxu0 0.0
      %1169 = vmatpush1.msra.mxu0 0.0
      %1170 = vmatprep.subr.mxu0 0.0
      %1171 = vmatpush1.msra.mxu0 0.0
      %1172 = vmatprep.subr.mxu0 0.0
      %1173 = vmatpush1.msra.mxu0 0.0
      %1174 = vmatprep.subr.mxu0 0.0
      %1175 = vmatpush1.msra.mxu0 0.0
      %1176 = vmatprep.subr.mxu0 0.0
      %1177 = vmatpush1.msra.mxu0 0.0
      %1178 = vmatprep.subr.mxu0 0.0
      %1179 = vmatpush1.msra.mxu0 0.0
      %1180 = vmatprep.subr.mxu0 0.0
      %1181 = vmatpush1.msra.mxu0 0.0
      %1182 = vmatprep.subr.mxu0 0.0
      %1183 = vmatpush1.msra.mxu0 0.0
      %1184 = vmatprep.subr.mxu0 0.0
      %1185 = vmatpush1.msra.mxu0 0.0
      %1186 = vmatprep.subr.mxu0 0.0
      %1187 = vmatpush1.msra.mxu0 0.0
      %1188 = vmatprep.subr.mxu0 0.0
      %1189 = vmatpush1.msra.mxu0 0.0
      %1190 = vmatprep.subr.mxu0 0.0
      %1191 = vmatpush1.msra.mxu0 0.0
      %1192 = vmatprep.mubr.f32.mxu0 0.0
      %1193 = vmatmul.mubr.f32.gmra.mrb[0].mxu0 %v1123
      %v1194 = vpop.f32.mrb[0].mxu0
      %v1195 = vadd.f32 0.0, %v1194
      %v1196 = vpop.f32.mrb[0].mxu0
      %1197 = vmatprep.mubr.f32.mxu0 0.0
      %1198 = vmatmul.mubr.f32.gmra.mrb[0].mxu0 %v1126
      %v1199 = vpop.f32.mrb[0].mxu0
      %v1200 = vadd.f32 0.0, %v1199
      %v1201 = vpop.f32.mrb[0].mxu0
      %1202 = vdwg.mxu0
      %v1203 = vmax.f32 %v1195, 0.0
      %v1204 = vmax.f32 %v1200, 0.0
      %v1207 = vrot.slane %v1203, 4
      %v1208 = vrot.slane %v1204, 4
      %v1209 = vsel %vm808, %v1207, %v1208
      %v1211 = vsel %vm1026, %v1203, %v1209
      %v1212 = vrot.slane %v1203, 1
      %v1214 = vrot.slane %v1204, 5
      %v1216 = vsel %vm1026, %v1212, %v1214
      %v1217 = vrot.slane %v1203, 2
      %v1219 = vrot.slane %v1204, 6
      %v1221 = vsel %vm1026, %v1217, %v1219
      %v1222 = vrot.slane %v1203, 3
      %v1224 = vrot.slane %v1204, 7
      %v1226 = vsel %vm1026, %v1222, %v1224
      %v1228 = vsel %vm1026, %v1207, %v1204
      %1230 = vrot.lane.b32.xlu0 %v1216, 2
      %v1231 = vpop.permute.xlu0 %1230
      %1234 = vrot.lane.b32.xlu0 %v1221, 4
      %v1235 = vpop.permute.xlu0 %1234
      %1238 = vrot.lane.b32.xlu0 %v1226, 6
      %v1239 = vpop.permute.xlu0 %1238
      %1242 = vrot.lane.b32.xlu0 %v1228, 8
      %v1243 = vpop.permute.xlu0 %1242
      %vm1245 = vcmask 15360
      %v1246 = vsel %vm1245, %v1211, %v1231
      %vm1247 = vcmask 31744
      %v1248 = vsel %vm1247, %v1246, %v1235
      %vm1249 = vcmask 48128
      %v1250 = vsel %vm1249, %v1248, %v1239
      %vm1251 = vcmask 64512
      %v1252 = vsel %vm1251, %v1250, %v1243
      %v1254 = vsel %vm904, %v1252, 0
      %v1257 = vsel %vm914, %v1013, 0
      %1259 = vmatprep.subr.mxu0 0.0
      %1260 = vmatpush1.msra.mxu0 %v1012
      %1261 = vmatprep.subr.mxu0 0.0
      %1262 = vmatpush1.msra.mxu0 %v1257
      %1263 = vmatprep.subr.mxu0 0.0
      %1264 = vmatpush1.msra.mxu0 0.0
      %1265 = vmatprep.subr.mxu0 0.0
      %1266 = vmatpush1.msra.mxu0 0.0
      %1267 = vmatprep.subr.mxu0 0.0
      %1268 = vmatpush1.msra.mxu0 0.0
      %1269 = vmatprep.subr.mxu0 0.0
      %1270 = vmatpush1.msra.mxu0 0.0
      %1271 = vmatprep.subr.mxu0 0.0
      %1272 = vmatpush1.msra.mxu0 0.0
      %1273 = vmatprep.subr.mxu0 0.0
      %1274 = vmatpush1.msra.mxu0 0.0
      %1275 = vmatprep.subr.mxu0 0.0
      %1276 = vmatpush1.msra.mxu0 0.0
      %1277 = vmatprep.subr.mxu0 0.0
      %1278 = vmatpush1.msra.mxu0 0.0
      %1279 = vmatprep.subr.mxu0 0.0
      %1280 = vmatpush1.msra.mxu0 0.0
      %1281 = vmatprep.subr.mxu0 0.0
      %1282 = vmatpush1.msra.mxu0 0.0
      %1283 = vmatprep.subr.mxu0 0.0
      %1284 = vmatpush1.msra.mxu0 0.0
      %1285 = vmatprep.subr.mxu0 0.0
      %1286 = vmatpush1.msra.mxu0 0.0
      %1287 = vmatprep.subr.mxu0 0.0
      %1288 = vmatpush1.msra.mxu0 0.0
      %1289 = vmatprep.subr.mxu0 0.0
      %1290 = vmatpush1.msra.mxu0 0.0
      %1291 = vmatprep.subr.mxu0 0.0
      %1292 = vmatpush1.msra.mxu0 0.0
      %1293 = vmatprep.subr.mxu0 0.0
      %1294 = vmatpush1.msra.mxu0 0.0
      %1295 = vmatprep.subr.mxu0 0.0
      %1296 = vmatpush1.msra.mxu0 0.0
      %1297 = vmatprep.subr.mxu0 0.0
      %1298 = vmatpush1.msra.mxu0 0.0
      %1299 = vmatprep.subr.mxu0 0.0
      %1300 = vmatpush1.msra.mxu0 0.0
      %1301 = vmatprep.subr.mxu0 0.0
      %1302 = vmatpush1.msra.mxu0 0.0
      %1303 = vmatprep.subr.mxu0 0.0
      %1304 = vmatpush1.msra.mxu0 0.0
      %1305 = vmatprep.subr.mxu0 0.0
      %1306 = vmatpush1.msra.mxu0 0.0
      %1307 = vmatprep.subr.mxu0 0.0
      %1308 = vmatpush1.msra.mxu0 0.0
      %1309 = vmatprep.subr.mxu0 0.0
      %1310 = vmatpush1.msra.mxu0 0.0
      %1311 = vmatprep.subr.mxu0 0.0
      %1312 = vmatpush1.msra.mxu0 0.0
      %1313 = vmatprep.subr.mxu0 0.0
      %1314 = vmatpush1.msra.mxu0 0.0
      %1315 = vmatprep.subr.mxu0 0.0
      %1316 = vmatpush1.msra.mxu0 0.0
      %1317 = vmatprep.subr.mxu0 0.0
      %1318 = vmatpush1.msra.mxu0 0.0
      %1319 = vmatprep.subr.mxu0 0.0
      %1320 = vmatpush1.msra.mxu0 0.0
      %1321 = vmatprep.subr.mxu0 0.0
      %1322 = vmatpush1.msra.mxu0 0.0
      %1323 = vmatprep.mubr.f32.mxu0 0.0
      %1324 = vmatmul.mubr.f32.gmra.mrb[0].mxu0 %v1254
      %v1325 = vpop.f32.mrb[0].mxu0
      %v1326 = vadd.f32 0.0, %v1325
      %v1327 = vpop.f32.mrb[0].mxu0
      %1328 = vdwg.mxu0
      %v1329 = vmax.f32 %v1326, 0.0
      %v1331 = vlaneseq
      %v1332 = vshrl.u32 %v1331, 7
      %v1333 = vsub.s32 0, %v1332
      %v1334 = vrot.slane %v1018, %v1333
      %v1337 = vsel %vm1109, %v1329, 0
      %1339 = vmatprep.subr.mxu0 0.0
      %1340 = vmatpush1.msra.mxu0 %v1014
      %1341 = vmatprep.subr.mxu0 0.0
      %1342 = vmatpush1.msra.mxu0 %v1015
      %1343 = vmatprep.subr.mxu0 0.0
      %1344 = vmatpush1.msra.mxu0 %v1016
      %1345 = vmatprep.subr.mxu0 0.0
      %1346 = vmatpush1.msra.mxu0 %v1017
      %1347 = vmatprep.subr.mxu0 0.0
      %1348 = vmatpush1.msra.mxu0 0.0
      %1349 = vmatprep.subr.mxu0 0.0
      %1350 = vmatpush1.msra.mxu0 0.0
      %1351 = vmatprep.subr.mxu0 0.0
      %1352 = vmatpush1.msra.mxu0 0.0
      %1353 = vmatprep.subr.mxu0 0.0
      %1354 = vmatpush1.msra.mxu0 0.0
      %1355 = vmatprep.subr.mxu0 0.0
      %1356 = vmatpush1.msra.mxu0 0.0
      %1357 = vmatprep.subr.mxu0 0.0
      %1358 = vmatpush1.msra.mxu0 0.0
      %1359 = vmatprep.subr.mxu0 0.0
      %1360 = vmatpush1.msra.mxu0 0.0
      %1361 = vmatprep.subr.mxu0 0.0
      %1362 = vmatpush1.msra.mxu0 0.0
      %1363 = vmatprep.subr.mxu0 0.0
      %1364 = vmatpush1.msra.mxu0 0.0
      %1365 = vmatprep.subr.mxu0 0.0
      %1366 = vmatpush1.msra.mxu0 0.0
      %1367 = vmatprep.subr.mxu0 0.0
      %1368 = vmatpush1.msra.mxu0 0.0
      %1369 = vmatprep.subr.mxu0 0.0
      %1370 = vmatpush1.msra.mxu0 0.0
      %1371 = vmatprep.subr.mxu0 0.0
      %1372 = vmatpush1.msra.mxu0 0.0
      %1373 = vmatprep.subr.mxu0 0.0
      %1374 = vmatpush1.msra.mxu0 0.0
      %1375 = vmatprep.subr.mxu0 0.0
      %1376 = vmatpush1.msra.mxu0 0.0
      %1377 = vmatprep.subr.mxu0 0.0
      %1378 = vmatpush1.msra.mxu0 0.0
      %1379 = vmatprep.subr.mxu0 0.0
      %1380 = vmatpush1.msra.mxu0 0.0
      %1381 = vmatprep.subr.mxu0 0.0
      %1382 = vmatpush1.msra.mxu0 0.0
      %1383 = vmatprep.subr.mxu0 0.0
      %1384 = vmatpush1.msra.mxu0 0.0
      %1385 = vmatprep.subr.mxu0 0.0
      %1386 = vmatpush1.msra.mxu0 0.0
      %1387 = vmatprep.subr.mxu0 0.0
      %1388 = vmatpush1.msra.mxu0 0.0
      %1389 = vmatprep.subr.mxu0 0.0
      %1390 = vmatpush1.msra.mxu0 0.0
      %1391 = vmatprep.subr.mxu0 0.0
      %1392 = vmatpush1.msra.mxu0 0.0
      %1393 = vmatprep.subr.mxu0 0.0
      %1394 = vmatpush1.msra.mxu0 0.0
      %1395 = vmatprep.subr.mxu0 0.0
      %1396 = vmatpush1.msra.mxu0 0.0
      %1397 = vmatprep.subr.mxu0 0.0
      %1398 = vmatpush1.msra.mxu0 0.0
      %1399 = vmatprep.subr.mxu0 0.0
      %1400 = vmatpush1.msra.mxu0 0.0
      %1401 = vmatprep.subr.mxu0 0.0
      %1402 = vmatpush1.msra.mxu0 0.0
      %1403 = vmatprep.mubr.f32.mxu0 0.0
      %1404 = vmatmul.mubr.f32.gmra.mrb[0].mxu0 %v1337
      %v1405 = vpop.f32.mrb[0].mxu0
      %v1406 = vadd.f32 %v1334, %v1405
      %v1407 = vpop.f32.mrb[0].mxu0
      %1408 = vdwg.mxu0
      %vm1409 = vcmp.ge.f32.partialorder %v1406, 0.0
      %v1410 = vmul.f32 %v1406, 0.01
      %v1411 = vsel %vm1409, %v1406, %v1410
      %v1413 = vlaneseq
      %v1414 = vshrl.u32 %v1413, 7
      %v1415 = vsub.s32 0, %v1414
      %v1416 = vrot.slane %v1023, %v1415
      %v1419 = vsel %vm1109, %v1411, 0
      %1421 = vmatprep.subr.mxu0 0.0
      %1422 = vmatpush1.msra.mxu0 %v1019
      %1423 = vmatprep.subr.mxu0 0.0
      %1424 = vmatpush1.msra.mxu0 %v1020
      %1425 = vmatprep.subr.mxu0 0.0
      %1426 = vmatpush1.msra.mxu0 %v1021
      %1427 = vmatprep.subr.mxu0 0.0
      %1428 = vmatpush1.msra.mxu0 %v1022
      %1429 = vmatprep.subr.mxu0 0.0
      %1430 = vmatpush1.msra.mxu0 0.0
      %1431 = vmatprep.subr.mxu0 0.0
      %1432 = vmatpush1.msra.mxu0 0.0
      %1433 = vmatprep.subr.mxu0 0.0
      %1434 = vmatpush1.msra.mxu0 0.0
      %1435 = vmatprep.subr.mxu0 0.0
      %1436 = vmatpush1.msra.mxu0 0.0
      %1437 = vmatprep.subr.mxu0 0.0
      %1438 = vmatpush1.msra.mxu0 0.0
      %1439 = vmatprep.subr.mxu0 0.0
      %1440 = vmatpush1.msra.mxu0 0.0
      %1441 = vmatprep.subr.mxu0 0.0
      %1442 = vmatpush1.msra.mxu0 0.0
      %1443 = vmatprep.subr.mxu0 0.0
      %1444 = vmatpush1.msra.mxu0 0.0
      %1445 = vmatprep.subr.mxu0 0.0
      %1446 = vmatpush1.msra.mxu0 0.0
      %1447 = vmatprep.subr.mxu0 0.0
      %1448 = vmatpush1.msra.mxu0 0.0
      %1449 = vmatprep.subr.mxu0 0.0
      %1450 = vmatpush1.msra.mxu0 0.0
      %1451 = vmatprep.subr.mxu0 0.0
      %1452 = vmatpush1.msra.mxu0 0.0
      %1453 = vmatprep.subr.mxu0 0.0
      %1454 = vmatpush1.msra.mxu0 0.0
      %1455 = vmatprep.subr.mxu0 0.0
      %1456 = vmatpush1.msra.mxu0 0.0
      %1457 = vmatprep.subr.mxu0 0.0
      %1458 = vmatpush1.msra.mxu0 0.0
      %1459 = vmatprep.subr.mxu0 0.0
      %1460 = vmatpush1.msra.mxu0 0.0
      %1461 = vmatprep.subr.mxu0 0.0
      %1462 = vmatpush1.msra.mxu0 0.0
      %1463 = vmatprep.subr.mxu0 0.0
      %1464 = vmatpush1.msra.mxu0 0.0
      %1465 = vmatprep.subr.mxu0 0.0
      %1466 = vmatpush1.msra.mxu0 0.0
      %1467 = vmatprep.subr.mxu0 0.0
      %1468 = vmatpush1.msra.mxu0 0.0
      %1469 = vmatprep.subr.mxu0 0.0
      %1470 = vmatpush1.msra.mxu0 0.0
      %1471 = vmatprep.subr.mxu0 0.0
      %1472 = vmatpush1.msra.mxu0 0.0
      %1473 = vmatprep.subr.mxu0 0.0
      %1474 = vmatpush1.msra.mxu0 0.0
      %1475 = vmatprep.subr.mxu0 0.0
      %1476 = vmatpush1.msra.mxu0 0.0
      %1477 = vmatprep.subr.mxu0 0.0
      %1478 = vmatpush1.msra.mxu0 0.0
      %1479 = vmatprep.subr.mxu0 0.0
      %1480 = vmatpush1.msra.mxu0 0.0
      %1481 = vmatprep.subr.mxu0 0.0
      %1482 = vmatpush1.msra.mxu0 0.0
      %1483 = vmatprep.subr.mxu0 0.0
      %1484 = vmatpush1.msra.mxu0 0.0
      %1485 = vmatprep.mubr.f32.mxu0 0.0
      %1486 = vmatmul.mubr.f32.gmra.mrb[0].mxu0 %v1419
      %v1487 = vpop.f32.mrb[0].mxu0
      %v1488 = vadd.f32 %v1416, %v1487
      %v1489 = vpop.f32.mrb[0].mxu0
      %1490 = vdwg.mxu0
      %vm1491 = vcmp.ge.f32.partialorder %v1488, 0.0
      %v1492 = vmul.f32 %v1488, 0.01
      %v1493 = vsel %vm1491, %v1488, %v1492
      %v1494 = vadd.f32 %v1493, %v1329
      %v1495 = vld [vmem:[%s11] sm:$0xff]
      %v1496 = vld [vmem:[%s11 + $0x8] sm:$0xff]
      %v1497 = vld [vmem:[%s11 + $0x10] sm:$0xff]
      %v1498 = vld [vmem:[%s11 + $0x18] sm:$0xff]
      %v1499 = vld [vmem:[%s11 + $0x20] sm:$0xff]
      %v1500 = vld [vmem:[%s11 + $0x28] sm:$0xff]
      %v1501 = vld [vmem:[%s11 + $0x30] sm:$0xff]
      %v1502 = vld [vmem:[%s11 + $0x38] sm:$0xff]
      %v1503 = vld [vmem:[%s11 + $0x40] sm:$0xff]
      %v1504 = vld [vmem:[%s11 + $0x48] sm:$0xff]
      %v1505 = vld [vmem:[%s11 + $0x50] sm:$0xff]
      %v1506 = vld [vmem:[%s11 + $0x58] sm:$0xff]
      %v1507 = vld [vmem:[%s12] sm:$0xff]
      %v1508 = vld [vmem:[%s12 + $0x8] sm:$0x3]
      %v1509 = vld [vmem:[%s13] sm:$0xff]
      %v1510 = vld [vmem:[%s13 + $0x8] sm:$0xff]
      %v1511 = vld [vmem:[%s13 + $0x10] sm:$0xff]
      %v1512 = vld [vmem:[%s13 + $0x18] sm:$0xff]
      %v1513 = vld [vmem:[%s14] sm:$0x1]
      %v1514 = vld [vmem:[%s15] sm:$0xff]
      %v1515 = vld [vmem:[%s15 + $0x8] sm:$0xff]
      %v1516 = vld [vmem:[%s15 + $0x10] sm:$0xff]
      %v1517 = vld [vmem:[%s15 + $0x18] sm:$0xff]
      %v1518 = vld [vmem:[%s16] sm:$0x1]
      %v1520 = vrot.slane %v998, 5
      %v1522 = vsel %vm1052, %v997, %v1520
      %v1524 = vrot.slane %v997, 1
      %v1526 = vrot.slane %v998, 6
      %v1528 = vsel %vm1052, %v1524, %v1526
      %v1529 = vrot.slane %v997, 2
      %v1532 = vrot.slane %v998, 7
      %v1533 = vrot.slane %v999, 7
      %v1534 = vsel %vm1046, %v1532, %v1533
      %v1536 = vsel %vm1052, %v1529, %v1532
      %v1537 = vrot.slane %v997, 3
      %v1539 = vsel %vm1052, %v1537, %v998
      %v1540 = vrot.slane %v997, 4
      %v1541 = vrot.slane %v998, 4
      %v1542 = vsel %vm808, %v1540, %v1541
      %v1544 = vrot.slane %v998, 1
      %v1545 = vrot.slane %v999, 1
      %v1546 = vsel %vm1032, %v1544, %v1545
      %v1548 = vsel %vm1052, %v1542, %v1546
      %v1549 = vrot.slane %v997, 5
      %v1550 = vsel %vm1026, %v1549, %v1520
      %v1552 = vrot.slane %v998, 2
      %v1553 = vrot.slane %v999, 2
      %v1554 = vsel %vm899, %v1552, %v1553
      %v1556 = vsel %vm1052, %v1550, %v1554
      %1558 = vrot.lane.b32.xlu0 %v1528, 16
      %v1559 = vpop.permute.xlu0 %1558
      %1560 = vrot.lane.b32.xlu0 %v1526, 16
      %v1561 = vpop.permute.xlu0 %1560
      %1565 = vrot.lane.b32.xlu0 %v1536, 32
      %v1566 = vpop.permute.xlu0 %1565
      %1567 = vrot.lane.b32.xlu0 %v1534, 32
      %v1568 = vpop.permute.xlu0 %1567
      %1572 = vrot.lane.b32.xlu0 %v1539, 48
      %v1573 = vpop.permute.xlu0 %1572
      %1574 = vrot.lane.b32.xlu0 %v999, 48
      %v1575 = vpop.permute.xlu0 %1574
      %1579 = vrot.lane.b32.xlu0 %v1548, 64
      %v1580 = vpop.permute.xlu0 %1579
      %1581 = vrot.lane.b32.xlu0 %v1545, 64
      %v1582 = vpop.permute.xlu0 %1581
      %1586 = vrot.lane.b32.xlu0 %v1556, 80
      %v1587 = vpop.permute.xlu0 %1586
      %1588 = vrot.lane.b32.xlu0 %v1553, 80
      %v1589 = vpop.permute.xlu0 %1588
      %v1592 = vsel %vm1106, %v1522, %v1559
      %v1593 = vsel %vm1106, %v1520, %v1561
      %v1594 = vsel %vm1109, %v1592, %v1566
      %v1595 = vsel %vm1109, %v1593, %v1568
      %v1596 = vsel %vm1112, %v1594, %v1573
      %v1597 = vsel %vm1112, %v1595, %v1575
      %v1598 = vsel %vm1115, %v1596, %v1580
      %v1599 = vsel %vm1115, %v1597, %v1582
      %v1600 = vsel %vm1118, %v1598, %v1587
      %v1601 = vsel %vm1118, %v1599, %v1589
      %v1603 = vsel %vm1121, %v1600, 0
      %v1606 = vsel %vm1121, %v1601, 0
      %1608 = vmatprep.subr.mxu0 0.0
      %1609 = vmatpush1.msra.mxu0 %v1495
      %1610 = vmatprep.subr.mxu0 0.0
      %1611 = vmatpush1.msra.mxu0 %v1496
      %1612 = vmatprep.subr.mxu0 0.0
      %1613 = vmatpush1.msra.mxu0 %v1497
      %1614 = vmatprep.subr.mxu0 0.0
      %1615 = vmatpush1.msra.mxu0 %v1498
      %1616 = vmatprep.subr.mxu0 0.0
      %1617 = vmatpush1.msra.mxu0 %v1499
      %1618 = vmatprep.subr.mxu0 0.0
      %1619 = vmatpush1.msra.mxu0 %v1500
      %1620 = vmatprep.subr.mxu0 0.0
      %1621 = vmatpush1.msra.mxu0 %v1501
      %1622 = vmatprep.subr.mxu0 0.0
      %1623 = vmatpush1.msra.mxu0 %v1502
      %1624 = vmatprep.subr.mxu0 0.0
      %1625 = vmatpush1.msra.mxu0 %v1503
      %1626 = vmatprep.subr.mxu0 0.0
      %1627 = vmatpush1.msra.mxu0 %v1504
      %1628 = vmatprep.subr.mxu0 0.0
      %1629 = vmatpush1.msra.mxu0 %v1505
      %1630 = vmatprep.subr.mxu0 0.0
      %1631 = vmatpush1.msra.mxu0 %v1506
      %1632 = vmatprep.subr.mxu0 0.0
      %1633 = vmatpush1.msra.mxu0 0.0
      %1634 = vmatprep.subr.mxu0 0.0
      %1635 = vmatpush1.msra.mxu0 0.0
      %1636 = vmatprep.subr.mxu0 0.0
      %1637 = vmatpush1.msra.mxu0 0.0
      %1638 = vmatprep.subr.mxu0 0.0
      %1639 = vmatpush1.msra.mxu0 0.0
      %1640 = vmatprep.subr.mxu0 0.0
      %1641 = vmatpush1.msra.mxu0 0.0
      %1642 = vmatprep.subr.mxu0 0.0
      %1643 = vmatpush1.msra.mxu0 0.0
      %1644 = vmatprep.subr.mxu0 0.0
      %1645 = vmatpush1.msra.mxu0 0.0
      %1646 = vmatprep.subr.mxu0 0.0
      %1647 = vmatpush1.msra.mxu0 0.0
      %1648 = vmatprep.subr.mxu0 0.0
      %1649 = vmatpush1.msra.mxu0 0.0
      %1650 = vmatprep.subr.mxu0 0.0
      %1651 = vmatpush1.msra.mxu0 0.0
      %1652 = vmatprep.subr.mxu0 0.0
      %1653 = vmatpush1.msra.mxu0 0.0
      %1654 = vmatprep.subr.mxu0 0.0
      %1655 = vmatpush1.msra.mxu0 0.0
      %1656 = vmatprep.subr.mxu0 0.0
      %1657 = vmatpush1.msra.mxu0 0.0
      %1658 = vmatprep.subr.mxu0 0.0
      %1659 = vmatpush1.msra.mxu0 0.0
      %1660 = vmatprep.subr.mxu0 0.0
      %1661 = vmatpush1.msra.mxu0 0.0
      %1662 = vmatprep.subr.mxu0 0.0
      %1663 = vmatpush1.msra.mxu0 0.0
      %1664 = vmatprep.subr.mxu0 0.0
      %1665 = vmatpush1.msra.mxu0 0.0
      %1666 = vmatprep.subr.mxu0 0.0
      %1667 = vmatpush1.msra.mxu0 0.0
      %1668 = vmatprep.subr.mxu0 0.0
      %1669 = vmatpush1.msra.mxu0 0.0
      %1670 = vmatprep.subr.mxu0 0.0
      %1671 = vmatpush1.msra.mxu0 0.0
      %1672 = vmatprep.mubr.f32.mxu0 0.0
      %1673 = vmatmul.mubr.f32.gmra.mrb[0].mxu0 %v1603
      %v1674 = vpop.f32.mrb[0].mxu0
      %v1675 = vadd.f32 0.0, %v1674
      %v1676 = vpop.f32.mrb[0].mxu0
      %1677 = vmatprep.mubr.f32.mxu0 0.0
      %1678 = vmatmul.mubr.f32.gmra.mrb[0].mxu0 %v1606
      %v1679 = vpop.f32.mrb[0].mxu0
      %v1680 = vadd.f32 0.0, %v1679
      %v1681 = vpop.f32.mrb[0].mxu0
      %1682 = vdwg.mxu0
      %v1683 = vmax.f32 %v1675, 0.0
      %v1684 = vmax.f32 %v1680, 0.0
      %v1686 = vrot.slane %v1683, 4
      %v1688 = vsel %vm1046, %v1683, %v1686
      %v1689 = vrot.slane %v1683, 1
      %v1691 = vrot.slane %v1683, 5
      %v1693 = vsel %vm1046, %v1689, %v1691
      %v1694 = vrot.slane %v1683, 2
      %v1696 = vrot.slane %v1683, 6
      %v1698 = vsel %vm1046, %v1694, %v1696
      %v1699 = vrot.slane %v1683, 3
      %v1702 = vrot.slane %v1684, 7
      %v1704 = vsel %vm1046, %v1699, %v1702
      %v1705 = vsel %vm1046, %v1686, %v1684
      %1707 = vrot.lane.b32.xlu0 %v1693, 2
      %v1708 = vpop.permute.xlu0 %1707
      %1711 = vrot.lane.b32.xlu0 %v1698, 4
      %v1712 = vpop.permute.xlu0 %1711
      %1715 = vrot.lane.b32.xlu0 %v1704, 6
      %v1716 = vpop.permute.xlu0 %1715
      %1719 = vrot.lane.b32.xlu0 %v1705, 8
      %v1720 = vpop.permute.xlu0 %1719
      %v1722 = vsel %vm1245, %v1688, %v1708
      %v1723 = vsel %vm1247, %v1722, %v1712
      %v1724 = vsel %vm1249, %v1723, %v1716
      %v1725 = vsel %vm1251, %v1724, %v1720
      %v1727 = vsel %vm904, %v1725, 0
      %v1730 = vsel %vm914, %v1508, 0
      %1732 = vmatprep.subr.mxu0 0.0
      %1733 = vmatpush1.msra.mxu0 %v1507
      %1734 = vmatprep.subr.mxu0 0.0
      %1735 = vmatpush1.msra.mxu0 %v1730
      %1736 = vmatprep.subr.mxu0 0.0
      %1737 = vmatpush1.msra.mxu0 0.0
      %1738 = vmatprep.subr.mxu0 0.0
      %1739 = vmatpush1.msra.mxu0 0.0
      %1740 = vmatprep.subr.mxu0 0.0
      %1741 = vmatpush1.msra.mxu0 0.0
      %1742 = vmatprep.subr.mxu0 0.0
      %1743 = vmatpush1.msra.mxu0 0.0
      %1744 = vmatprep.subr.mxu0 0.0
      %1745 = vmatpush1.msra.mxu0 0.0
      %1746 = vmatprep.subr.mxu0 0.0
      %1747 = vmatpush1.msra.mxu0 0.0
      %1748 = vmatprep.subr.mxu0 0.0
      %1749 = vmatpush1.msra.mxu0 0.0
      %1750 = vmatprep.subr.mxu0 0.0
      %1751 = vmatpush1.msra.mxu0 0.0
      %1752 = vmatprep.subr.mxu0 0.0
      %1753 = vmatpush1.msra.mxu0 0.0
      %1754 = vmatprep.subr.mxu0 0.0
      %1755 = vmatpush1.msra.mxu0 0.0
      %1756 = vmatprep.subr.mxu0 0.0
      %1757 = vmatpush1.msra.mxu0 0.0
      %1758 = vmatprep.subr.mxu0 0.0
      %1759 = vmatpush1.msra.mxu0 0.0
      %1760 = vmatprep.subr.mxu0 0.0
      %1761 = vmatpush1.msra.mxu0 0.0
      %1762 = vmatprep.subr.mxu0 0.0
      %1763 = vmatpush1.msra.mxu0 0.0
      %1764 = vmatprep.subr.mxu0 0.0
      %1765 = vmatpush1.msra.mxu0 0.0
      %1766 = vmatprep.subr.mxu0 0.0
      %1767 = vmatpush1.msra.mxu0 0.0
      %1768 = vmatprep.subr.mxu0 0.0
      %1769 = vmatpush1.msra.mxu0 0.0
      %1770 = vmatprep.subr.mxu0 0.0
      %1771 = vmatpush1.msra.mxu0 0.0
      %1772 = vmatprep.subr.mxu0 0.0
      %1773 = vmatpush1.msra.mxu0 0.0
      %1774 = vmatprep.subr.mxu0 0.0
      %1775 = vmatpush1.msra.mxu0 0.0
      %1776 = vmatprep.subr.mxu0 0.0
      %1777 = vmatpush1.msra.mxu0 0.0
      %1778 = vmatprep.subr.mxu0 0.0
      %1779 = vmatpush1.msra.mxu0 0.0
      %1780 = vmatprep.subr.mxu0 0.0
      %1781 = vmatpush1.msra.mxu0 0.0
      %1782 = vmatprep.subr.mxu0 0.0
      %1783 = vmatpush1.msra.mxu0 0.0
      %1784 = vmatprep.subr.mxu0 0.0
      %1785 = vmatpush1.msra.mxu0 0.0
      %1786 = vmatprep.subr.mxu0 0.0
      %1787 = vmatpush1.msra.mxu0 0.0
      %1788 = vmatprep.subr.mxu0 0.0
      %1789 = vmatpush1.msra.mxu0 0.0
      %1790 = vmatprep.subr.mxu0 0.0
      %1791 = vmatpush1.msra.mxu0 0.0
      %1792 = vmatprep.subr.mxu0 0.0
      %1793 = vmatpush1.msra.mxu0 0.0
      %1794 = vmatprep.subr.mxu0 0.0
      %1795 = vmatpush1.msra.mxu0 0.0
      %1796 = vmatprep.mubr.f32.mxu0 0.0
      %1797 = vmatmul.mubr.f32.gmra.mrb[0].mxu0 %v1727
      %v1798 = vpop.f32.mrb[0].mxu0
      %v1799 = vadd.f32 0.0, %v1798
      %v1800 = vpop.f32.mrb[0].mxu0
      %1801 = vdwg.mxu0
      %v1802 = vmax.f32 %v1799, 0.0
      %v1804 = vlaneseq
      %v1805 = vshrl.u32 %v1804, 7
      %v1806 = vsub.s32 0, %v1805
      %v1807 = vrot.slane %v1513, %v1806
      %v1810 = vsel %vm1109, %v1802, 0
      %1812 = vmatprep.subr.mxu0 0.0
      %1813 = vmatpush1.msra.mxu0 %v1509
      %1814 = vmatprep.subr.mxu0 0.0
      %1815 = vmatpush1.msra.mxu0 %v1510
      %1816 = vmatprep.subr.mxu0 0.0
      %1817 = vmatpush1.msra.mxu0 %v1511
      %1818 = vmatprep.subr.mxu0 0.0
      %1819 = vmatpush1.msra.mxu0 %v1512
      %1820 = vmatprep.subr.mxu0 0.0
      %1821 = vmatpush1.msra.mxu0 0.0
      %1822 = vmatprep.subr.mxu0 0.0
      %1823 = vmatpush1.msra.mxu0 0.0
      %1824 = vmatprep.subr.mxu0 0.0
      %1825 = vmatpush1.msra.mxu0 0.0
      %1826 = vmatprep.subr.mxu0 0.0
      %1827 = vmatpush1.msra.mxu0 0.0
      %1828 = vmatprep.subr.mxu0 0.0
      %1829 = vmatpush1.msra.mxu0 0.0
      %1830 = vmatprep.subr.mxu0 0.0
      %1831 = vmatpush1.msra.mxu0 0.0
      %1832 = vmatprep.subr.mxu0 0.0
      %1833 = vmatpush1.msra.mxu0 0.0
      %1834 = vmatprep.subr.mxu0 0.0
      %1835 = vmatpush1.msra.mxu0 0.0
      %1836 = vmatprep.subr.mxu0 0.0
      %1837 = vmatpush1.msra.mxu0 0.0
      %1838 = vmatprep.subr.mxu0 0.0
      %1839 = vmatpush1.msra.mxu0 0.0
      %1840 = vmatprep.subr.mxu0 0.0
      %1841 = vmatpush1.msra.mxu0 0.0
      %1842 = vmatprep.subr.mxu0 0.0
      %1843 = vmatpush1.msra.mxu0 0.0
      %1844 = vmatprep.subr.mxu0 0.0
      %1845 = vmatpush1.msra.mxu0 0.0
      %1846 = vmatprep.subr.mxu0 0.0
      %1847 = vmatpush1.msra.mxu0 0.0
      %1848 = vmatprep.subr.mxu0 0.0
      %1849 = vmatpush1.msra.mxu0 0.0
      %1850 = vmatprep.subr.mxu0 0.0
      %1851 = vmatpush1.msra.mxu0 0.0
      %1852 = vmatprep.subr.mxu0 0.0
      %1853 = vmatpush1.msra.mxu0 0.0
      %1854 = vmatprep.subr.mxu0 0.0
      %1855 = vmatpush1.msra.mxu0 0.0
      %1856 = vmatprep.subr.mxu0 0.0
      %1857 = vmatpush1.msra.mxu0 0.0
      %1858 = vmatprep.subr.mxu0 0.0
      %1859 = vmatpush1.msra.mxu0 0.0
      %1860 = vmatprep.subr.mxu0 0.0
      %1861 = vmatpush1.msra.mxu0 0.0
      %1862 = vmatprep.subr.mxu0 0.0
      %1863 = vmatpush1.msra.mxu0 0.0
      %1864 = vmatprep.subr.mxu0 0.0
      %1865 = vmatpush1.msra.mxu0 0.0
      %1866 = vmatprep.subr.mxu0 0.0
      %1867 = vmatpush1.msra.mxu0 0.0
      %1868 = vmatprep.subr.mxu0 0.0
      %1869 = vmatpush1.msra.mxu0 0.0
      %1870 = vmatprep.subr.mxu0 0.0
      %1871 = vmatpush1.msra.mxu0 0.0
      %1872 = vmatprep.subr.mxu0 0.0
      %1873 = vmatpush1.msra.mxu0 0.0
      %1874 = vmatprep.subr.mxu0 0.0
      %1875 = vmatpush1.msra.mxu0 0.0
      %1876 = vmatprep.mubr.f32.mxu0 0.0
      %1877 = vmatmul.mubr.f32.gmra.mrb[0].mxu0 %v1810
      %v1878 = vpop.f32.mrb[0].mxu0
      %v1879 = vadd.f32 %v1807, %v1878
      %v1880 = vpop.f32.mrb[0].mxu0
      %1881 = vdwg.mxu0
      %vm1882 = vcmp.ge.f32.partialorder %v1879, 0.0
      %v1883 = vmul.f32 %v1879, 0.01
      %v1884 = vsel %vm1882, %v1879, %v1883
      %v1886 = vlaneseq
      %v1887 = vshrl.u32 %v1886, 7
      %v1888 = vsub.s32 0, %v1887
      %v1889 = vrot.slane %v1518, %v1888
      %v1892 = vsel %vm1109, %v1884, 0
      %1894 = vmatprep.subr.mxu0 0.0
      %1895 = vmatpush1.msra.mxu0 %v1514
      %1896 = vmatprep.subr.mxu0 0.0
      %1897 = vmatpush1.msra.mxu0 %v1515
      %1898 = vmatprep.subr.mxu0 0.0
      %1899 = vmatpush1.msra.mxu0 %v1516
      %1900 = vmatprep.subr.mxu0 0.0
      %1901 = vmatpush1.msra.mxu0 %v1517
      %1902 = vmatprep.subr.mxu0 0.0
      %1903 = vmatpush1.msra.mxu0 0.0
      %1904 = vmatprep.subr.mxu0 0.0
      %1905 = vmatpush1.msra.mxu0 0.0
      %1906 = vmatprep.subr.mxu0 0.0
      %1907 = vmatpush1.msra.mxu0 0.0
      %1908 = vmatprep.subr.mxu0 0.0
      %1909 = vmatpush1.msra.mxu0 0.0
      %1910 = vmatprep.subr.mxu0 0.0
      %1911 = vmatpush1.msra.mxu0 0.0
      %1912 = vmatprep.subr.mxu0 0.0
      %1913 = vmatpush1.msra.mxu0 0.0
      %1914 = vmatprep.subr.mxu0 0.0
      %1915 = vmatpush1.msra.mxu0 0.0
      %1916 = vmatprep.subr.mxu0 0.0
      %1917 = vmatpush1.msra.mxu0 0.0
      %1918 = vmatprep.subr.mxu0 0.0
      %1919 = vmatpush1.msra.mxu0 0.0
      %1920 = vmatprep.subr.mxu0 0.0
      %1921 = vmatpush1.msra.mxu0 0.0
      %1922 = vmatprep.subr.mxu0 0.0
      %1923 = vmatpush1.msra.mxu0 0.0
      %1924 = vmatprep.subr.mxu0 0.0
      %1925 = vmatpush1.msra.mxu0 0.0
      %1926 = vmatprep.subr.mxu0 0.0
      %1927 = vmatpush1.msra.mxu0 0.0
      %1928 = vmatprep.subr.mxu0 0.0
      %1929 = vmatpush1.msra.mxu0 0.0
      %1930 = vmatprep.subr.mxu0 0.0
      %1931 = vmatpush1.msra.mxu0 0.0
      %1932 = vmatprep.subr.mxu0 0.0
      %1933 = vmatpush1.msra.mxu0 0.0
      %1934 = vmatprep.subr.mxu0 0.0
      %1935 = vmatpush1.msra.mxu0 0.0
      %1936 = vmatprep.subr.mxu0 0.0
      %1937 = vmatpush1.msra.mxu0 0.0
      %1938 = vmatprep.subr.mxu0 0.0
      %1939 = vmatpush1.msra.mxu0 0.0
      %1940 = vmatprep.subr.mxu0 0.0
      %1941 = vmatpush1.msra.mxu0 0.0
      %1942 = vmatprep.subr.mxu0 0.0
      %1943 = vmatpush1.msra.mxu0 0.0
      %1944 = vmatprep.subr.mxu0 0.0
      %1945 = vmatpush1.msra.mxu0 0.0
      %1946 = vmatprep.subr.mxu0 0.0
      %1947 = vmatpush1.msra.mxu0 0.0
      %1948 = vmatprep.subr.mxu0 0.0
      %1949 = vmatpush1.msra.mxu0 0.0
      %1950 = vmatprep.subr.mxu0 0.0
      %1951 = vmatpush1.msra.mxu0 0.0
      %1952 = vmatprep.subr.mxu0 0.0
      %1953 = vmatpush1.msra.mxu0 0.0
      %1954 = vmatprep.subr.mxu0 0.0
      %1955 = vmatpush1.msra.mxu0 0.0
      %1956 = vmatprep.subr.mxu0 0.0
      %1957 = vmatpush1.msra.mxu0 0.0
      %1958 = vmatprep.mubr.f32.mxu0 0.0
      %1959 = vmatmul.mubr.f32.gmra.mrb[0].mxu0 %v1892
      %v1960 = vpop.f32.mrb[0].mxu0
      %v1961 = vadd.f32 %v1889, %v1960
      %v1962 = vpop.f32.mrb[0].mxu0
      %1963 = vdwg.mxu0
      %vm1964 = vcmp.ge.f32.partialorder %v1961, 0.0
      %v1965 = vmul.f32 %v1961, 0.01
      %v1966 = vsel %vm1964, %v1961, %v1965
      %v1967 = vadd.f32 %v1966, %v1802
      %v1968 = vlaneseq
      %v1969 = vshrl.u32 %v1968, 7
      %v1970 = vsub.s32 0, %v1969
      %v1971 = vrot.slane %v1967, %v1970
      %v1972 = vmul.f32 %v1494, %v1971
      %v1973 = vlaneseq
      %v1974 = vshrl.u32 %v1973, 7
      %v1975 = vsub.s32 1, %v1974
      %v1976 = vrot.slane %v1967, %v1975
      %v1977 = vmul.f32 %v1494, %v1976
      %v1979 = vrot.slane %v1977, 3
      %v1981 = vadd.f32 %v1972, %v1979
      %vm1982 = vcmask 256000
      %v1983 = vsel %vm1982, %v1981, 0.0
      %1984 = vadd.xlane.f32.xlu0 %v1983
      %v1985 = vpop.xlane.xlu0 %1984
      %v1986 = vadd.f32 %v1985, 2e-15
      %v1987 = vsel %vm1026, %v1986, 0.0
      %v1988 = vrot.slane %v1987, 4
      %v1989 = vadd.f32 %v1987, %v1988
      %v1990 = vrot.slane %v1989, 2
      %v1991 = vadd.f32 %v1989, %v1990
      %v1992 = vrot.slane %v1991, 1
      %v1993 = vadd.f32 %v1991, %v1992
      %v1994 = vrcp.pop %v1993
      %v1995 = vmul.f32 %v1986, %v1994
      %v1996 = vlaneseq
      %v1997 = vshrl.u32 %v1996, 7
      %v1998 = vsub.s32 0, %v1997
      %v1999 = vrot.slane %v1995, %v1998
      %v2000 = vmul.f32 %v1999, %v792
      %v2001 = vmul.f32 %v1999, %v793
      %v2002 = vmul.f32 %v1999, %v794
      %v2003 = vlaneseq
      %v2004 = vshrl.u32 %v2003, 7
      %v2005 = vsub.s32 1, %v2004
      %v2006 = vrot.slane %v1995, %v2005
      %v2007 = vmul.f32 %v2006, %v792
      %v2008 = vmul.f32 %v2006, %v793
      %v2009 = vmul.f32 %v2006, %v794
      %v2013 = vrot.slane %v2007, 1
      %v2014 = vrot.slane %v2008, 1
      %v2015 = vsel %vm1032, %v2013, %v2014
      %v2016 = vrot.slane %v2009, 1
      %v2017 = vsel %vm1032, %v2014, %v2016
      %v2021 = vadd.f32 %v2000, %v2015
      %v2022 = vadd.f32 %v2001, %v2017
      %v2023 = vadd.f32 %v2002, %v2016
      %v2024 = vlaneseq
      %v2025 = vshrl.u32 %v2024, 7
      %v2026 = vsub.s32 2, %v2025
      %v2027 = vrot.slane %v1995, %v2026
      %v2028 = vmul.f32 %v2027, %v792
      %v2029 = vmul.f32 %v2027, %v793
      %v2030 = vmul.f32 %v2027, %v794
      %v2034 = vrot.slane %v2028, 2
      %v2035 = vrot.slane %v2029, 2
      %v2036 = vsel %vm899, %v2034, %v2035
      %v2037 = vrot.slane %v2030, 2
      %v2038 = vsel %vm899, %v2035, %v2037
      %v2042 = vadd.f32 %v2021, %v2036
      %v2043 = vadd.f32 %v2022, %v2038
      %v2044 = vadd.f32 %v2023, %v2037
      %v2045 = vld [vmem:[%s3] sm:$0xf]
      %vm2046 = vcmask 146432
      %v2048 = vsel %vm2046, %v2045, 0
      %v2051 = vsel %vm914, %v2044, 0
      %2053 = vmatprep.subr.mxu0 0.0
      %2054 = vmatpush1.msra.mxu0 %v2042
      %2055 = vmatprep.subr.mxu0 0.0
      %2056 = vmatpush1.msra.mxu0 %v2043
      %2057 = vmatprep.subr.mxu0 0.0
      %2058 = vmatpush1.msra.mxu0 %v2051
      %2059 = vmatprep.subr.mxu0 0.0
      %2060 = vmatpush1.msra.mxu0 0.0
      %2061 = vmatprep.subr.mxu0 0.0
      %2062 = vmatpush1.msra.mxu0 0.0
      %2063 = vmatprep.subr.mxu0 0.0
      %2064 = vmatpush1.msra.mxu0 0.0
      %2065 = vmatprep.subr.mxu0 0.0
      %2066 = vmatpush1.msra.mxu0 0.0
      %2067 = vmatprep.subr.mxu0 0.0
      %2068 = vmatpush1.msra.mxu0 0.0
      %2069 = vmatprep.subr.mxu0 0.0
      %2070 = vmatpush1.msra.mxu0 0.0
      %2071 = vmatprep.subr.mxu0 0.0
      %2072 = vmatpush1.msra.mxu0 0.0
      %2073 = vmatprep.subr.mxu0 0.0
      %2074 = vmatpush1.msra.mxu0 0.0
      %2075 = vmatprep.subr.mxu0 0.0
      %2076 = vmatpush1.msra.mxu0 0.0
      %2077 = vmatprep.subr.mxu0 0.0
      %2078 = vmatpush1.msra.mxu0 0.0
      %2079 = vmatprep.subr.mxu0 0.0
      %2080 = vmatpush1.msra.mxu0 0.0
      %2081 = vmatprep.subr.mxu0 0.0
      %2082 = vmatpush1.msra.mxu0 0.0
      %2083 = vmatprep.subr.mxu0 0.0
      %2084 = vmatpush1.msra.mxu0 0.0
      %2085 = vmatprep.subr.mxu0 0.0
      %2086 = vmatpush1.msra.mxu0 0.0
      %2087 = vmatprep.subr.mxu0 0.0
      %2088 = vmatpush1.msra.mxu0 0.0
      %2089 = vmatprep.subr.mxu0 0.0
      %2090 = vmatpush1.msra.mxu0 0.0
      %2091 = vmatprep.subr.mxu0 0.0
      %2092 = vmatpush1.msra.mxu0 0.0
      %2093 = vmatprep.subr.mxu0 0.0
      %2094 = vmatpush1.msra.mxu0 0.0
      %2095 = vmatprep.subr.mxu0 0.0
      %2096 = vmatpush1.msra.mxu0 0.0
      %2097 = vmatprep.subr.mxu0 0.0
      %2098 = vmatpush1.msra.mxu0 0.0
      %2099 = vmatprep.subr.mxu0 0.0
      %2100 = vmatpush1.msra.mxu0 0.0
      %2101 = vmatprep.subr.mxu0 0.0
      %2102 = vmatpush1.msra.mxu0 0.0
      %2103 = vmatprep.subr.mxu0 0.0
      %2104 = vmatpush1.msra.mxu0 0.0
      %2105 = vmatprep.subr.mxu0 0.0
      %2106 = vmatpush1.msra.mxu0 0.0
      %2107 = vmatprep.subr.mxu0 0.0
      %2108 = vmatpush1.msra.mxu0 0.0
      %2109 = vmatprep.subr.mxu0 0.0
      %2110 = vmatpush1.msra.mxu0 0.0
      %2111 = vmatprep.subr.mxu0 0.0
      %2112 = vmatpush1.msra.mxu0 0.0
      %2113 = vmatprep.subr.mxu0 0.0
      %2114 = vmatpush1.msra.mxu0 0.0
      %2115 = vmatprep.subr.mxu0 0.0
      %2116 = vmatpush1.msra.mxu0 0.0
      %2117 = vmatprep.mubr.f32.mxu0 0.0
      %2118 = vmatmul.mubr.f32.gmra.mrb[0].mxu0 %v2048
      %v2119 = vpop.f32.mrb[0].mxu0
      %v2120 = vadd.f32 0.0, %v2119
      %v2121 = vpop.f32.mrb[0].mxu0
      %2122 = vdwg.mxu0
      %v2123 = vlaneseq
      %v2124 = vshrl.u32 %v2123, 7
      %v2125 = vsub.s32 3, %v2124
      %v2126 = vrot.slane %v794, %v2125
      %v2129 = vsel %vm914, %v901, %v2126
      %v2130 = vsel %vm914, %v2126, 0
      %2132 = vmatprep.subr.mxu0 0.0
      %2133 = vmatpush1.msra.mxu0 %v902
      %2134 = vmatprep.subr.mxu0 0.0
      %2135 = vmatpush1.msra.mxu0 %v2129
      %2136 = vmatprep.subr.mxu0 0.0
      %2137 = vmatpush1.msra.mxu0 %v2130
      %2138 = vmatprep.subr.mxu0 0.0
      %2139 = vmatpush1.msra.mxu0 0.0
      %2140 = vmatprep.subr.mxu0 0.0
      %2141 = vmatpush1.msra.mxu0 0.0
      %2142 = vmatprep.subr.mxu0 0.0
      %2143 = vmatpush1.msra.mxu0 0.0
      %2144 = vmatprep.subr.mxu0 0.0
      %2145 = vmatpush1.msra.mxu0 0.0
      %2146 = vmatprep.subr.mxu0 0.0
      %2147 = vmatpush1.msra.mxu0 0.0
      %2148 = vmatprep.subr.mxu0 0.0
      %2149 = vmatpush1.msra.mxu0 0.0
      %2150 = vmatprep.subr.mxu0 0.0
      %2151 = vmatpush1.msra.mxu0 0.0
      %2152 = vmatprep.subr.mxu0 0.0
      %2153 = vmatpush1.msra.mxu0 0.0
      %2154 = vmatprep.subr.mxu0 0.0
      %2155 = vmatpush1.msra.mxu0 0.0
      %2156 = vmatprep.subr.mxu0 0.0
      %2157 = vmatpush1.msra.mxu0 0.0
      %2158 = vmatprep.subr.mxu0 0.0
      %2159 = vmatpush1.msra.mxu0 0.0
      %2160 = vmatprep.subr.mxu0 0.0
      %2161 = vmatpush1.msra.mxu0 0.0
      %2162 = vmatprep.subr.mxu0 0.0
      %2163 = vmatpush1.msra.mxu0 0.0
      %2164 = vmatprep.subr.mxu0 0.0
      %2165 = vmatpush1.msra.mxu0 0.0
      %2166 = vmatprep.subr.mxu0 0.0
      %2167 = vmatpush1.msra.mxu0 0.0
      %2168 = vmatprep.subr.mxu0 0.0
      %2169 = vmatpush1.msra.mxu0 0.0
      %2170 = vmatprep.subr.mxu0 0.0
      %2171 = vmatpush1.msra.mxu0 0.0
      %2172 = vmatprep.subr.mxu0 0.0
      %2173 = vmatpush1.msra.mxu0 0.0
      %2174 = vmatprep.subr.mxu0 0.0
      %2175 = vmatpush1.msra.mxu0 0.0
      %2176 = vmatprep.subr.mxu0 0.0
      %2177 = vmatpush1.msra.mxu0 0.0
      %2178 = vmatprep.subr.mxu0 0.0
      %2179 = vmatpush1.msra.mxu0 0.0
      %2180 = vmatprep.subr.mxu0 0.0
      %2181 = vmatpush1.msra.mxu0 0.0
      %2182 = vmatprep.subr.mxu0 0.0
      %2183 = vmatpush1.msra.mxu0 0.0
      %2184 = vmatprep.subr.mxu0 0.0
      %2185 = vmatpush1.msra.mxu0 0.0
      %2186 = vmatprep.subr.mxu0 0.0
      %2187 = vmatpush1.msra.mxu0 0.0
      %2188 = vmatprep.subr.mxu0 0.0
      %2189 = vmatpush1.msra.mxu0 0.0
      %2190 = vmatprep.subr.mxu0 0.0
      %2191 = vmatpush1.msra.mxu0 0.0
      %2192 = vmatprep.subr.mxu0 0.0
      %2193 = vmatpush1.msra.mxu0 0.0
      %2194 = vmatprep.subr.mxu0 0.0
      %2195 = vmatpush1.msra.mxu0 0.0
      %2196 = vmatprep.mubr.f32.mxu0 0.0
      %2197 = vmatmul.mubr.f32.gmra.mrb[0].mxu0 %v2048
      %v2198 = vpop.f32.mrb[0].mxu0
      %v2199 = vadd.f32 0.0, %v2198
      %v2200 = vpop.f32.mrb[0].mxu0
      %2201 = vdwg.mxu0
      %v2203 = vrot.slane %v2120, 4
      %v2205 = vsel %vm808, %v2199, %v2203
      %v2206 = vld [vmem:[%s17] sm:$0xff]
      %v2207 = vld [vmem:[%s17 + $0x8] sm:$0xff]
      %v2208 = vld [vmem:[%s17 + $0x10] sm:$0xff]
      %v2209 = vld [vmem:[%s17 + $0x18] sm:$0xff]
      %v2210 = vld [vmem:[%s18] sm:$0xff]
      %v2211 = vld [vmem:[%s18 + $0x8] sm:$0xff]
      %v2212 = vld [vmem:[%s19] sm:$0xff]
      %v2213 = vld [vmem:[%s19 + $0x8] sm:$0xff]
      %v2214 = vld [vmem:[%s19 + $0x10] sm:$0xff]
      %v2215 = vld [vmem:[%s19 + $0x18] sm:$0xff]
      %v2217 = vsel %vm1251, %v2206, 0
      %v2220 = vsel %vm1251, %v2207, 0
      %v2223 = vsel %vm1251, %v2208, 0
      %v2226 = vsel %vm1251, %v2209, 0
      %2228 = vmatprep.subr.mxu0 0.0
      %2229 = vmatpush1.msra.mxu0 %v2205
      %2230 = vmatprep.subr.mxu0 0.0
      %2231 = vmatpush1.msra.mxu0 0.0
      %2232 = vmatprep.subr.mxu0 0.0
      %2233 = vmatpush1.msra.mxu0 0.0
      %2234 = vmatprep.subr.mxu0 0.0
      %2235 = vmatpush1.msra.mxu0 0.0
      %2236 = vmatprep.subr.mxu0 0.0
      %2237 = vmatpush1.msra.mxu0 0.0
      %2238 = vmatprep.subr.mxu0 0.0
      %2239 = vmatpush1.msra.mxu0 0.0
      %2240 = vmatprep.subr.mxu0 0.0
      %2241 = vmatpush1.msra.mxu0 0.0
      %2242 = vmatprep.subr.mxu0 0.0
      %2243 = vmatpush1.msra.mxu0 0.0
      %2244 = vmatprep.subr.mxu0 0.0
      %2245 = vmatpush1.msra.mxu0 0.0
      %2246 = vmatprep.subr.mxu0 0.0
      %2247 = vmatpush1.msra.mxu0 0.0
      %2248 = vmatprep.subr.mxu0 0.0
      %2249 = vmatpush1.msra.mxu0 0.0
      %2250 = vmatprep.subr.mxu0 0.0
      %2251 = vmatpush1.msra.mxu0 0.0
      %2252 = vmatprep.subr.mxu0 0.0
      %2253 = vmatpush1.msra.mxu0 0.0
      %2254 = vmatprep.subr.mxu0 0.0
      %2255 = vmatpush1.msra.mxu0 0.0
      %2256 = vmatprep.subr.mxu0 0.0
      %2257 = vmatpush1.msra.mxu0 0.0
      %2258 = vmatprep.subr.mxu0 0.0
      %2259 = vmatpush1.msra.mxu0 0.0
      %2260 = vmatprep.subr.mxu0 0.0
      %2261 = vmatpush1.msra.mxu0 0.0
      %2262 = vmatprep.subr.mxu0 0.0
      %2263 = vmatpush1.msra.mxu0 0.0
      %2264 = vmatprep.subr.mxu0 0.0
      %2265 = vmatpush1.msra.mxu0 0.0
      %2266 = vmatprep.subr.mxu0 0.0
      %2267 = vmatpush1.msra.mxu0 0.0
      %2268 = vmatprep.subr.mxu0 0.0
      %2269 = vmatpush1.msra.mxu0 0.0
      %2270 = vmatprep.subr.mxu0 0.0
      %2271 = vmatpush1.msra.mxu0 0.0
      %2272 = vmatprep.subr.mxu0 0.0
      %2273 = vmatpush1.msra.mxu0 0.0
      %2274 = vmatprep.subr.mxu0 0.0
      %2275 = vmatpush1.msra.mxu0 0.0
      %2276 = vmatprep.subr.mxu0 0.0
      %2277 = vmatpush1.msra.mxu0 0.0
      %2278 = vmatprep.subr.mxu0 0.0
      %2279 = vmatpush1.msra.mxu0 0.0
      %2280 = vmatprep.subr.mxu0 0.0
      %2281 = vmatpush1.msra.mxu0 0.0
      %2282 = vmatprep.subr.mxu0 0.0
      %2283 = vmatpush1.msra.mxu0 0.0
      %2284 = vmatprep.subr.mxu0 0.0
      %2285 = vmatpush1.msra.mxu0 0.0
      %2286 = vmatprep.subr.mxu0 0.0
      %2287 = vmatpush1.msra.mxu0 0.0
      %2288 = vmatprep.subr.mxu0 0.0
      %2289 = vmatpush1.msra.mxu0 0.0
      %2290 = vmatprep.subr.mxu0 0.0
      %2291 = vmatpush1.msra.mxu0 0.0
      %2292 = vmatprep.mubr.f32.mxu0 0.0
      %2293 = vmatmul.mubr.f32.gmra.mrb[0].mxu0 %v2217
      %v2294 = vpop.f32.mrb[0].mxu0
      %v2295 = vadd.f32 0.0, %v2294
      %v2296 = vpop.f32.mrb[0].mxu0
      %2297 = vmatprep.mubr.f32.mxu0 0.0
      %2298 = vmatmul.mubr.f32.gmra.mrb[0].mxu0 %v2220
      %v2299 = vpop.f32.mrb[0].mxu0
      %v2300 = vadd.f32 0.0, %v2299
      %v2301 = vpop.f32.mrb[0].mxu0
      %2302 = vmatprep.mubr.f32.mxu0 0.0
      %2303 = vmatmul.mubr.f32.gmra.mrb[0].mxu0 %v2223
      %v2304 = vpop.f32.mrb[0].mxu0
      %v2305 = vadd.f32 0.0, %v2304
      %v2306 = vpop.f32.mrb[0].mxu0
      %2307 = vmatprep.mubr.f32.mxu0 0.0
      %2308 = vmatmul.mubr.f32.gmra.mrb[0].mxu0 %v2226
      %v2309 = vpop.f32.mrb[0].mxu0
      %v2310 = vadd.f32 0.0, %v2309
      %v2311 = vpop.f32.mrb[0].mxu0
      %2312 = vdwg.mxu0
      %2314 = vset.pattern.permute.xlu0 0
      %2315 = vperm.xlu0 %2314, %v2212
      %v2316 = vpop.permute.xlu0 %2315
      %2319 = vset.pattern.permute.xlu0 0
      %2320 = vperm.xlu0 %2319, %v2213
      %v2321 = vpop.permute.xlu0 %2320
      %2324 = vset.pattern.permute.xlu0 0
      %2325 = vperm.xlu0 %2324, %v2214
      %v2326 = vpop.permute.xlu0 %2325
      %2329 = vset.pattern.permute.xlu0 0
      %2330 = vperm.xlu0 %2329, %v2215
      %v2331 = vpop.permute.xlu0 %2330
      %v2334 = vsel %vm1106, %v2295, 0
      %v2337 = vsel %vm1106, %v2300, 0
      %v2340 = vsel %vm1106, %v2305, 0
      %v2343 = vsel %vm1106, %v2310, 0
      %2345 = vmatprep.subr.mxu0 0.0
      %2346 = vmatpush1.msra.mxu0 %v2210
      %2347 = vmatprep.subr.mxu0 0.0
      %2348 = vmatpush1.msra.mxu0 %v2211
      %2349 = vmatprep.subr.mxu0 0.0
      %2350 = vmatpush1.msra.mxu0 0.0
      %2351 = vmatprep.subr.mxu0 0.0
      %2352 = vmatpush1.msra.mxu0 0.0
      %2353 = vmatprep.subr.mxu0 0.0
      %2354 = vmatpush1.msra.mxu0 0.0
      %2355 = vmatprep.subr.mxu0 0.0
      %2356 = vmatpush1.msra.mxu0 0.0
      %2357 = vmatprep.subr.mxu0 0.0
      %2358 = vmatpush1.msra.mxu0 0.0
      %2359 = vmatprep.subr.mxu0 0.0
      %2360 = vmatpush1.msra.mxu0 0.0
      %2361 = vmatprep.subr.mxu0 0.0
      %2362 = vmatpush1.msra.mxu0 0.0
      %2363 = vmatprep.subr.mxu0 0.0
      %2364 = vmatpush1.msra.mxu0 0.0
      %2365 = vmatprep.subr.mxu0 0.0
      %2366 = vmatpush1.msra.mxu0 0.0
      %2367 = vmatprep.subr.mxu0 0.0
      %2368 = vmatpush1.msra.mxu0 0.0
      %2369 = vmatprep.subr.mxu0 0.0
      %2370 = vmatpush1.msra.mxu0 0.0
      %2371 = vmatprep.subr.mxu0 0.0
      %2372 = vmatpush1.msra.mxu0 0.0
      %2373 = vmatprep.subr.mxu0 0.0
      %2374 = vmatpush1.msra.mxu0 0.0
      %2375 = vmatprep.subr.mxu0 0.0
      %2376 = vmatpush1.msra.mxu0 0.0
      %2377 = vmatprep.subr.mxu0 0.0
      %2378 = vmatpush1.msra.mxu0 0.0
      %2379 = vmatprep.subr.mxu0 0.0
      %2380 = vmatpush1.msra.mxu0 0.0
      %2381 = vmatprep.subr.mxu0 0.0
      %2382 = vmatpush1.msra.mxu0 0.0
      %2383 = vmatprep.subr.mxu0 0.0
      %2384 = vmatpush1.msra.mxu0 0.0
      %2385 = vmatprep.subr.mxu0 0.0
      %2386 = vmatpush1.msra.mxu0 0.0
      %2387 = vmatprep.subr.mxu0 0.0
      %2388 = vmatpush1.msra.mxu0 0.0
      %2389 = vmatprep.subr.mxu0 0.0
      %2390 = vmatpush1.msra.mxu0 0.0
      %2391 = vmatprep.subr.mxu0 0.0
      %2392 = vmatpush1.msra.mxu0 0.0
      %2393 = vmatprep.subr.mxu0 0.0
      %2394 = vmatpush1.msra.mxu0 0.0
      %2395 = vmatprep.subr.mxu0 0.0
      %2396 = vmatpush1.msra.mxu0 0.0
      %2397 = vmatprep.subr.mxu0 0.0
      %2398 = vmatpush1.msra.mxu0 0.0
      %2399 = vmatprep.subr.mxu0 0.0
      %2400 = vmatpush1.msra.mxu0 0.0
      %2401 = vmatprep.subr.mxu0 0.0
      %2402 = vmatpush1.msra.mxu0 0.0
      %2403 = vmatprep.subr.mxu0 0.0
      %2404 = vmatpush1.msra.mxu0 0.0
      %2405 = vmatprep.subr.mxu0 0.0
      %2406 = vmatpush1.msra.mxu0 0.0
      %2407 = vmatprep.subr.mxu0 0.0
      %2408 = vmatpush1.msra.mxu0 0.0
      %2409 = vmatprep.mubr.f32.mxu0 0.0
      %2410 = vmatmul.mubr.f32.gmra.mrb[0].mxu0 %v2334
      %v2411 = vpop.f32.mrb[0].mxu0
      %v2412 = vadd.f32 %v2316, %v2411
      %v2413 = vpop.f32.mrb[0].mxu0
      %2414 = vmatprep.mubr.f32.mxu0 0.0
      %2415 = vmatmul.mubr.f32.gmra.mrb[0].mxu0 %v2337
      %v2416 = vpop.f32.mrb[0].mxu0
      %v2417 = vadd.f32 %v2321, %v2416
      %v2418 = vpop.f32.mrb[0].mxu0
      %2419 = vmatprep.mubr.f32.mxu0 0.0
      %2420 = vmatmul.mubr.f32.gmra.mrb[0].mxu0 %v2340
      %v2421 = vpop.f32.mrb[0].mxu0
      %v2422 = vadd.f32 %v2326, %v2421
      %v2423 = vpop.f32.mrb[0].mxu0
      %2424 = vmatprep.mubr.f32.mxu0 0.0
      %2425 = vmatmul.mubr.f32.gmra.mrb[0].mxu0 %v2343
      %v2426 = vpop.f32.mrb[0].mxu0
      %v2427 = vadd.f32 %v2331, %v2426
      %v2428 = vpop.f32.mrb[0].mxu0
      %2429 = vdwg.mxu0
      %v2430 = vmul.f32 %v2412, 0.999995
      %v2431 = vmul.f32 %v2417, 0.999995
      %v2432 = vmul.f32 %v2422, 0.999995
      %v2433 = vmul.f32 %v2427, 0.999995
      %v2434 = vtanh.pop %v2430
      %v2435 = vtanh.pop %v2431
      %v2436 = vtanh.pop %v2432
      %v2437 = vtanh.pop %v2433
      %v2438 = vld [vmem:[%s20] sm:$0xff]
      %v2439 = vld [vmem:[%s20 + $0x8] sm:$0xff]
      %v2440 = vld [vmem:[%s20 + $0x10] sm:$0xff]
      %v2441 = vld [vmem:[%s20 + $0x18] sm:$0xff]
      %v2442 = vld [vmem:[%s21] sm:$0xff]
      %v2443 = vld [vmem:[%s21 + $0x8] sm:$0xff]
      %v2444 = vld [vmem:[%s22] sm:$0xff]
      %v2445 = vld [vmem:[%s22 + $0x8] sm:$0xff]
      %v2446 = vld [vmem:[%s22 + $0x10] sm:$0xff]
      %v2447 = vld [vmem:[%s22 + $0x18] sm:$0xff]
      %v2449 = vsel %vm1109, %v2438, 0
      %v2452 = vsel %vm1109, %v2439, 0
      %v2455 = vsel %vm1109, %v2440, 0
      %v2458 = vsel %vm1109, %v2441, 0
      %2460 = vmatprep.subr.mxu0 0.0
      %2461 = vmatpush1.msra.mxu0 %v2434
      %2462 = vmatprep.subr.mxu0 0.0
      %2463 = vmatpush1.msra.mxu0 %v2435
      %2464 = vmatprep.subr.mxu0 0.0
      %2465 = vmatpush1.msra.mxu0 %v2436
      %2466 = vmatprep.subr.mxu0 0.0
      %2467 = vmatpush1.msra.mxu0 %v2437
      %2468 = vmatprep.subr.mxu0 0.0
      %2469 = vmatpush1.msra.mxu0 0.0
      %2470 = vmatprep.subr.mxu0 0.0
      %2471 = vmatpush1.msra.mxu0 0.0
      %2472 = vmatprep.subr.mxu0 0.0
      %2473 = vmatpush1.msra.mxu0 0.0
      %2474 = vmatprep.subr.mxu0 0.0
      %2475 = vmatpush1.msra.mxu0 0.0
      %2476 = vmatprep.subr.mxu0 0.0
      %2477 = vmatpush1.msra.mxu0 0.0
      %2478 = vmatprep.subr.mxu0 0.0
      %2479 = vmatpush1.msra.mxu0 0.0
      %2480 = vmatprep.subr.mxu0 0.0
      %2481 = vmatpush1.msra.mxu0 0.0
      %2482 = vmatprep.subr.mxu0 0.0
      %2483 = vmatpush1.msra.mxu0 0.0
      %2484 = vmatprep.subr.mxu0 0.0
      %2485 = vmatpush1.msra.mxu0 0.0
      %2486 = vmatprep.subr.mxu0 0.0
      %2487 = vmatpush1.msra.mxu0 0.0
      %2488 = vmatprep.subr.mxu0 0.0
      %2489 = vmatpush1.msra.mxu0 0.0
      %2490 = vmatprep.subr.mxu0 0.0
      %2491 = vmatpush1.msra.mxu0 0.0
      %2492 = vmatprep.subr.mxu0 0.0
      %2493 = vmatpush1.msra.mxu0 0.0
      %2494 = vmatprep.subr.mxu0 0.0
      %2495 = vmatpush1.msra.mxu0 0.0
      %2496 = vmatprep.subr.mxu0 0.0
      %2497 = vmatpush1.msra.mxu0 0.0
      %2498 = vmatprep.subr.mxu0 0.0
      %2499 = vmatpush1.msra.mxu0 0.0
      %2500 = vmatprep.subr.mxu0 0.0
      %2501 = vmatpush1.msra.mxu0 0.0
      %2502 = vmatprep.subr.mxu0 0.0
      %2503 = vmatpush1.msra.mxu0 0.0
      %2504 = vmatprep.subr.mxu0 0.0
      %2505 = vmatpush1.msra.mxu0 0.0
      %2506 = vmatprep.subr.mxu0 0.0
      %2507 = vmatpush1.msra.mxu0 0.0
      %2508 = vmatprep.subr.mxu0 0.0
      %2509 = vmatpush1.msra.mxu0 0.0
      %2510 = vmatprep.subr.mxu0 0.0
      %2511 = vmatpush1.msra.mxu0 0.0
      %2512 = vmatprep.subr.mxu0 0.0
      %2513 = vmatpush1.msra.mxu0 0.0
      %2514 = vmatprep.subr.mxu0 0.0
      %2515 = vmatpush1.msra.mxu0 0.0
      %2516 = vmatprep.subr.mxu0 0.0
      %2517 = vmatpush1.msra.mxu0 0.0
      %2518 = vmatprep.subr.mxu0 0.0
      %2519 = vmatpush1.msra.mxu0 0.0
      %2520 = vmatprep.subr.mxu0 0.0
      %2521 = vmatpush1.msra.mxu0 0.0
      %2522 = vmatprep.subr.mxu0 0.0
      %2523 = vmatpush1.msra.mxu0 0.0
      %2524 = vmatprep.mubr.f32.mxu0 0.0
      %2525 = vmatmul.mubr.f32.gmra.mrb[0].mxu0 %v2449
      %v2526 = vpop.f32.mrb[0].mxu0
      %v2527 = vadd.f32 0.0, %v2526
      %v2528 = vpop.f32.mrb[0].mxu0
      %2529 = vmatprep.mubr.f32.mxu0 0.0
      %2530 = vmatmul.mubr.f32.gmra.mrb[0].mxu0 %v2452
      %v2531 = vpop.f32.mrb[0].mxu0
      %v2532 = vadd.f32 0.0, %v2531
      %v2533 = vpop.f32.mrb[0].mxu0
      %2534 = vmatprep.mubr.f32.mxu0 0.0
      %2535 = vmatmul.mubr.f32.gmra.mrb[0].mxu0 %v2455
      %v2536 = vpop.f32.mrb[0].mxu0
      %v2537 = vadd.f32 0.0, %v2536
      %v2538 = vpop.f32.mrb[0].mxu0
      %2539 = vmatprep.mubr.f32.mxu0 0.0
      %2540 = vmatmul.mubr.f32.gmra.mrb[0].mxu0 %v2458
      %v2541 = vpop.f32.mrb[0].mxu0
      %v2542 = vadd.f32 0.0, %v2541
      %v2543 = vpop.f32.mrb[0].mxu0
      %2544 = vdwg.mxu0
      %2546 = vset.pattern.permute.xlu0 0
      %2547 = vperm.xlu0 %2546, %v2444
      %v2548 = vpop.permute.xlu0 %2547
      %2551 = vset.pattern.permute.xlu0 0
      %2552 = vperm.xlu0 %2551, %v2445
      %v2553 = vpop.permute.xlu0 %2552
      %2556 = vset.pattern.permute.xlu0 0
      %2557 = vperm.xlu0 %2556, %v2446
      %v2558 = vpop.permute.xlu0 %2557
      %2561 = vset.pattern.permute.xlu0 0
      %2562 = vperm.xlu0 %2561, %v2447
      %v2563 = vpop.permute.xlu0 %2562
      %v2566 = vsel %vm1106, %v2527, 0
      %v2569 = vsel %vm1106, %v2532, 0
      %v2572 = vsel %vm1106, %v2537, 0
      %v2575 = vsel %vm1106, %v2542, 0
      %2577 = vmatprep.subr.mxu0 0.0
      %2578 = vmatpush1.msra.mxu0 %v2442
      %2579 = vmatprep.subr.mxu0 0.0
      %2580 = vmatpush1.msra.mxu0 %v2443
      %2581 = vmatprep.subr.mxu0 0.0
      %2582 = vmatpush1.msra.mxu0 0.0
      %2583 = vmatprep.subr.mxu0 0.0
      %2584 = vmatpush1.msra.mxu0 0.0
      %2585 = vmatprep.subr.mxu0 0.0
      %2586 = vmatpush1.msra.mxu0 0.0
      %2587 = vmatprep.subr.mxu0 0.0
      %2588 = vmatpush1.msra.mxu0 0.0
      %2589 = vmatprep.subr.mxu0 0.0
      %2590 = vmatpush1.msra.mxu0 0.0
      %2591 = vmatprep.subr.mxu0 0.0
      %2592 = vmatpush1.msra.mxu0 0.0
      %2593 = vmatprep.subr.mxu0 0.0
      %2594 = vmatpush1.msra.mxu0 0.0
      %2595 = vmatprep.subr.mxu0 0.0
      %2596 = vmatpush1.msra.mxu0 0.0
      %2597 = vmatprep.subr.mxu0 0.0
      %2598 = vmatpush1.msra.mxu0 0.0
      %2599 = vmatprep.subr.mxu0 0.0
      %2600 = vmatpush1.msra.mxu0 0.0
      %2601 = vmatprep.subr.mxu0 0.0
      %2602 = vmatpush1.msra.mxu0 0.0
      %2603 = vmatprep.subr.mxu0 0.0
      %2604 = vmatpush1.msra.mxu0 0.0
      %2605 = vmatprep.subr.mxu0 0.0
      %2606 = vmatpush1.msra.mxu0 0.0
      %2607 = vmatprep.subr.mxu0 0.0
      %2608 = vmatpush1.msra.mxu0 0.0
      %2609 = vmatprep.subr.mxu0 0.0
      %2610 = vmatpush1.msra.mxu0 0.0
      %2611 = vmatprep.subr.mxu0 0.0
      %2612 = vmatpush1.msra.mxu0 0.0
      %2613 = vmatprep.subr.mxu0 0.0
      %2614 = vmatpush1.msra.mxu0 0.0
      %2615 = vmatprep.subr.mxu0 0.0
      %2616 = vmatpush1.msra.mxu0 0.0
      %2617 = vmatprep.subr.mxu0 0.0
      %2618 = vmatpush1.msra.mxu0 0.0
      %2619 = vmatprep.subr.mxu0 0.0
      %2620 = vmatpush1.msra.mxu0 0.0
      %2621 = vmatprep.subr.mxu0 0.0
      %2622 = vmatpush1.msra.mxu0 0.0
      %2623 = vmatprep.subr.mxu0 0.0
      %2624 = vmatpush1.msra.mxu0 0.0
      %2625 = vmatprep.subr.mxu0 0.0
      %2626 = vmatpush1.msra.mxu0 0.0
      %2627 = vmatprep.subr.mxu0 0.0
      %2628 = vmatpush1.msra.mxu0 0.0
      %2629 = vmatprep.subr.mxu0 0.0
      %2630 = vmatpush1.msra.mxu0 0.0
      %2631 = vmatprep.subr.mxu0 0.0
      %2632 = vmatpush1.msra.mxu0 0.0
      %2633 = vmatprep.subr.mxu0 0.0
      %2634 = vmatpush1.msra.mxu0 0.0
      %2635 = vmatprep.subr.mxu0 0.0
      %2636 = vmatpush1.msra.mxu0 0.0
      %2637 = vmatprep.subr.mxu0 0.0
      %2638 = vmatpush1.msra.mxu0 0.0
      %2639 = vmatprep.subr.mxu0 0.0
      %2640 = vmatpush1.msra.mxu0 0.0
      %2641 = vmatprep.mubr.f32.mxu0 0.0
      %2642 = vmatmul.mubr.f32.gmra.mrb[0].mxu0 %v2566
      %v2643 = vpop.f32.mrb[0].mxu0
      %v2644 = vadd.f32 %v2548, %v2643
      %v2645 = vpop.f32.mrb[0].mxu0
      %2646 = vmatprep.mubr.f32.mxu0 0.0
      %2647 = vmatmul.mubr.f32.gmra.mrb[0].mxu0 %v2569
      %v2648 = vpop.f32.mrb[0].mxu0
      %v2649 = vadd.f32 %v2553, %v2648
      %v2650 = vpop.f32.mrb[0].mxu0
      %2651 = vmatprep.mubr.f32.mxu0 0.0
      %2652 = vmatmul.mubr.f32.gmra.mrb[0].mxu0 %v2572
      %v2653 = vpop.f32.mrb[0].mxu0
      %v2654 = vadd.f32 %v2558, %v2653
      %v2655 = vpop.f32.mrb[0].mxu0
      %2656 = vmatprep.mubr.f32.mxu0 0.0
      %2657 = vmatmul.mubr.f32.gmra.mrb[0].mxu0 %v2575
      %v2658 = vpop.f32.mrb[0].mxu0
      %v2659 = vadd.f32 %v2563, %v2658
      %v2660 = vpop.f32.mrb[0].mxu0
      %2661 = vdwg.mxu0
      %v2662 = vmul.f32 %v2644, 0.999995
      %v2663 = vmul.f32 %v2649, 0.999995
      %v2664 = vmul.f32 %v2654, 0.999995
      %v2665 = vmul.f32 %v2659, 0.999995
      %v2666 = vtanh.pop %v2662
      %v2667 = vtanh.pop %v2663
      %v2668 = vtanh.pop %v2664
      %v2669 = vtanh.pop %v2665
      %s2670 = scalar_lea.vmem %s20, 32
      %v2671 = vld [vmem:[%s2670] sm:$0xff]
      %v2672 = vld [vmem:[%s2670 + $0x8] sm:$0xff]
      %v2673 = vld [vmem:[%s2670 + $0x10] sm:$0xff]
      %v2674 = vld [vmem:[%s2670 + $0x18] sm:$0xff]
      %s2675 = scalar_lea.vmem %s21, 16
      %v2676 = vld [vmem:[%s2675] sm:$0xff]
      %v2677 = vld [vmem:[%s2675 + $0x8] sm:$0xff]
      %s2678 = scalar_lea.vmem %s22, 32
      %v2679 = vld [vmem:[%s2678] sm:$0xff]
      %v2680 = vld [vmem:[%s2678 + $0x8] sm:$0xff]
      %v2681 = vld [vmem:[%s2678 + $0x10] sm:$0xff]
      %v2682 = vld [vmem:[%s2678 + $0x18] sm:$0xff]
      %v2684 = vsel %vm1109, %v2671, 0
      %v2687 = vsel %vm1109, %v2672, 0
      %v2690 = vsel %vm1109, %v2673, 0
      %v2693 = vsel %vm1109, %v2674, 0
      %2695 = vmatprep.subr.mxu0 0.0
      %2696 = vmatpush1.msra.mxu0 %v2666
      %2697 = vmatprep.subr.mxu0 0.0
      %2698 = vmatpush1.msra.mxu0 %v2667
      %2699 = vmatprep.subr.mxu0 0.0
      %2700 = vmatpush1.msra.mxu0 %v2668
      %2701 = vmatprep.subr.mxu0 0.0
      %2702 = vmatpush1.msra.mxu0 %v2669
      %2703 = vmatprep.subr.mxu0 0.0
      %2704 = vmatpush1.msra.mxu0 0.0
      %2705 = vmatprep.subr.mxu0 0.0
      %2706 = vmatpush1.msra.mxu0 0.0
      %2707 = vmatprep.subr.mxu0 0.0
      %2708 = vmatpush1.msra.mxu0 0.0
      %2709 = vmatprep.subr.mxu0 0.0
      %2710 = vmatpush1.msra.mxu0 0.0
      %2711 = vmatprep.subr.mxu0 0.0
      %2712 = vmatpush1.msra.mxu0 0.0
      %2713 = vmatprep.subr.mxu0 0.0
      %2714 = vmatpush1.msra.mxu0 0.0
      %2715 = vmatprep.subr.mxu0 0.0
      %2716 = vmatpush1.msra.mxu0 0.0
      %2717 = vmatprep.subr.mxu0 0.0
      %2718 = vmatpush1.msra.mxu0 0.0
      %2719 = vmatprep.subr.mxu0 0.0
      %2720 = vmatpush1.msra.mxu0 0.0
      %2721 = vmatprep.subr.mxu0 0.0
      %2722 = vmatpush1.msra.mxu0 0.0
      %2723 = vmatprep.subr.mxu0 0.0
      %2724 = vmatpush1.msra.mxu0 0.0
      %2725 = vmatprep.subr.mxu0 0.0
      %2726 = vmatpush1.msra.mxu0 0.0
      %2727 = vmatprep.subr.mxu0 0.0
      %2728 = vmatpush1.msra.mxu0 0.0
      %2729 = vmatprep.subr.mxu0 0.0
      %2730 = vmatpush1.msra.mxu0 0.0
      %2731 = vmatprep.subr.mxu0 0.0
      %2732 = vmatpush1.msra.mxu0 0.0
      %2733 = vmatprep.subr.mxu0 0.0
      %2734 = vmatpush1.msra.mxu0 0.0
      %2735 = vmatprep.subr.mxu0 0.0
      %2736 = vmatpush1.msra.mxu0 0.0
      %2737 = vmatprep.subr.mxu0 0.0
      %2738 = vmatpush1.msra.mxu0 0.0
      %2739 = vmatprep.subr.mxu0 0.0
      %2740 = vmatpush1.msra.mxu0 0.0
      %2741 = vmatprep.subr.mxu0 0.0
      %2742 = vmatpush1.msra.mxu0 0.0
      %2743 = vmatprep.subr.mxu0 0.0
      %2744 = vmatpush1.msra.mxu0 0.0
      %2745 = vmatprep.subr.mxu0 0.0
      %2746 = vmatpush1.msra.mxu0 0.0
      %2747 = vmatprep.subr.mxu0 0.0
      %2748 = vmatpush1.msra.mxu0 0.0
      %2749 = vmatprep.subr.mxu0 0.0
      %2750 = vmatpush1.msra.mxu0 0.0
      %2751 = vmatprep.subr.mxu0 0.0
      %2752 = vmatpush1.msra.mxu0 0.0
      %2753 = vmatprep.subr.mxu0 0.0
      %2754 = vmatpush1.msra.mxu0 0.0
      %2755 = vmatprep.subr.mxu0 0.0
      %2756 = vmatpush1.msra.mxu0 0.0
      %2757 = vmatprep.subr.mxu0 0.0
      %2758 = vmatpush1.msra.mxu0 0.0
      %2759 = vmatprep.mubr.f32.mxu0 0.0
      %2760 = vmatmul.mubr.f32.gmra.mrb[0].mxu0 %v2684
      %v2761 = vpop.f32.mrb[0].mxu0
      %v2762 = vadd.f32 0.0, %v2761
      %v2763 = vpop.f32.mrb[0].mxu0
      %2764 = vmatprep.mubr.f32.mxu0 0.0
      %2765 = vmatmul.mubr.f32.gmra.mrb[0].mxu0 %v2687
      %v2766 = vpop.f32.mrb[0].mxu0
      %v2767 = vadd.f32 0.0, %v2766
      %v2768 = vpop.f32.mrb[0].mxu0
      %2769 = vmatprep.mubr.f32.mxu0 0.0
      %2770 = vmatmul.mubr.f32.gmra.mrb[0].mxu0 %v2690
      %v2771 = vpop.f32.mrb[0].mxu0
      %v2772 = vadd.f32 0.0, %v2771
      %v2773 = vpop.f32.mrb[0].mxu0
      %2774 = vmatprep.mubr.f32.mxu0 0.0
      %2775 = vmatmul.mubr.f32.gmra.mrb[0].mxu0 %v2693
      %v2776 = vpop.f32.mrb[0].mxu0
      %v2777 = vadd.f32 0.0, %v2776
      %v2778 = vpop.f32.mrb[0].mxu0
      %2779 = vdwg.mxu0
      %2781 = vset.pattern.permute.xlu0 0
      %2782 = vperm.xlu0 %2781, %v2679
      %v2783 = vpop.permute.xlu0 %2782
      %2786 = vset.pattern.permute.xlu0 0
      %2787 = vperm.xlu0 %2786, %v2680
      %v2788 = vpop.permute.xlu0 %2787
      %2791 = vset.pattern.permute.xlu0 0
      %2792 = vperm.xlu0 %2791, %v2681
      %v2793 = vpop.permute.xlu0 %2792
      %2796 = vset.pattern.permute.xlu0 0
      %2797 = vperm.xlu0 %2796, %v2682
      %v2798 = vpop.permute.xlu0 %2797
      %v2801 = vsel %vm1106, %v2762, 0
      %v2804 = vsel %vm1106, %v2767, 0
      %v2807 = vsel %vm1106, %v2772, 0
      %v2810 = vsel %vm1106, %v2777, 0
      %2812 = vmatprep.subr.mxu0 0.0
      %2813 = vmatpush1.msra.mxu0 %v2676
      %2814 = vmatprep.subr.mxu0 0.0
      %2815 = vmatpush1.msra.mxu0 %v2677
      %2816 = vmatprep.subr.mxu0 0.0
      %2817 = vmatpush1.msra.mxu0 0.0
      %2818 = vmatprep.subr.mxu0 0.0
      %2819 = vmatpush1.msra.mxu0 0.0
      %2820 = vmatprep.subr.mxu0 0.0
      %2821 = vmatpush1.msra.mxu0 0.0
      %2822 = vmatprep.subr.mxu0 0.0
      %2823 = vmatpush1.msra.mxu0 0.0
      %2824 = vmatprep.subr.mxu0 0.0
      %2825 = vmatpush1.msra.mxu0 0.0
      %2826 = vmatprep.subr.mxu0 0.0
      %2827 = vmatpush1.msra.mxu0 0.0
      %2828 = vmatprep.subr.mxu0 0.0
      %2829 = vmatpush1.msra.mxu0 0.0
      %2830 = vmatprep.subr.mxu0 0.0
      %2831 = vmatpush1.msra.mxu0 0.0
      %2832 = vmatprep.subr.mxu0 0.0
      %2833 = vmatpush1.msra.mxu0 0.0
      %2834 = vmatprep.subr.mxu0 0.0
      %2835 = vmatpush1.msra.mxu0 0.0
      %2836 = vmatprep.subr.mxu0 0.0
      %2837 = vmatpush1.msra.mxu0 0.0
      %2838 = vmatprep.subr.mxu0 0.0
      %2839 = vmatpush1.msra.mxu0 0.0
      %2840 = vmatprep.subr.mxu0 0.0
      %2841 = vmatpush1.msra.mxu0 0.0
      %2842 = vmatprep.subr.mxu0 0.0
      %2843 = vmatpush1.msra.mxu0 0.0
      %2844 = vmatprep.subr.mxu0 0.0
      %2845 = vmatpush1.msra.mxu0 0.0
      %2846 = vmatprep.subr.mxu0 0.0
      %2847 = vmatpush1.msra.mxu0 0.0
      %2848 = vmatprep.subr.mxu0 0.0
      %2849 = vmatpush1.msra.mxu0 0.0
      %2850 = vmatprep.subr.mxu0 0.0
      %2851 = vmatpush1.msra.mxu0 0.0
      %2852 = vmatprep.subr.mxu0 0.0
      %2853 = vmatpush1.msra.mxu0 0.0
      %2854 = vmatprep.subr.mxu0 0.0
      %2855 = vmatpush1.msra.mxu0 0.0
      %2856 = vmatprep.subr.mxu0 0.0
      %2857 = vmatpush1.msra.mxu0 0.0
      %2858 = vmatprep.subr.mxu0 0.0
      %2859 = vmatpush1.msra.mxu0 0.0
      %2860 = vmatprep.subr.mxu0 0.0
      %2861 = vmatpush1.msra.mxu0 0.0
      %2862 = vmatprep.subr.mxu0 0.0
      %2863 = vmatpush1.msra.mxu0 0.0
      %2864 = vmatprep.subr.mxu0 0.0
      %2865 = vmatpush1.msra.mxu0 0.0
      %2866 = vmatprep.subr.mxu0 0.0
      %2867 = vmatpush1.msra.mxu0 0.0
      %2868 = vmatprep.subr.mxu0 0.0
      %2869 = vmatpush1.msra.mxu0 0.0
      %2870 = vmatprep.subr.mxu0 0.0
      %2871 = vmatpush1.msra.mxu0 0.0
      %2872 = vmatprep.subr.mxu0 0.0
      %2873 = vmatpush1.msra.mxu0 0.0
      %2874 = vmatprep.subr.mxu0 0.0
      %2875 = vmatpush1.msra.mxu0 0.0
      %2876 = vmatprep.mubr.f32.mxu0 0.0
      %2877 = vmatmul.mubr.f32.gmra.mrb[0].mxu0 %v2801
      %v2878 = vpop.f32.mrb[0].mxu0
      %v2879 = vadd.f32 %v2783, %v2878
      %v2880 = vpop.f32.mrb[0].mxu0
      %2881 = vmatprep.mubr.f32.mxu0 0.0
      %2882 = vmatmul.mubr.f32.gmra.mrb[0].mxu0 %v2804
      %v2883 = vpop.f32.mrb[0].mxu0
      %v2884 = vadd.f32 %v2788, %v2883
      %v2885 = vpop.f32.mrb[0].mxu0
      %2886 = vmatprep.mubr.f32.mxu0 0.0
      %2887 = vmatmul.mubr.f32.gmra.mrb[0].mxu0 %v2807
      %v2888 = vpop.f32.mrb[0].mxu0
      %v2889 = vadd.f32 %v2793, %v2888
      %v2890 = vpop.f32.mrb[0].mxu0
      %2891 = vmatprep.mubr.f32.mxu0 0.0
      %2892 = vmatmul.mubr.f32.gmra.mrb[0].mxu0 %v2810
      %v2893 = vpop.f32.mrb[0].mxu0
      %v2894 = vadd.f32 %v2798, %v2893
      %v2895 = vpop.f32.mrb[0].mxu0
      %2896 = vdwg.mxu0
      %v2897 = vmul.f32 %v2879, 0.999995
      %v2898 = vmul.f32 %v2884, 0.999995
      %v2899 = vmul.f32 %v2889, 0.999995
      %v2900 = vmul.f32 %v2894, 0.999995
      %v2901 = vtanh.pop %v2897
      %v2902 = vtanh.pop %v2898
      %v2903 = vtanh.pop %v2899
      %v2904 = vtanh.pop %v2900
      %v2905 = vadd.f32 %v2901, %v2434
      %v2906 = vadd.f32 %v2902, %v2435
      %v2907 = vadd.f32 %v2903, %v2436
      %v2908 = vadd.f32 %v2904, %v2437
      %s2909 = scalar_lea.vmem %s20, 64
      %v2910 = vld [vmem:[%s2909] sm:$0xff]
      %v2911 = vld [vmem:[%s2909 + $0x8] sm:$0xff]
      %v2912 = vld [vmem:[%s2909 + $0x10] sm:$0xff]
      %v2913 = vld [vmem:[%s2909 + $0x18] sm:$0xff]
      %s2914 = scalar_lea.vmem %s21, 32
      %v2915 = vld [vmem:[%s2914] sm:$0xff]
      %v2916 = vld [vmem:[%s2914 + $0x8] sm:$0xff]
      %s2917 = scalar_lea.vmem %s22, 64
      %v2918 = vld [vmem:[%s2917] sm:$0xff]
      %v2919 = vld [vmem:[%s2917 + $0x8] sm:$0xff]
      %v2920 = vld [vmem:[%s2917 + $0x10] sm:$0xff]
      %v2921 = vld [vmem:[%s2917 + $0x18] sm:$0xff]
      %v2923 = vsel %vm1109, %v2910, 0
      %v2926 = vsel %vm1109, %v2911, 0
      %v2929 = vsel %vm1109, %v2912, 0
      %v2932 = vsel %vm1109, %v2913, 0
      %2934 = vmatprep.subr.mxu0 0.0
      %2935 = vmatpush1.msra.mxu0 %v2905
      %2936 = vmatprep.subr.mxu0 0.0
      %2937 = vmatpush1.msra.mxu0 %v2906
      %2938 = vmatprep.subr.mxu0 0.0
      %2939 = vmatpush1.msra.mxu0 %v2907
      %2940 = vmatprep.subr.mxu0 0.0
      %2941 = vmatpush1.msra.mxu0 %v2908
      %2942 = vmatprep.subr.mxu0 0.0
      %2943 = vmatpush1.msra.mxu0 0.0
      %2944 = vmatprep.subr.mxu0 0.0
      %2945 = vmatpush1.msra.mxu0 0.0
      %2946 = vmatprep.subr.mxu0 0.0
      %2947 = vmatpush1.msra.mxu0 0.0
      %2948 = vmatprep.subr.mxu0 0.0
      %2949 = vmatpush1.msra.mxu0 0.0
      %2950 = vmatprep.subr.mxu0 0.0
      %2951 = vmatpush1.msra.mxu0 0.0
      %2952 = vmatprep.subr.mxu0 0.0
      %2953 = vmatpush1.msra.mxu0 0.0
      %2954 = vmatprep.subr.mxu0 0.0
      %2955 = vmatpush1.msra.mxu0 0.0
      %2956 = vmatprep.subr.mxu0 0.0
      %2957 = vmatpush1.msra.mxu0 0.0
      %2958 = vmatprep.subr.mxu0 0.0
      %2959 = vmatpush1.msra.mxu0 0.0
      %2960 = vmatprep.subr.mxu0 0.0
      %2961 = vmatpush1.msra.mxu0 0.0
      %2962 = vmatprep.subr.mxu0 0.0
      %2963 = vmatpush1.msra.mxu0 0.0
      %2964 = vmatprep.subr.mxu0 0.0
      %2965 = vmatpush1.msra.mxu0 0.0
      %2966 = vmatprep.subr.mxu0 0.0
      %2967 = vmatpush1.msra.mxu0 0.0
      %2968 = vmatprep.subr.mxu0 0.0
      %2969 = vmatpush1.msra.mxu0 0.0
      %2970 = vmatprep.subr.mxu0 0.0
      %2971 = vmatpush1.msra.mxu0 0.0
      %2972 = vmatprep.subr.mxu0 0.0
      %2973 = vmatpush1.msra.mxu0 0.0
      %2974 = vmatprep.subr.mxu0 0.0
      %2975 = vmatpush1.msra.mxu0 0.0
      %2976 = vmatprep.subr.mxu0 0.0
      %2977 = vmatpush1.msra.mxu0 0.0
      %2978 = vmatprep.subr.mxu0 0.0
      %2979 = vmatpush1.msra.mxu0 0.0
      %2980 = vmatprep.subr.mxu0 0.0
      %2981 = vmatpush1.msra.mxu0 0.0
      %2982 = vmatprep.subr.mxu0 0.0
      %2983 = vmatpush1.msra.mxu0 0.0
      %2984 = vmatprep.subr.mxu0 0.0
      %2985 = vmatpush1.msra.mxu0 0.0
      %2986 = vmatprep.subr.mxu0 0.0
      %2987 = vmatpush1.msra.mxu0 0.0
      %2988 = vmatprep.subr.mxu0 0.0
      %2989 = vmatpush1.msra.mxu0 0.0
      %2990 = vmatprep.subr.mxu0 0.0
      %2991 = vmatpush1.msra.mxu0 0.0
      %2992 = vmatprep.subr.mxu0 0.0
      %2993 = vmatpush1.msra.mxu0 0.0
      %2994 = vmatprep.subr.mxu0 0.0
      %2995 = vmatpush1.msra.mxu0 0.0
      %2996 = vmatprep.subr.mxu0 0.0
      %2997 = vmatpush1.msra.mxu0 0.0
      %2998 = vmatprep.mubr.f32.mxu0 0.0
      %2999 = vmatmul.mubr.f32.gmra.mrb[0].mxu0 %v2923
      %v3000 = vpop.f32.mrb[0].mxu0
      %v3001 = vadd.f32 0.0, %v3000
      %v3002 = vpop.f32.mrb[0].mxu0
      %3003 = vmatprep.mubr.f32.mxu0 0.0
      %3004 = vmatmul.mubr.f32.gmra.mrb[0].mxu0 %v2926
      %v3005 = vpop.f32.mrb[0].mxu0
      %v3006 = vadd.f32 0.0, %v3005
      %v3007 = vpop.f32.mrb[0].mxu0
      %3008 = vmatprep.mubr.f32.mxu0 0.0
      %3009 = vmatmul.mubr.f32.gmra.mrb[0].mxu0 %v2929
      %v3010 = vpop.f32.mrb[0].mxu0
      %v3011 = vadd.f32 0.0, %v3010
      %v3012 = vpop.f32.mrb[0].mxu0
      %3013 = vmatprep.mubr.f32.mxu0 0.0
      %3014 = vmatmul.mubr.f32.gmra.mrb[0].mxu0 %v2932
      %v3015 = vpop.f32.mrb[0].mxu0
      %v3016 = vadd.f32 0.0, %v3015
      %v3017 = vpop.f32.mrb[0].mxu0
      %3018 = vdwg.mxu0
      %3020 = vset.pattern.permute.xlu0 0
      %3021 = vperm.xlu0 %3020, %v2918
      %v3022 = vpop.permute.xlu0 %3021
      %3025 = vset.pattern.permute.xlu0 0
      %3026 = vperm.xlu0 %3025, %v2919
      %v3027 = vpop.permute.xlu0 %3026
      %3030 = vset.pattern.permute.xlu0 0
      %3031 = vperm.xlu0 %3030, %v2920
      %v3032 = vpop.permute.xlu0 %3031
      %3035 = vset.pattern.permute.xlu0 0
      %3036 = vperm.xlu0 %3035, %v2921
      %v3037 = vpop.permute.xlu0 %3036
      %v3040 = vsel %vm1106, %v3001, 0
      %v3043 = vsel %vm1106, %v3006, 0
      %v3046 = vsel %vm1106, %v3011, 0
      %v3049 = vsel %vm1106, %v3016, 0
      %3051 = vmatprep.subr.mxu0 0.0
      %3052 = vmatpush1.msra.mxu0 %v2915
      %3053 = vmatprep.subr.mxu0 0.0
      %3054 = vmatpush1.msra.mxu0 %v2916
      %3055 = vmatprep.subr.mxu0 0.0
      %3056 = vmatpush1.msra.mxu0 0.0
      %3057 = vmatprep.subr.mxu0 0.0
      %3058 = vmatpush1.msra.mxu0 0.0
      %3059 = vmatprep.subr.mxu0 0.0
      %3060 = vmatpush1.msra.mxu0 0.0
      %3061 = vmatprep.subr.mxu0 0.0
      %3062 = vmatpush1.msra.mxu0 0.0
      %3063 = vmatprep.subr.mxu0 0.0
      %3064 = vmatpush1.msra.mxu0 0.0
      %3065 = vmatprep.subr.mxu0 0.0
      %3066 = vmatpush1.msra.mxu0 0.0
      %3067 = vmatprep.subr.mxu0 0.0
      %3068 = vmatpush1.msra.mxu0 0.0
      %3069 = vmatprep.subr.mxu0 0.0
      %3070 = vmatpush1.msra.mxu0 0.0
      %3071 = vmatprep.subr.mxu0 0.0
      %3072 = vmatpush1.msra.mxu0 0.0
      %3073 = vmatprep.subr.mxu0 0.0
      %3074 = vmatpush1.msra.mxu0 0.0
      %3075 = vmatprep.subr.mxu0 0.0
      %3076 = vmatpush1.msra.mxu0 0.0
      %3077 = vmatprep.subr.mxu0 0.0
      %3078 = vmatpush1.msra.mxu0 0.0
      %3079 = vmatprep.subr.mxu0 0.0
      %3080 = vmatpush1.msra.mxu0 0.0
      %3081 = vmatprep.subr.mxu0 0.0
      %3082 = vmatpush1.msra.mxu0 0.0
      %3083 = vmatprep.subr.mxu0 0.0
      %3084 = vmatpush1.msra.mxu0 0.0
      %3085 = vmatprep.subr.mxu0 0.0
      %3086 = vmatpush1.msra.mxu0 0.0
      %3087 = vmatprep.subr.mxu0 0.0
      %3088 = vmatpush1.msra.mxu0 0.0
      %3089 = vmatprep.subr.mxu0 0.0
      %3090 = vmatpush1.msra.mxu0 0.0
      %3091 = vmatprep.subr.mxu0 0.0
      %3092 = vmatpush1.msra.mxu0 0.0
      %3093 = vmatprep.subr.mxu0 0.0
      %3094 = vmatpush1.msra.mxu0 0.0
      %3095 = vmatprep.subr.mxu0 0.0
      %3096 = vmatpush1.msra.mxu0 0.0
      %3097 = vmatprep.subr.mxu0 0.0
      %3098 = vmatpush1.msra.mxu0 0.0
      %3099 = vmatprep.subr.mxu0 0.0
      %3100 = vmatpush1.msra.mxu0 0.0
      %3101 = vmatprep.subr.mxu0 0.0
      %3102 = vmatpush1.msra.mxu0 0.0
      %3103 = vmatprep.subr.mxu0 0.0
      %3104 = vmatpush1.msra.mxu0 0.0
      %3105 = vmatprep.subr.mxu0 0.0
      %3106 = vmatpush1.msra.mxu0 0.0
      %3107 = vmatprep.subr.mxu0 0.0
      %3108 = vmatpush1.msra.mxu0 0.0
      %3109 = vmatprep.subr.mxu0 0.0
      %3110 = vmatpush1.msra.mxu0 0.0
      %3111 = vmatprep.subr.mxu0 0.0
      %3112 = vmatpush1.msra.mxu0 0.0
      %3113 = vmatprep.subr.mxu0 0.0
      %3114 = vmatpush1.msra.mxu0 0.0
      %3115 = vmatprep.mubr.f32.mxu0 0.0
      %3116 = vmatmul.mubr.f32.gmra.mrb[0].mxu0 %v3040
      %v3117 = vpop.f32.mrb[0].mxu0
      %v3118 = vadd.f32 %v3022, %v3117
      %v3119 = vpop.f32.mrb[0].mxu0
      %3120 = vmatprep.mubr.f32.mxu0 0.0
      %3121 = vmatmul.mubr.f32.gmra.mrb[0].mxu0 %v3043
      %v3122 = vpop.f32.mrb[0].mxu0
      %v3123 = vadd.f32 %v3027, %v3122
      %v3124 = vpop.f32.mrb[0].mxu0
      %3125 = vmatprep.mubr.f32.mxu0 0.0
      %3126 = vmatmul.mubr.f32.gmra.mrb[0].mxu0 %v3046
      %v3127 = vpop.f32.mrb[0].mxu0
      %v3128 = vadd.f32 %v3032, %v3127
      %v3129 = vpop.f32.mrb[0].mxu0
      %3130 = vmatprep.mubr.f32.mxu0 0.0
      %3131 = vmatmul.mubr.f32.gmra.mrb[0].mxu0 %v3049
      %v3132 = vpop.f32.mrb[0].mxu0
      %v3133 = vadd.f32 %v3037, %v3132
      %v3134 = vpop.f32.mrb[0].mxu0
      %3135 = vdwg.mxu0
      %v3136 = vmul.f32 %v3118, 0.999995
      %v3137 = vmul.f32 %v3123, 0.999995
      %v3138 = vmul.f32 %v3128, 0.999995
      %v3139 = vmul.f32 %v3133, 0.999995
      %v3140 = vtanh.pop %v3136
      %v3141 = vtanh.pop %v3137
      %v3142 = vtanh.pop %v3138
      %v3143 = vtanh.pop %v3139
      %s3144 = scalar_lea.vmem %s20, 96
      %v3145 = vld [vmem:[%s3144] sm:$0xff]
      %v3146 = vld [vmem:[%s3144 + $0x8] sm:$0xff]
      %v3147 = vld [vmem:[%s3144 + $0x10] sm:$0xff]
      %v3148 = vld [vmem:[%s3144 + $0x18] sm:$0xff]
      %s3149 = scalar_lea.vmem %s21, 48
      %v3150 = vld [vmem:[%s3149] sm:$0xff]
      %v3151 = vld [vmem:[%s3149 + $0x8] sm:$0xff]
      %s3152 = scalar_lea.vmem %s22, 96
      %v3153 = vld [vmem:[%s3152] sm:$0xff]
      %v3154 = vld [vmem:[%s3152 + $0x8] sm:$0xff]
      %v3155 = vld [vmem:[%s3152 + $0x10] sm:$0xff]
      %v3156 = vld [vmem:[%s3152 + $0x18] sm:$0xff]
      %v3158 = vsel %vm1109, %v3145, 0
      %v3161 = vsel %vm1109, %v3146, 0
      %v3164 = vsel %vm1109, %v3147, 0
      %v3167 = vsel %vm1109, %v3148, 0
      %3169 = vmatprep.subr.mxu0 0.0
      %3170 = vmatpush1.msra.mxu0 %v3140
      %3171 = vmatprep.subr.mxu0 0.0
      %3172 = vmatpush1.msra.mxu0 %v3141
      %3173 = vmatprep.subr.mxu0 0.0
      %3174 = vmatpush1.msra.mxu0 %v3142
      %3175 = vmatprep.subr.mxu0 0.0
      %3176 = vmatpush1.msra.mxu0 %v3143
      %3177 = vmatprep.subr.mxu0 0.0
      %3178 = vmatpush1.msra.mxu0 0.0
      %3179 = vmatprep.subr.mxu0 0.0
      %3180 = vmatpush1.msra.mxu0 0.0
      %3181 = vmatprep.subr.mxu0 0.0
      %3182 = vmatpush1.msra.mxu0 0.0
      %3183 = vmatprep.subr.mxu0 0.0
      %3184 = vmatpush1.msra.mxu0 0.0
      %3185 = vmatprep.subr.mxu0 0.0
      %3186 = vmatpush1.msra.mxu0 0.0
      %3187 = vmatprep.subr.mxu0 0.0
      %3188 = vmatpush1.msra.mxu0 0.0
      %3189 = vmatprep.subr.mxu0 0.0
      %3190 = vmatpush1.msra.mxu0 0.0
      %3191 = vmatprep.subr.mxu0 0.0
      %3192 = vmatpush1.msra.mxu0 0.0
      %3193 = vmatprep.subr.mxu0 0.0
      %3194 = vmatpush1.msra.mxu0 0.0
      %3195 = vmatprep.subr.mxu0 0.0
      %3196 = vmatpush1.msra.mxu0 0.0
      %3197 = vmatprep.subr.mxu0 0.0
      %3198 = vmatpush1.msra.mxu0 0.0
      %3199 = vmatprep.subr.mxu0 0.0
      %3200 = vmatpush1.msra.mxu0 0.0
      %3201 = vmatprep.subr.mxu0 0.0
      %3202 = vmatpush1.msra.mxu0 0.0
      %3203 = vmatprep.subr.mxu0 0.0
      %3204 = vmatpush1.msra.mxu0 0.0
      %3205 = vmatprep.subr.mxu0 0.0
      %3206 = vmatpush1.msra.mxu0 0.0
      %3207 = vmatprep.subr.mxu0 0.0
      %3208 = vmatpush1.msra.mxu0 0.0
      %3209 = vmatprep.subr.mxu0 0.0
      %3210 = vmatpush1.msra.mxu0 0.0
      %3211 = vmatprep.subr.mxu0 0.0
      %3212 = vmatpush1.msra.mxu0 0.0
      %3213 = vmatprep.subr.mxu0 0.0
      %3214 = vmatpush1.msra.mxu0 0.0
      %3215 = vmatprep.subr.mxu0 0.0
      %3216 = vmatpush1.msra.mxu0 0.0
      %3217 = vmatprep.subr.mxu0 0.0
      %3218 = vmatpush1.msra.mxu0 0.0
      %3219 = vmatprep.subr.mxu0 0.0
      %3220 = vmatpush1.msra.mxu0 0.0
      %3221 = vmatprep.subr.mxu0 0.0
      %3222 = vmatpush1.msra.mxu0 0.0
      %3223 = vmatprep.subr.mxu0 0.0
      %3224 = vmatpush1.msra.mxu0 0.0
      %3225 = vmatprep.subr.mxu0 0.0
      %3226 = vmatpush1.msra.mxu0 0.0
      %3227 = vmatprep.subr.mxu0 0.0
      %3228 = vmatpush1.msra.mxu0 0.0
      %3229 = vmatprep.subr.mxu0 0.0
      %3230 = vmatpush1.msra.mxu0 0.0
      %3231 = vmatprep.subr.mxu0 0.0
      %3232 = vmatpush1.msra.mxu0 0.0
      %3233 = vmatprep.mubr.f32.mxu0 0.0
      %3234 = vmatmul.mubr.f32.gmra.mrb[0].mxu0 %v3158
      %v3235 = vpop.f32.mrb[0].mxu0
      %v3236 = vadd.f32 0.0, %v3235
      %v3237 = vpop.f32.mrb[0].mxu0
      %3238 = vmatprep.mubr.f32.mxu0 0.0
      %3239 = vmatmul.mubr.f32.gmra.mrb[0].mxu0 %v3161
      %v3240 = vpop.f32.mrb[0].mxu0
      %v3241 = vadd.f32 0.0, %v3240
      %v3242 = vpop.f32.mrb[0].mxu0
      %3243 = vmatprep.mubr.f32.mxu0 0.0
      %3244 = vmatmul.mubr.f32.gmra.mrb[0].mxu0 %v3164
      %v3245 = vpop.f32.mrb[0].mxu0
      %v3246 = vadd.f32 0.0, %v3245
      %v3247 = vpop.f32.mrb[0].mxu0
      %3248 = vmatprep.mubr.f32.mxu0 0.0
      %3249 = vmatmul.mubr.f32.gmra.mrb[0].mxu0 %v3167
      %v3250 = vpop.f32.mrb[0].mxu0
      %v3251 = vadd.f32 0.0, %v3250
      %v3252 = vpop.f32.mrb[0].mxu0
      %3253 = vdwg.mxu0
      %3255 = vset.pattern.permute.xlu0 0
      %3256 = vperm.xlu0 %3255, %v3153
      %v3257 = vpop.permute.xlu0 %3256
      %3260 = vset.pattern.permute.xlu0 0
      %3261 = vperm.xlu0 %3260, %v3154
      %v3262 = vpop.permute.xlu0 %3261
      %3265 = vset.pattern.permute.xlu0 0
      %3266 = vperm.xlu0 %3265, %v3155
      %v3267 = vpop.permute.xlu0 %3266
      %3270 = vset.pattern.permute.xlu0 0
      %3271 = vperm.xlu0 %3270, %v3156
      %v3272 = vpop.permute.xlu0 %3271
      %v3275 = vsel %vm1106, %v3236, 0
      %v3278 = vsel %vm1106, %v3241, 0
      %v3281 = vsel %vm1106, %v3246, 0
      %v3284 = vsel %vm1106, %v3251, 0
      %3286 = vmatprep.subr.mxu0 0.0
      %3287 = vmatpush1.msra.mxu0 %v3150
      %3288 = vmatprep.subr.mxu0 0.0
      %3289 = vmatpush1.msra.mxu0 %v3151
      %3290 = vmatprep.subr.mxu0 0.0
      %3291 = vmatpush1.msra.mxu0 0.0
      %3292 = vmatprep.subr.mxu0 0.0
      %3293 = vmatpush1.msra.mxu0 0.0
      %3294 = vmatprep.subr.mxu0 0.0
      %3295 = vmatpush1.msra.mxu0 0.0
      %3296 = vmatprep.subr.mxu0 0.0
      %3297 = vmatpush1.msra.mxu0 0.0
      %3298 = vmatprep.subr.mxu0 0.0
      %3299 = vmatpush1.msra.mxu0 0.0
      %3300 = vmatprep.subr.mxu0 0.0
      %3301 = vmatpush1.msra.mxu0 0.0
      %3302 = vmatprep.subr.mxu0 0.0
      %3303 = vmatpush1.msra.mxu0 0.0
      %3304 = vmatprep.subr.mxu0 0.0
      %3305 = vmatpush1.msra.mxu0 0.0
      %3306 = vmatprep.subr.mxu0 0.0
      %3307 = vmatpush1.msra.mxu0 0.0
      %3308 = vmatprep.subr.mxu0 0.0
      %3309 = vmatpush1.msra.mxu0 0.0
      %3310 = vmatprep.subr.mxu0 0.0
      %3311 = vmatpush1.msra.mxu0 0.0
      %3312 = vmatprep.subr.mxu0 0.0
      %3313 = vmatpush1.msra.mxu0 0.0
      %3314 = vmatprep.subr.mxu0 0.0
      %3315 = vmatpush1.msra.mxu0 0.0
      %3316 = vmatprep.subr.mxu0 0.0
      %3317 = vmatpush1.msra.mxu0 0.0
      %3318 = vmatprep.subr.mxu0 0.0
      %3319 = vmatpush1.msra.mxu0 0.0
      %3320 = vmatprep.subr.mxu0 0.0
      %3321 = vmatpush1.msra.mxu0 0.0
      %3322 = vmatprep.subr.mxu0 0.0
      %3323 = vmatpush1.msra.mxu0 0.0
      %3324 = vmatprep.subr.mxu0 0.0
      %3325 = vmatpush1.msra.mxu0 0.0
      %3326 = vmatprep.subr.mxu0 0.0
      %3327 = vmatpush1.msra.mxu0 0.0
      %3328 = vmatprep.subr.mxu0 0.0
      %3329 = vmatpush1.msra.mxu0 0.0
      %3330 = vmatprep.subr.mxu0 0.0
      %3331 = vmatpush1.msra.mxu0 0.0
      %3332 = vmatprep.subr.mxu0 0.0
      %3333 = vmatpush1.msra.mxu0 0.0
      %3334 = vmatprep.subr.mxu0 0.0
      %3335 = vmatpush1.msra.mxu0 0.0
      %3336 = vmatprep.subr.mxu0 0.0
      %3337 = vmatpush1.msra.mxu0 0.0
      %3338 = vmatprep.subr.mxu0 0.0
      %3339 = vmatpush1.msra.mxu0 0.0
      %3340 = vmatprep.subr.mxu0 0.0
      %3341 = vmatpush1.msra.mxu0 0.0
      %3342 = vmatprep.subr.mxu0 0.0
      %3343 = vmatpush1.msra.mxu0 0.0
      %3344 = vmatprep.subr.mxu0 0.0
      %3345 = vmatpush1.msra.mxu0 0.0
      %3346 = vmatprep.subr.mxu0 0.0
      %3347 = vmatpush1.msra.mxu0 0.0
      %3348 = vmatprep.subr.mxu0 0.0
      %3349 = vmatpush1.msra.mxu0 0.0
      %3350 = vmatprep.mubr.f32.mxu0 0.0
      %3351 = vmatmul.mubr.f32.gmra.mrb[0].mxu0 %v3275
      %v3352 = vpop.f32.mrb[0].mxu0
      %v3353 = vadd.f32 %v3257, %v3352
      %v3354 = vpop.f32.mrb[0].mxu0
      %3355 = vmatprep.mubr.f32.mxu0 0.0
      %3356 = vmatmul.mubr.f32.gmra.mrb[0].mxu0 %v3278
      %v3357 = vpop.f32.mrb[0].mxu0
      %v3358 = vadd.f32 %v3262, %v3357
      %v3359 = vpop.f32.mrb[0].mxu0
      %3360 = vmatprep.mubr.f32.mxu0 0.0
      %3361 = vmatmul.mubr.f32.gmra.mrb[0].mxu0 %v3281
      %v3362 = vpop.f32.mrb[0].mxu0
      %v3363 = vadd.f32 %v3267, %v3362
      %v3364 = vpop.f32.mrb[0].mxu0
      %3365 = vmatprep.mubr.f32.mxu0 0.0
      %3366 = vmatmul.mubr.f32.gmra.mrb[0].mxu0 %v3284
      %v3367 = vpop.f32.mrb[0].mxu0
      %v3368 = vadd.f32 %v3272, %v3367
      %v3369 = vpop.f32.mrb[0].mxu0
      %3370 = vdwg.mxu0
      %v3371 = vmul.f32 %v3353, 0.999995
      %v3372 = vmul.f32 %v3358, 0.999995
      %v3373 = vmul.f32 %v3363, 0.999995
      %v3374 = vmul.f32 %v3368, 0.999995
      %v3375 = vtanh.pop %v3371
      %v3376 = vtanh.pop %v3372
      %v3377 = vtanh.pop %v3373
      %v3378 = vtanh.pop %v3374
      %v3379 = vadd.f32 %v3375, %v2905
      %v3380 = vadd.f32 %v3376, %v2906
      %v3381 = vadd.f32 %v3377, %v2907
      %v3382 = vadd.f32 %v3378, %v2908
      %v3383 = vld [vmem:[%s23] sm:$0xff]
      %v3384 = vld [vmem:[%s24] sm:$0xff]
      %v3385 = vld [vmem:[%s24 + $0x8] sm:$0xff]
      %v3386 = vld [vmem:[%s25] sm:$0xff]
      %v3388 = vsel %vm1109, %v3383, 0
      %3390 = vmatprep.subr.mxu0 0.0
      %3391 = vmatpush1.msra.mxu0 %v3379
      %3392 = vmatprep.subr.mxu0 0.0
      %3393 = vmatpush1.msra.mxu0 %v3380
      %3394 = vmatprep.subr.mxu0 0.0
      %3395 = vmatpush1.msra.mxu0 %v3381
      %3396 = vmatprep.subr.mxu0 0.0
      %3397 = vmatpush1.msra.mxu0 %v3382
      %3398 = vmatprep.subr.mxu0 0.0
      %3399 = vmatpush1.msra.mxu0 0.0
      %3400 = vmatprep.subr.mxu0 0.0
      %3401 = vmatpush1.msra.mxu0 0.0
      %3402 = vmatprep.subr.mxu0 0.0
      %3403 = vmatpush1.msra.mxu0 0.0
      %3404 = vmatprep.subr.mxu0 0.0
      %3405 = vmatpush1.msra.mxu0 0.0
      %3406 = vmatprep.subr.mxu0 0.0
      %3407 = vmatpush1.msra.mxu0 0.0
      %3408 = vmatprep.subr.mxu0 0.0
      %3409 = vmatpush1.msra.mxu0 0.0
      %3410 = vmatprep.subr.mxu0 0.0
      %3411 = vmatpush1.msra.mxu0 0.0
      %3412 = vmatprep.subr.mxu0 0.0
      %3413 = vmatpush1.msra.mxu0 0.0
      %3414 = vmatprep.subr.mxu0 0.0
      %3415 = vmatpush1.msra.mxu0 0.0
      %3416 = vmatprep.subr.mxu0 0.0
      %3417 = vmatpush1.msra.mxu0 0.0
      %3418 = vmatprep.subr.mxu0 0.0
      %3419 = vmatpush1.msra.mxu0 0.0
      %3420 = vmatprep.subr.mxu0 0.0
      %3421 = vmatpush1.msra.mxu0 0.0
      %3422 = vmatprep.subr.mxu0 0.0
      %3423 = vmatpush1.msra.mxu0 0.0
      %3424 = vmatprep.subr.mxu0 0.0
      %3425 = vmatpush1.msra.mxu0 0.0
      %3426 = vmatprep.subr.mxu0 0.0
      %3427 = vmatpush1.msra.mxu0 0.0
      %3428 = vmatprep.subr.mxu0 0.0
      %3429 = vmatpush1.msra.mxu0 0.0
      %3430 = vmatprep.subr.mxu0 0.0
      %3431 = vmatpush1.msra.mxu0 0.0
      %3432 = vmatprep.subr.mxu0 0.0
      %3433 = vmatpush1.msra.mxu0 0.0
      %3434 = vmatprep.subr.mxu0 0.0
      %3435 = vmatpush1.msra.mxu0 0.0
      %3436 = vmatprep.subr.mxu0 0.0
      %3437 = vmatpush1.msra.mxu0 0.0
      %3438 = vmatprep.subr.mxu0 0.0
      %3439 = vmatpush1.msra.mxu0 0.0
      %3440 = vmatprep.subr.mxu0 0.0
      %3441 = vmatpush1.msra.mxu0 0.0
      %3442 = vmatprep.subr.mxu0 0.0
      %3443 = vmatpush1.msra.mxu0 0.0
      %3444 = vmatprep.subr.mxu0 0.0
      %3445 = vmatpush1.msra.mxu0 0.0
      %3446 = vmatprep.subr.mxu0 0.0
      %3447 = vmatpush1.msra.mxu0 0.0
      %3448 = vmatprep.subr.mxu0 0.0
      %3449 = vmatpush1.msra.mxu0 0.0
      %3450 = vmatprep.subr.mxu0 0.0
      %3451 = vmatpush1.msra.mxu0 0.0
      %3452 = vmatprep.subr.mxu0 0.0
      %3453 = vmatpush1.msra.mxu0 0.0
      %3454 = vmatprep.mubr.f32.mxu0 0.0
      %3455 = vmatmul.mubr.f32.gmra.mrb[0].mxu0 %v3388
      %v3456 = vpop.f32.mrb[0].mxu0
      %v3457 = vadd.f32 0.0, %v3456
      %v3458 = vpop.f32.mrb[0].mxu0
      %3459 = vdwg.mxu0
      %3461 = vset.pattern.permute.xlu0 0
      %3462 = vperm.xlu0 %3461, %v3386
      %v3463 = vpop.permute.xlu0 %3462
      %v3466 = vsel %vm1106, %v3457, 0
      %3468 = vmatprep.subr.mxu0 0.0
      %3469 = vmatpush1.msra.mxu0 %v3384
      %3470 = vmatprep.subr.mxu0 0.0
      %3471 = vmatpush1.msra.mxu0 %v3385
      %3472 = vmatprep.subr.mxu0 0.0
      %3473 = vmatpush1.msra.mxu0 0.0
      %3474 = vmatprep.subr.mxu0 0.0
      %3475 = vmatpush1.msra.mxu0 0.0
      %3476 = vmatprep.subr.mxu0 0.0
      %3477 = vmatpush1.msra.mxu0 0.0
      %3478 = vmatprep.subr.mxu0 0.0
      %3479 = vmatpush1.msra.mxu0 0.0
      %3480 = vmatprep.subr.mxu0 0.0
      %3481 = vmatpush1.msra.mxu0 0.0
      %3482 = vmatprep.subr.mxu0 0.0
      %3483 = vmatpush1.msra.mxu0 0.0
      %3484 = vmatprep.subr.mxu0 0.0
      %3485 = vmatpush1.msra.mxu0 0.0
      %3486 = vmatprep.subr.mxu0 0.0
      %3487 = vmatpush1.msra.mxu0 0.0
      %3488 = vmatprep.subr.mxu0 0.0
      %3489 = vmatpush1.msra.mxu0 0.0
      %3490 = vmatprep.subr.mxu0 0.0
      %3491 = vmatpush1.msra.mxu0 0.0
      %3492 = vmatprep.subr.mxu0 0.0
      %3493 = vmatpush1.msra.mxu0 0.0
      %3494 = vmatprep.subr.mxu0 0.0
      %3495 = vmatpush1.msra.mxu0 0.0
      %3496 = vmatprep.subr.mxu0 0.0
      %3497 = vmatpush1.msra.mxu0 0.0
      %3498 = vmatprep.subr.mxu0 0.0
      %3499 = vmatpush1.msra.mxu0 0.0
      %3500 = vmatprep.subr.mxu0 0.0
      %3501 = vmatpush1.msra.mxu0 0.0
      %3502 = vmatprep.subr.mxu0 0.0
      %3503 = vmatpush1.msra.mxu0 0.0
      %3504 = vmatprep.subr.mxu0 0.0
      %3505 = vmatpush1.msra.mxu0 0.0
      %3506 = vmatprep.subr.mxu0 0.0
      %3507 = vmatpush1.msra.mxu0 0.0
      %3508 = vmatprep.subr.mxu0 0.0
      %3509 = vmatpush1.msra.mxu0 0.0
      %3510 = vmatprep.subr.mxu0 0.0
      %3511 = vmatpush1.msra.mxu0 0.0
      %3512 = vmatprep.subr.mxu0 0.0
      %3513 = vmatpush1.msra.mxu0 0.0
      %3514 = vmatprep.subr.mxu0 0.0
      %3515 = vmatpush1.msra.mxu0 0.0
      %3516 = vmatprep.subr.mxu0 0.0
      %3517 = vmatpush1.msra.mxu0 0.0
      %3518 = vmatprep.subr.mxu0 0.0
      %3519 = vmatpush1.msra.mxu0 0.0
      %3520 = vmatprep.subr.mxu0 0.0
      %3521 = vmatpush1.msra.mxu0 0.0
      %3522 = vmatprep.subr.mxu0 0.0
      %3523 = vmatpush1.msra.mxu0 0.0
      %3524 = vmatprep.subr.mxu0 0.0
      %3525 = vmatpush1.msra.mxu0 0.0
      %3526 = vmatprep.subr.mxu0 0.0
      %3527 = vmatpush1.msra.mxu0 0.0
      %3528 = vmatprep.subr.mxu0 0.0
      %3529 = vmatpush1.msra.mxu0 0.0
      %3530 = vmatprep.subr.mxu0 0.0
      %3531 = vmatpush1.msra.mxu0 0.0
      %3532 = vmatprep.mubr.f32.mxu0 0.0
      %3533 = vmatmul.mubr.f32.gmra.mrb[0].mxu0 %v3466
      %v3534 = vpop.f32.mrb[0].mxu0
      %v3535 = vadd.f32 %v3463, %v3534
      %v3536 = vpop.f32.mrb[0].mxu0
      %3537 = vdwg.mxu0
      %v3538 = vadd.f32 %v3535, %v2205
      %v3539 = vld [vmem:[%s4] sm:$0xff]
      %v3540 = vld [vmem:[%s4 + $0x8] sm:$0xff]
      %v3541 = vld [vmem:[%s4 + $0x10] sm:$0x3]
      %v3543 = vsel %vm1247, %v3539, 0
      %v3546 = vsel %vm1247, %v3540, 0
      %v3549 = vsel %vm1247, %v3541, 0
      %v3552 = vsel %vm808, %v3538, 0
      %3554 = vmatprep.subr.mxu0 0.0
      %3555 = vmatpush1.msra.mxu0 %v3552
      %3556 = vmatprep.subr.mxu0 0.0
      %3557 = vmatpush1.msra.mxu0 0.0
      %3558 = vmatprep.subr.mxu0 0.0
      %3559 = vmatpush1.msra.mxu0 0.0
      %3560 = vmatprep.subr.mxu0 0.0
      %3561 = vmatpush1.msra.mxu0 0.0
      %3562 = vmatprep.subr.mxu0 0.0
      %3563 = vmatpush1.msra.mxu0 0.0
      %3564 = vmatprep.subr.mxu0 0.0
      %3565 = vmatpush1.msra.mxu0 0.0
      %3566 = vmatprep.subr.mxu0 0.0
      %3567 = vmatpush1.msra.mxu0 0.0
      %3568 = vmatprep.subr.mxu0 0.0
      %3569 = vmatpush1.msra.mxu0 0.0
      %3570 = vmatprep.subr.mxu0 0.0
      %3571 = vmatpush1.msra.mxu0 0.0
      %3572 = vmatprep.subr.mxu0 0.0
      %3573 = vmatpush1.msra.mxu0 0.0
      %3574 = vmatprep.subr.mxu0 0.0
      %3575 = vmatpush1.msra.mxu0 0.0
      %3576 = vmatprep.subr.mxu0 0.0
      %3577 = vmatpush1.msra.mxu0 0.0
      %3578 = vmatprep.subr.mxu0 0.0
      %3579 = vmatpush1.msra.mxu0 0.0
      %3580 = vmatprep.subr.mxu0 0.0
      %3581 = vmatpush1.msra.mxu0 0.0
      %3582 = vmatprep.subr.mxu0 0.0
      %3583 = vmatpush1.msra.mxu0 0.0
      %3584 = vmatprep.subr.mxu0 0.0
      %3585 = vmatpush1.msra.mxu0 0.0
      %3586 = vmatprep.subr.mxu0 0.0
      %3587 = vmatpush1.msra.mxu0 0.0
      %3588 = vmatprep.subr.mxu0 0.0
      %3589 = vmatpush1.msra.mxu0 0.0
      %3590 = vmatprep.subr.mxu0 0.0
      %3591 = vmatpush1.msra.mxu0 0.0
      %3592 = vmatprep.subr.mxu0 0.0
      %3593 = vmatpush1.msra.mxu0 0.0
      %3594 = vmatprep.subr.mxu0 0.0
      %3595 = vmatpush1.msra.mxu0 0.0
      %3596 = vmatprep.subr.mxu0 0.0
      %3597 = vmatpush1.msra.mxu0 0.0
      %3598 = vmatprep.subr.mxu0 0.0
      %3599 = vmatpush1.msra.mxu0 0.0
      %3600 = vmatprep.subr.mxu0 0.0
      %3601 = vmatpush1.msra.mxu0 0.0
      %3602 = vmatprep.subr.mxu0 0.0
      %3603 = vmatpush1.msra.mxu0 0.0
      %3604 = vmatprep.subr.mxu0 0.0
      %3605 = vmatpush1.msra.mxu0 0.0
      %3606 = vmatprep.subr.mxu0 0.0
      %3607 = vmatpush1.msra.mxu0 0.0
      %3608 = vmatprep.subr.mxu0 0.0
      %3609 = vmatpush1.msra.mxu0 0.0
      %3610 = vmatprep.subr.mxu0 0.0
      %3611 = vmatpush1.msra.mxu0 0.0
      %3612 = vmatprep.subr.mxu0 0.0
      %3613 = vmatpush1.msra.mxu0 0.0
      %3614 = vmatprep.subr.mxu0 0.0
      %3615 = vmatpush1.msra.mxu0 0.0
      %3616 = vmatprep.subr.mxu0 0.0
      %3617 = vmatpush1.msra.mxu0 0.0
      %3618 = vmatprep.mubr.f32.mxu0 0.0
      %3619 = vmatmul.mubr.f32.gmra.mrb[0].mxu0 %v3543
      %v3620 = vpop.f32.mrb[0].mxu0
      %v3621 = vadd.f32 0.0, %v3620
      %v3622 = vpop.f32.mrb[0].mxu0
      %3623 = vmatprep.mubr.f32.mxu0 0.0
      %3624 = vmatmul.mubr.f32.gmra.mrb[0].mxu0 %v3546
      %v3625 = vpop.f32.mrb[0].mxu0
      %v3626 = vadd.f32 0.0, %v3625
      %v3627 = vpop.f32.mrb[0].mxu0
      %3628 = vmatprep.mubr.f32.mxu0 0.0
      %3629 = vmatmul.mubr.f32.gmra.mrb[0].mxu0 %v3549
      %v3630 = vpop.f32.mrb[0].mxu0
      %v3631 = vadd.f32 0.0, %v3630
      %v3632 = vpop.f32.mrb[0].mxu0
      %3633 = vdwg.mxu0
      %3634 = vst.msk [vmem:[%s791] sm:$0xff] %vm1106, %v3621
      %3635 = vst.msk [vmem:[%s791 + $0x8] sm:$0xff] %vm1106, %v3626
      %vm3636 = vcmask 123904
      %3637 = vst.msk [vmem:[%s791 + $0x10] sm:$0x3] %vm3636, %v3631
      %p3638 = scmp.lt.s32.totalorder %s37, 1
      %s3639 = scalar_select %p3638, %s37, 1
      %s3640 = smul.addr %s3639, 3
      %s3641 = smul.addr %s3640, 8
      %s3642 = scalar_lea.vmem %s26, %s3641
      // Predicated region
      $region125: #{tpu_custom_call.1} parent=123 // pred_check
        %p3643 = pneg %p606
      $region126: #{tpu_custom_call.1} parent=123 // pred_check_branch
        %3645 = sbr.rel (%p3643) target = $region128
      $region127: #{tpu_custom_call.1} parent=123 // pred_region
        _
      $region128: #{tpu_custom_call.1} parent=123 // pred_fallthru
        _
    $region124: #{tpu_custom_call.1} parent=5 // pred_fallthru
      _
    %p3646 = scmp.le.s32.totalorder 2, %s32
    // Predicated region
    $region129: #{tpu_custom_call.1} parent=5 // pred_check
      %p3647 = pneg %p3646
    $region130: #{tpu_custom_call.1} parent=5 // pred_check_branch
      %3649 = sbr.rel (%p3647) target = $region132
    $region131: #{tpu_custom_call.1} parent=5 // pred_region
      %s3650 = ssub.s32 %s32, 2
      // Predicated region
      $region133: #{tpu_custom_call.1} parent=131 // pred_check
        %p3651 = pneg %p612
      $region134: #{tpu_custom_call.1} parent=131 // pred_check_branch
        %3653 = sbr.rel (%p3651) target = $region136
      $region135: #{tpu_custom_call.1} parent=131 // pred_region
        %p3654 = scmp.lt.s32.totalorder %s38, 1
        %s3655 = scalar_select %p3654, %s38, 1
        %s3656 = smul.addr %s3655, 3
        %s3657 = smul.addr %s3656, 8
        %s3658 = scalar_lea.vmem %s26, %s3657
      $region136: #{tpu_custom_call.1} parent=131 // pred_fallthru
        _
    $region132: #{tpu_custom_call.1} parent=5 // pred_fallthru
      _
  $region6: #{tpu_custom_call.1} parent=0 // loop_footer
    %s36 = sadd.s32 1, %s32
  $region7: #{tpu_custom_call.1} parent=0 // loop_footer_branch
    %31 = sbr.rel target = $region3
  $region8: #{tpu_custom_call.1} parent=0 // loop_exit
    _

</llo_original>
